<compile_context>
chip_gen: v7x
topology: tpu7x:2x2x1
jax: 0.10.0
libtpu: 0.0.40
codegen_flags: <defaults>
</compile_context>

<pallas_src>
import jax
import jax.numpy as jnp
from jax.experimental import pallas as pl
from jax.experimental.pallas import tpu as pltpu

INPUT_SIZE = 1024
HIDDEN = 128
NUM_LAYERS = 2
NHEAD = 8
LN_EPS = 1e-5


def _round_up(n, m):
    return ((n + m - 1) // m) * m


def _layernorm(h, gamma, beta):
    # PyTorch nn.LayerNorm: biased variance over last dim, eps=1e-5.  Kept in f32.
    mean = jnp.mean(h, axis=-1, keepdims=True)
    var = jnp.mean((h - mean) ** 2, axis=-1, keepdims=True)
    return (h - mean) * jax.lax.rsqrt(var + LN_EPS) * gamma + beta


def apollo_kernel(x_ref,
                  enc_w1, enc_b1, enc_w2, enc_b2,
                  attn_w, attn_b,
                  ln1_w, ln1_b, ln2_w, ln2_b,
                  ff_w1, ff_b1, ff_w2, ff_b2,
                  dec_w1, dec_b1, dec_w2, dec_b2, dec_w3, dec_b3,
                  out_ref):
    bf16 = jnp.bfloat16

    def mm(a, w):
        # bf16 operands, f32 accumulation on the MXU (no-op cast if a is already bf16).
        return jnp.dot(a.astype(bf16), w, preferred_element_type=jnp.float32)

    x = x_ref[...]                                            # (TB, input_size) bf16

    # ---------------- encoder (Linear+ReLU) x2, dropout = identity -----------
    h = jnp.maximum(mm(x, enc_w1[...]) + enc_b1[...], 0.0)
    h = jnp.maximum(mm(h, enc_w2[...]) + enc_b2[...], 0.0)

    # ------------- transformer encoder, post-norm, seq_len == 1 --------------
    for l in range(NUM_LAYERS):
        # attention folded host-side into a single d x d matmul (softmax over a
        # length-1 key axis is identically 1, so attention == V projection).
        attn = mm(h, attn_w[l]) + attn_b[l]
        h = _layernorm(h + attn, ln1_w[l], ln1_b[l])

        # feed-forward: linear(4d) -> ReLU -> linear(d), dropouts = identity.
        # The (TB, 4d) intermediate is held in bf16 (half the live bytes; the second
        # dot would have truncated it to bf16 anyway).
        ff = jnp.maximum(mm(h, ff_w1[l]) + ff_b1[l], 0.0).astype(bf16)
        ff = mm(ff, ff_w2[l]) + ff_b2[l]
        h = _layernorm(h + ff, ln2_w[l], ln2_b[l])

    # -------- decoder: d -> d/2 -> d/4 -> input_size, Tanh (lanes padded to d) ----
    g = jnp.maximum(mm(h, dec_w1[...]) + dec_b1[...], 0.0)
    g = jnp.maximum(mm(g, dec_w2[...]) + dec_b2[...], 0.0)
    out_ref[...] = jnp.tanh(mm(g, dec_w3[...]) + dec_b3[...])


def apollo_forward(x, prep, *, tb=256):
    """x: (B, INPUT_SIZE) f32 (cast to bf16 internally); prep: prepared params."""
    B = x.shape[0]
    # Default tile is 256 rows (fills the MXU M dimension and amortizes per-step
    # overhead).  For a tiny test batch we clamp the tile to the 16-aligned batch
    # (bf16 sublane packing) so we don't compute hundreds of dead padded rows —
    # the kernel and codegen path are identical either way.
    tb = max(16, min(tb, _round_up(B, 16)))
    n_blocks = pl.cdiv(B, tb)
    Bp = n_blocks * tb

    x = x.astype(jnp.bfloat16)                 # bf16 streaming input (same numerics:
    if Bp != B:                                # the first dot truncated x anyway)
        x = jnp.pad(x, ((0, Bp - B), (0, 0)))

    def act_spec(width):
        return pl.BlockSpec((tb, width), lambda i: (i, 0))

    def resident_spec(shape):
        nd = len(shape)
        return pl.BlockSpec(shape, lambda i, _nd=nd: (0,) * _nd)

    in_specs = [act_spec(INPUT_SIZE)] + [resident_spec(p.shape) for p in prep]

    # Rough cost model: one pass of all the (padded) matmuls per row + tanh epilogue.
    macs_per_row = (INPUT_SIZE * HIDDEN + HIDDEN * HIDDEN
                    + NUM_LAYERS * (HIDDEN * HIDDEN + 2 * HIDDEN * 4 * HIDDEN)
                    + HIDDEN * HIDDEN + HIDDEN * HIDDEN + HIDDEN * INPUT_SIZE)
    weight_bytes = sum(int(p.size) * p.dtype.itemsize for p in prep)
    bytes_accessed = (Bp * INPUT_SIZE * 2        # bf16 input
                      + Bp * INPUT_SIZE * 4      # f32 output
                      + weight_bytes)
    cost = pl.CostEstimate(flops=2 * macs_per_row * Bp,
                           transcendentals=Bp * INPUT_SIZE,
                           bytes_accessed=bytes_accessed)

    # VMEM budget derived from actual footprint (+50% headroom), capped below v7x's
    # 64 MiB physical VMEM so the same code right-sizes on v5e/v6e/v7x.
    tile_io_bytes = 2 * (tb * INPUT_SIZE * 2 + tb * INPUT_SIZE * 4)   # double-buffered x + out
    interm_bytes = (tb * 4 * HIDDEN * 2          # bf16 FFN intermediate
                    + 6 * tb * HIDDEN * 4        # h / residual / LN temporaries (f32)
                    + tb * INPUT_SIZE * 4)       # pre-tanh decoder output (f32)
    vmem_need = weight_bytes + tile_io_bytes + interm_bytes
    vmem_limit = int(min(max(vmem_need * 3 // 2, 32 * 1024 * 1024), 60 * 1024 * 1024))

    out = pl.pallas_call(
        apollo_kernel,
        grid=(n_blocks,),
        in_specs=in_specs,
        out_specs=act_spec(INPUT_SIZE),
        out_shape=jax.ShapeDtypeStruct((Bp, INPUT_SIZE), jnp.float32),
        compiler_params=pltpu.CompilerParams(
            dimension_semantics=("parallel",),
            vmem_limit_bytes=vmem_limit),
        cost_estimate=cost,
    )(x, *prep)
    return out[:B]


# ------------------------- deterministic parameter init ----------------------
def init_params(key):
    keys = iter(jax.random.split(key, 32))
    d = HIDDEN

    def lin(fan_in, shape):
        bound = 1.0 / float(fan_in) ** 0.5
        return jax.random.uniform(next(keys), shape, jnp.float32, -bound, bound)

    params = (
        # encoder: Linear(in, d), Linear(d, d)   (weights stored as W^T, biases (1, n))
        lin(INPUT_SIZE, (INPUT_SIZE, d)), lin(INPUT_SIZE, (1, d)),
        lin(d, (d, d)), lin(d, (1, d)),
        # transformer layers, stacked along a leading layer axis
        lin(d, (NUM_LAYERS, d, 3 * d)), lin(d, (NUM_LAYERS, 1, 3 * d)),      # in_proj
        lin(d, (NUM_LAYERS, d, d)), lin(d, (NUM_LAYERS, 1, d)),              # out_proj
        jnp.ones((NUM_LAYERS, 1, d), jnp.float32),                           # ln1 gamma
        jnp.zeros((NUM_LAYERS, 1, d), jnp.float32),                          # ln1 beta
        jnp.ones((NUM_LAYERS, 1, d), jnp.float32),                           # ln2 gamma
        jnp.zeros((NUM_LAYERS, 1, d), jnp.float32),                          # ln2 beta
        lin(d, (NUM_LAYERS, d, 4 * d)), lin(d, (NUM_LAYERS, 1, 4 * d)),      # ffn linear1
        lin(4 * d, (NUM_LAYERS, 4 * d, d)), lin(4 * d, (NUM_LAYERS, 1, d)),  # ffn linear2
        # decoder: d -> d/2 -> d/4 -> input_size
        lin(d, (d, d // 2)), lin(d, (1, d // 2)),
        lin(d // 2, (d // 2, d // 4)), lin(d // 2, (1, d // 4)),
        lin(d // 4, (d // 4, INPUT_SIZE)), lin(d // 4, (1, INPUT_SIZE)),
    )
    return params


# -------------------- host-side prep: fold / pad / cast ----------------------
def prepare_params(params):
    (enc_w1, enc_b1, enc_w2, enc_b2,
     attn_in_w, attn_in_b, attn_out_w, attn_out_b,
     ln1_w, ln1_b, ln2_w, ln2_b,
     ff_w1, ff_b1, ff_w2, ff_b2,
     dec_w1, dec_b1, dec_w2, dec_b2, dec_w3, dec_b3) = params
    d = HIDDEN

    # Fold attention: seq_len==1 => attn(h) = (h @ V_w + v_b) @ out_w + out_b
    v_w = attn_in_w[:, :, 2 * d:3 * d]                       # (L, d, d)
    v_b = attn_in_b[:, :, 2 * d:3 * d]                       # (L, 1, d)
    attn_w = jnp.einsum("lij,ljk->lik", v_w, attn_out_w)     # (L, d, d)
    attn_b = jnp.einsum("lij,ljk->lik", v_b, attn_out_w) + attn_out_b

    # Pad decoder intermediate widths (64, 32) up to 128 lanes with zeros.
    d2, d4 = d // 2, d // 4
    dec_w1_p = jnp.pad(dec_w1, ((0, 0), (0, d - d2)))        # (d, d)
    dec_b1_p = jnp.pad(dec_b1, ((0, 0), (0, d - d2)))        # (1, d)
    dec_w2_p = jnp.pad(dec_w2, ((0, d - d2), (0, d - d4)))   # (d, d)
    dec_b2_p = jnp.pad(dec_b2, ((0, 0), (0, d - d4)))        # (1, d)
    dec_w3_p = jnp.pad(dec_w3, ((0, d - d4), (0, 0)))        # (d, input_size)

    bf = lambda w: w.astype(jnp.bfloat16)
    return (bf(enc_w1), enc_b1, bf(enc_w2), enc_b2,
            bf(attn_w), attn_b,
            ln1_w, ln1_b, ln2_w, ln2_b,
            bf(ff_w1), ff_b1, bf(ff_w2), ff_b2,
            bf(dec_w1_p), dec_b1_p, bf(dec_w2_p), dec_b2_p, bf(dec_w3_p), dec_b3)


# --------------------------- pure-JAX f32 reference ---------------------------
def apollo_ref(x, params):
    (enc_w1, enc_b1, enc_w2, enc_b2,
     attn_in_w, attn_in_b, attn_out_w, attn_out_b,
     ln1_w, ln1_b, ln2_w, ln2_b,
     ff_w1, ff_b1, ff_w2, ff_b2,
     dec_w1, dec_b1, dec_w2, dec_b2, dec_w3, dec_b3) = params
    d = HIDDEN
    B = x.shape[0]
    hd = d // NHEAD

    h = jnp.maximum(x @ enc_w1 + enc_b1, 0.0)
    h = jnp.maximum(h @ enc_w2 + enc_b2, 0.0)
    for l in range(NUM_LAYERS):
        qkv = h @ attn_in_w[l] + attn_in_b[l]
        q, k, v = qkv[:, :d], qkv[:, d:2 * d], qkv[:, 2 * d:]
        qh = q.reshape(B, NHEAD, 1, hd)
        kh = k.reshape(B, NHEAD, 1, hd)
        vh = v.reshape(B, NHEAD, 1, hd)
        scores = jnp.einsum("bhqd,bhkd->bhqk", qh, kh) / jnp.sqrt(float(hd))
        w = jax.nn.softmax(scores, axis=-1)          # length-1 key axis -> all 1
        attn = jnp.einsum("bhqk,bhkd->bhqd", w, vh).reshape(B, d)
        attn = attn @ attn_out_w[l] + attn_out_b[l]
        h = _layernorm(h + attn, ln1_w[l], ln1_b[l])
        ff = jnp.maximum(h @ ff_w1[l] + ff_b1[l], 0.0) @ ff_w2[l] + ff_b2[l]
        h = _layernorm(h + ff, ln2_w[l], ln2_b[l])
    g = jnp.maximum(h @ dec_w1 + dec_b1, 0.0)
    g = jnp.maximum(g @ dec_w2 + dec_b2, 0.0)
    return jnp.tanh(g @ dec_w3 + dec_b3)


if __name__ == "__main__":
    B = 2
    kx, _ = jax.random.split(jax.random.PRNGKey(0))
    x = jax.random.normal(kx, (B, INPUT_SIZE), jnp.float32)
    params = init_params(jax.random.PRNGKey(42))
    prep = prepare_params(params)

    out = apollo_forward(x, prep)        # tb defaults to 256 (clamped for tiny batch)
    jax.block_until_ready(out)

    ref = apollo_ref(x, params)
    assert out.shape == (B, INPUT_SIZE), out.shape
    # Tolerance accounts for bf16 input / weights / FFN intermediate (f32 accumulation).
    err = float(jnp.max(jnp.abs(out - ref)))
    assert err < 5e-2, f"mismatch vs reference: max abs err {err}"
    print("KERNEL_OK")
</pallas_src>

<mosaic_0001>
module attributes {stable_mosaic.version = 11 : i64} {
  func.func @apollo_kernel(%arg0: i32, %arg1: memref<16x1024xbf16, #tpu.memory_space<vmem>>, %arg2: memref<1024x128xbf16, #tpu.memory_space<vmem>>, %arg3: memref<1x128xf32, #tpu.memory_space<vmem>>, %arg4: memref<128x128xbf16, #tpu.memory_space<vmem>>, %arg5: memref<1x128xf32, #tpu.memory_space<vmem>>, %arg6: memref<2x128x128xbf16, #tpu.memory_space<vmem>>, %arg7: memref<2x1x128xf32, #tpu.memory_space<vmem>>, %arg8: memref<2x1x128xf32, #tpu.memory_space<vmem>>, %arg9: memref<2x1x128xf32, #tpu.memory_space<vmem>>, %arg10: memref<2x1x128xf32, #tpu.memory_space<vmem>>, %arg11: memref<2x1x128xf32, #tpu.memory_space<vmem>>, %arg12: memref<2x128x512xbf16, #tpu.memory_space<vmem>>, %arg13: memref<2x1x512xf32, #tpu.memory_space<vmem>>, %arg14: memref<2x512x128xbf16, #tpu.memory_space<vmem>>, %arg15: memref<2x1x128xf32, #tpu.memory_space<vmem>>, %arg16: memref<128x128xbf16, #tpu.memory_space<vmem>>, %arg17: memref<1x128xf32, #tpu.memory_space<vmem>>, %arg18: memref<128x128xbf16, #tpu.memory_space<vmem>>, %arg19: memref<1x128xf32, #tpu.memory_space<vmem>>, %arg20: memref<128x1024xbf16, #tpu.memory_space<vmem>>, %arg21: memref<1x1024xf32, #tpu.memory_space<vmem>>, %arg22: memref<16x1024xf32, #tpu.memory_space<vmem>>) attributes {dimension_semantics = [#tpu.dimension_semantics<parallel>], iteration_bounds = array<i64: 1>, scalar_prefetch = 0 : i64, scratch_operands = 0 : i64, tpu.core_type = #tpu.core_type<tc>, window_params = [{transform_indices = @transform_0, window_bounds = array<i64: 16, 1024>}, {pipeline_mode = #tpu.pipeline_mode<synchronous>, transform_indices = @transform_1, window_bounds = array<i64: 1024, 128>}, {pipeline_mode = #tpu.pipeline_mode<synchronous>, transform_indices = @transform_2, window_bounds = array<i64: 1, 128>}, {pipeline_mode = #tpu.pipeline_mode<synchronous>, transform_indices = @transform_3, window_bounds = array<i64: 128, 128>}, {pipeline_mode = #tpu.pipeline_mode<synchronous>, transform_indices = @transform_4, window_bounds = array<i64: 1, 128>}, {pipeline_mode = #tpu.pipeline_mode<synchronous>, transform_indices = @transform_5, window_bounds = array<i64: 2, 128, 128>}, {pipeline_mode = #tpu.pipeline_mode<synchronous>, transform_indices = @transform_6, window_bounds = array<i64: 2, 1, 128>}, {pipeline_mode = #tpu.pipeline_mode<synchronous>, transform_indices = @transform_7, window_bounds = array<i64: 2, 1, 128>}, {pipeline_mode = #tpu.pipeline_mode<synchronous>, transform_indices = @transform_8, window_bounds = array<i64: 2, 1, 128>}, {pipeline_mode = #tpu.pipeline_mode<synchronous>, transform_indices = @transform_9, window_bounds = array<i64: 2, 1, 128>}, {pipeline_mode = #tpu.pipeline_mode<synchronous>, transform_indices = @transform_10, window_bounds = array<i64: 2, 1, 128>}, {pipeline_mode = #tpu.pipeline_mode<synchronous>, transform_indices = @transform_11, window_bounds = array<i64: 2, 128, 512>}, {pipeline_mode = #tpu.pipeline_mode<synchronous>, transform_indices = @transform_12, window_bounds = array<i64: 2, 1, 512>}, {pipeline_mode = #tpu.pipeline_mode<synchronous>, transform_indices = @transform_13, window_bounds = array<i64: 2, 512, 128>}, {pipeline_mode = #tpu.pipeline_mode<synchronous>, transform_indices = @transform_14, window_bounds = array<i64: 2, 1, 128>}, {pipeline_mode = #tpu.pipeline_mode<synchronous>, transform_indices = @transform_15, window_bounds = array<i64: 128, 128>}, {pipeline_mode = #tpu.pipeline_mode<synchronous>, transform_indices = @transform_16, window_bounds = array<i64: 1, 128>}, {pipeline_mode = #tpu.pipeline_mode<synchronous>, transform_indices = @transform_17, window_bounds = array<i64: 128, 128>}, {pipeline_mode = #tpu.pipeline_mode<synchronous>, transform_indices = @transform_18, window_bounds = array<i64: 1, 128>}, {pipeline_mode = #tpu.pipeline_mode<synchronous>, transform_indices = @transform_19, window_bounds = array<i64: 128, 1024>}, {pipeline_mode = #tpu.pipeline_mode<synchronous>, transform_indices = @transform_20, window_bounds = array<i64: 1, 1024>}, {transform_indices = @transform_21, window_bounds = array<i64: 16, 1024>}]} {
    %c0 = arith.constant 0 : index
    %c0_0 = arith.constant 0 : index
    %0 = vector.load %arg1[%c0, %c0_0] : memref<16x1024xbf16, #tpu.memory_space<vmem>>, vector<16x1024xbf16>
    %c0_1 = arith.constant 0 : index
    %c0_2 = arith.constant 0 : index
    %1 = vector.load %arg2[%c0_1, %c0_2] : memref<1024x128xbf16, #tpu.memory_space<vmem>>, vector<1024x128xbf16>
    %cst = arith.constant dense<0.000000e+00> : vector<16x128xf32>
    %2 = tpu.matmul %0, %1, %cst {dimension_numbers = #tpu.dot_dimension_numbers<[1], [0], [0], [1], [0, 0, 1, 1], [], []>} : vector<16x1024xbf16>, vector<1024x128xbf16>, vector<16x128xf32> -> vector<16x128xf32>
    %c0_3 = arith.constant 0 : index
    %c0_4 = arith.constant 0 : index
    %3 = vector.load %arg3[%c0_3, %c0_4] : memref<1x128xf32, #tpu.memory_space<vmem>>, vector<1x128xf32>
    %4 = vector.broadcast %3 : vector<1x128xf32> to vector<16x128xf32>
    %5 = arith.addf %2, %4 : vector<16x128xf32>
    %cst_5 = arith.constant 0.000000e+00 : f32
    %6 = vector.broadcast %cst_5 : f32 to vector<16x128xf32>
    %7 = arith.maximumf %5, %6 : vector<16x128xf32>
    %c0_6 = arith.constant 0 : index
    %c0_7 = arith.constant 0 : index
    %8 = vector.load %arg4[%c0_6, %c0_7] : memref<128x128xbf16, #tpu.memory_space<vmem>>, vector<128x128xbf16>
    %9 = arith.truncf %7 : vector<16x128xf32> to vector<16x128xbf16>
    %cst_8 = arith.constant dense<0.000000e+00> : vector<16x128xf32>
    %10 = tpu.matmul %9, %8, %cst_8 {dimension_numbers = #tpu.dot_dimension_numbers<[1], [0], [0], [1], [0, 0, 1, 1], [], []>} : vector<16x128xbf16>, vector<128x128xbf16>, vector<16x128xf32> -> vector<16x128xf32>
    %c0_9 = arith.constant 0 : index
    %c0_10 = arith.constant 0 : index
    %11 = vector.load %arg5[%c0_9, %c0_10] : memref<1x128xf32, #tpu.memory_space<vmem>>, vector<1x128xf32>
    %12 = vector.broadcast %11 : vector<1x128xf32> to vector<16x128xf32>
    %13 = arith.addf %10, %12 : vector<16x128xf32>
    %cst_11 = arith.constant 0.000000e+00 : f32
    %14 = vector.broadcast %cst_11 : f32 to vector<16x128xf32>
    %15 = arith.maximumf %13, %14 : vector<16x128xf32>
    %c0_12 = arith.constant 0 : index
    %c0_13 = arith.constant 0 : index
    %c0_14 = arith.constant 0 : index
    %16 = vector.load %arg6[%c0_12, %c0_13, %c0_14] : memref<2x128x128xbf16, #tpu.memory_space<vmem>>, vector<1x128x128xbf16>
    %17 = vector.shape_cast %16 : vector<1x128x128xbf16> to vector<128x128xbf16>
    %18 = arith.truncf %15 : vector<16x128xf32> to vector<16x128xbf16>
    %cst_15 = arith.constant dense<0.000000e+00> : vector<16x128xf32>
    %19 = tpu.matmul %18, %17, %cst_15 {dimension_numbers = #tpu.dot_dimension_numbers<[1], [0], [0], [1], [0, 0, 1, 1], [], []>} : vector<16x128xbf16>, vector<128x128xbf16>, vector<16x128xf32> -> vector<16x128xf32>
    %c0_16 = arith.constant 0 : index
    %c0_17 = arith.constant 0 : index
    %c0_18 = arith.constant 0 : index
    %20 = vector.load %arg7[%c0_16, %c0_17, %c0_18] : memref<2x1x128xf32, #tpu.memory_space<vmem>>, vector<1x1x128xf32>
    %21 = vector.shape_cast %20 : vector<1x1x128xf32> to vector<1x128xf32>
    %22 = vector.broadcast %21 : vector<1x128xf32> to vector<16x128xf32>
    %23 = arith.addf %19, %22 : vector<16x128xf32>
    %24 = arith.addf %15, %23 : vector<16x128xf32>
    %c0_19 = arith.constant 0 : index
    %c0_20 = arith.constant 0 : index
    %c0_21 = arith.constant 0 : index
    %25 = vector.load %arg8[%c0_19, %c0_20, %c0_21] : memref<2x1x128xf32, #tpu.memory_space<vmem>>, vector<1x1x128xf32>
    %26 = vector.shape_cast %25 : vector<1x1x128xf32> to vector<1x128xf32>
    %c0_22 = arith.constant 0 : index
    %c0_23 = arith.constant 0 : index
    %c0_24 = arith.constant 0 : index
    %27 = vector.load %arg9[%c0_22, %c0_23, %c0_24] : memref<2x1x128xf32, #tpu.memory_space<vmem>>, vector<1x1x128xf32>
    %28 = vector.shape_cast %27 : vector<1x1x128xf32> to vector<1x128xf32>
    %cst_25 = arith.constant dense<0.000000e+00> : vector<16xf32>
    %29 = vector.multi_reduction <add>, %24, %cst_25 [1] : vector<16x128xf32> to vector<16xf32>
    %30 = vector.shape_cast %29 : vector<16xf32> to vector<16x1xf32>
    %cst_26 = arith.constant 1.280000e+02 : f32
    %31 = vector.broadcast %cst_26 : f32 to vector<16x1xf32>
    %32 = arith.divf %30, %31 : vector<16x1xf32>
    %33 = vector.broadcast %32 : vector<16x1xf32> to vector<16x128xf32>
    %34 = arith.subf %24, %33 : vector<16x128xf32>
    %35 = arith.mulf %34, %34 : vector<16x128xf32>
    %cst_27 = arith.constant dense<0.000000e+00> : vector<16xf32>
    %36 = vector.multi_reduction <add>, %35, %cst_27 [1] : vector<16x128xf32> to vector<16xf32>
    %37 = vector.shape_cast %36 : vector<16xf32> to vector<16x1xf32>
    %cst_28 = arith.constant 1.280000e+02 : f32
    %38 = vector.broadcast %cst_28 : f32 to vector<16x1xf32>
    %39 = arith.divf %37, %38 : vector<16x1xf32>
    %40 = vector.broadcast %32 : vector<16x1xf32> to vector<16x128xf32>
    %41 = arith.subf %24, %40 : vector<16x128xf32>
    %cst_29 = arith.constant 9.99999974E-6 : f32
    %42 = vector.broadcast %cst_29 : f32 to vector<16x1xf32>
    %43 = arith.addf %39, %42 : vector<16x1xf32>
    %44 = math.rsqrt %43 : vector<16x1xf32>
    %45 = vector.broadcast %44 : vector<16x1xf32> to vector<16x128xf32>
    %46 = arith.mulf %41, %45 : vector<16x128xf32>
    %47 = vector.broadcast %26 : vector<1x128xf32> to vector<16x128xf32>
    %48 = arith.mulf %46, %47 : vector<16x128xf32>
    %49 = vector.broadcast %28 : vector<1x128xf32> to vector<16x128xf32>
    %50 = arith.addf %48, %49 : vector<16x128xf32>
    %c0_30 = arith.constant 0 : index
    %c0_31 = arith.constant 0 : index
    %c0_32 = arith.constant 0 : index
    %51 = vector.load %arg12[%c0_30, %c0_31, %c0_32] : memref<2x128x512xbf16, #tpu.memory_space<vmem>>, vector<1x128x512xbf16>
    %52 = vector.shape_cast %51 : vector<1x128x512xbf16> to vector<128x512xbf16>
    %53 = arith.truncf %50 : vector<16x128xf32> to vector<16x128xbf16>
    %cst_33 = arith.constant dense<0.000000e+00> : vector<16x512xf32>
    %54 = tpu.matmul %53, %52, %cst_33 {dimension_numbers = #tpu.dot_dimension_numbers<[1], [0], [0], [1], [0, 0, 1, 1], [], []>} : vector<16x128xbf16>, vector<128x512xbf16>, vector<16x512xf32> -> vector<16x512xf32>
    %c0_34 = arith.constant 0 : index
    %c0_35 = arith.constant 0 : index
    %c0_36 = arith.constant 0 : index
    %55 = vector.load %arg13[%c0_34, %c0_35, %c0_36] : memref<2x1x512xf32, #tpu.memory_space<vmem>>, vector<1x1x512xf32>
    %56 = vector.shape_cast %55 : vector<1x1x512xf32> to vector<1x512xf32>
    %57 = vector.broadcast %56 : vector<1x512xf32> to vector<16x512xf32>
    %58 = arith.addf %54, %57 : vector<16x512xf32>
    %cst_37 = arith.constant 0.000000e+00 : f32
    %59 = vector.broadcast %cst_37 : f32 to vector<16x512xf32>
    %60 = arith.maximumf %58, %59 : vector<16x512xf32>
    %61 = arith.truncf %60 : vector<16x512xf32> to vector<16x512xbf16>
    %c0_38 = arith.constant 0 : index
    %c0_39 = arith.constant 0 : index
    %c0_40 = arith.constant 0 : index
    %62 = vector.load %arg14[%c0_38, %c0_39, %c0_40] : memref<2x512x128xbf16, #tpu.memory_space<vmem>>, vector<1x512x128xbf16>
    %63 = vector.shape_cast %62 : vector<1x512x128xbf16> to vector<512x128xbf16>
    %cst_41 = arith.constant dense<0.000000e+00> : vector<16x128xf32>
    %64 = tpu.matmul %61, %63, %cst_41 {dimension_numbers = #tpu.dot_dimension_numbers<[1], [0], [0], [1], [0, 0, 1, 1], [], []>} : vector<16x512xbf16>, vector<512x128xbf16>, vector<16x128xf32> -> vector<16x128xf32>
    %c0_42 = arith.constant 0 : index
    %c0_43 = arith.constant 0 : index
    %c0_44 = arith.constant 0 : index
    %65 = vector.load %arg15[%c0_42, %c0_43, %c0_44] : memref<2x1x128xf32, #tpu.memory_space<vmem>>, vector<1x1x128xf32>
    %66 = vector.shape_cast %65 : vector<1x1x128xf32> to vector<1x128xf32>
    %67 = vector.broadcast %66 : vector<1x128xf32> to vector<16x128xf32>
    %68 = arith.addf %64, %67 : vector<16x128xf32>
    %69 = arith.addf %50, %68 : vector<16x128xf32>
    %c0_45 = arith.constant 0 : index
    %c0_46 = arith.constant 0 : index
    %c0_47 = arith.constant 0 : index
    %70 = vector.load %arg10[%c0_45, %c0_46, %c0_47] : memref<2x1x128xf32, #tpu.memory_space<vmem>>, vector<1x1x128xf32>
    %71 = vector.shape_cast %70 : vector<1x1x128xf32> to vector<1x128xf32>
    %c0_48 = arith.constant 0 : index
    %c0_49 = arith.constant 0 : index
    %c0_50 = arith.constant 0 : index
    %72 = vector.load %arg11[%c0_48, %c0_49, %c0_50] : memref<2x1x128xf32, #tpu.memory_space<vmem>>, vector<1x1x128xf32>
    %73 = vector.shape_cast %72 : vector<1x1x128xf32> to vector<1x128xf32>
    %cst_51 = arith.constant dense<0.000000e+00> : vector<16xf32>
    %74 = vector.multi_reduction <add>, %69, %cst_51 [1] : vector<16x128xf32> to vector<16xf32>
    %75 = vector.shape_cast %74 : vector<16xf32> to vector<16x1xf32>
    %cst_52 = arith.constant 1.280000e+02 : f32
    %76 = vector.broadcast %cst_52 : f32 to vector<16x1xf32>
    %77 = arith.divf %75, %76 : vector<16x1xf32>
    %78 = vector.broadcast %77 : vector<16x1xf32> to vector<16x128xf32>
    %79 = arith.subf %69, %78 : vector<16x128xf32>
    %80 = arith.mulf %79, %79 : vector<16x128xf32>
    %cst_53 = arith.constant dense<0.000000e+00> : vector<16xf32>
    %81 = vector.multi_reduction <add>, %80, %cst_53 [1] : vector<16x128xf32> to vector<16xf32>
    %82 = vector.shape_cast %81 : vector<16xf32> to vector<16x1xf32>
    %cst_54 = arith.constant 1.280000e+02 : f32
    %83 = vector.broadcast %cst_54 : f32 to vector<16x1xf32>
    %84 = arith.divf %82, %83 : vector<16x1xf32>
    %85 = vector.broadcast %77 : vector<16x1xf32> to vector<16x128xf32>
    %86 = arith.subf %69, %85 : vector<16x128xf32>
    %cst_55 = arith.constant 9.99999974E-6 : f32
    %87 = vector.broadcast %cst_55 : f32 to vector<16x1xf32>
    %88 = arith.addf %84, %87 : vector<16x1xf32>
    %89 = math.rsqrt %88 : vector<16x1xf32>
    %90 = vector.broadcast %89 : vector<16x1xf32> to vector<16x128xf32>
    %91 = arith.mulf %86, %90 : vector<16x128xf32>
    %92 = vector.broadcast %71 : vector<1x128xf32> to vector<16x128xf32>
    %93 = arith.mulf %91, %92 : vector<16x128xf32>
    %94 = vector.broadcast %73 : vector<1x128xf32> to vector<16x128xf32>
    %95 = arith.addf %93, %94 : vector<16x128xf32>
    %c1 = arith.constant 1 : index
    %c0_56 = arith.constant 0 : index
    %c0_57 = arith.constant 0 : index
    %96 = vector.load %arg6[%c1, %c0_56, %c0_57] : memref<2x128x128xbf16, #tpu.memory_space<vmem>>, vector<1x128x128xbf16>
    %97 = vector.shape_cast %96 : vector<1x128x128xbf16> to vector<128x128xbf16>
    %98 = arith.truncf %95 : vector<16x128xf32> to vector<16x128xbf16>
    %cst_58 = arith.constant dense<0.000000e+00> : vector<16x128xf32>
    %99 = tpu.matmul %98, %97, %cst_58 {dimension_numbers = #tpu.dot_dimension_numbers<[1], [0], [0], [1], [0, 0, 1, 1], [], []>} : vector<16x128xbf16>, vector<128x128xbf16>, vector<16x128xf32> -> vector<16x128xf32>
    %c1_59 = arith.constant 1 : index
    %c0_60 = arith.constant 0 : index
    %c0_61 = arith.constant 0 : index
    %100 = vector.load %arg7[%c1_59, %c0_60, %c0_61] : memref<2x1x128xf32, #tpu.memory_space<vmem>>, vector<1x1x128xf32>
    %101 = vector.shape_cast %100 : vector<1x1x128xf32> to vector<1x128xf32>
    %102 = vector.broadcast %101 : vector<1x128xf32> to vector<16x128xf32>
    %103 = arith.addf %99, %102 : vector<16x128xf32>
    %104 = arith.addf %95, %103 : vector<16x128xf32>
    %c1_62 = arith.constant 1 : index
    %c0_63 = arith.constant 0 : index
    %c0_64 = arith.constant 0 : index
    %105 = vector.load %arg8[%c1_62, %c0_63, %c0_64] : memref<2x1x128xf32, #tpu.memory_space<vmem>>, vector<1x1x128xf32>
    %106 = vector.shape_cast %105 : vector<1x1x128xf32> to vector<1x128xf32>
    %c1_65 = arith.constant 1 : index
    %c0_66 = arith.constant 0 : index
    %c0_67 = arith.constant 0 : index
    %107 = vector.load %arg9[%c1_65, %c0_66, %c0_67] : memref<2x1x128xf32, #tpu.memory_space<vmem>>, vector<1x1x128xf32>
    %108 = vector.shape_cast %107 : vector<1x1x128xf32> to vector<1x128xf32>
    %cst_68 = arith.constant dense<0.000000e+00> : vector<16xf32>
    %109 = vector.multi_reduction <add>, %104, %cst_68 [1] : vector<16x128xf32> to vector<16xf32>
    %110 = vector.shape_cast %109 : vector<16xf32> to vector<16x1xf32>
    %cst_69 = arith.constant 1.280000e+02 : f32
    %111 = vector.broadcast %cst_69 : f32 to vector<16x1xf32>
    %112 = arith.divf %110, %111 : vector<16x1xf32>
    %113 = vector.broadcast %112 : vector<16x1xf32> to vector<16x128xf32>
    %114 = arith.subf %104, %113 : vector<16x128xf32>
    %115 = arith.mulf %114, %114 : vector<16x128xf32>
    %cst_70 = arith.constant dense<0.000000e+00> : vector<16xf32>
    %116 = vector.multi_reduction <add>, %115, %cst_70 [1] : vector<16x128xf32> to vector<16xf32>
    %117 = vector.shape_cast %116 : vector<16xf32> to vector<16x1xf32>
    %cst_71 = arith.constant 1.280000e+02 : f32
    %118 = vector.broadcast %cst_71 : f32 to vector<16x1xf32>
    %119 = arith.divf %117, %118 : vector<16x1xf32>
    %120 = vector.broadcast %112 : vector<16x1xf32> to vector<16x128xf32>
    %121 = arith.subf %104, %120 : vector<16x128xf32>
    %cst_72 = arith.constant 9.99999974E-6 : f32
    %122 = vector.broadcast %cst_72 : f32 to vector<16x1xf32>
    %123 = arith.addf %119, %122 : vector<16x1xf32>
    %124 = math.rsqrt %123 : vector<16x1xf32>
    %125 = vector.broadcast %124 : vector<16x1xf32> to vector<16x128xf32>
    %126 = arith.mulf %121, %125 : vector<16x128xf32>
    %127 = vector.broadcast %106 : vector<1x128xf32> to vector<16x128xf32>
    %128 = arith.mulf %126, %127 : vector<16x128xf32>
    %129 = vector.broadcast %108 : vector<1x128xf32> to vector<16x128xf32>
    %130 = arith.addf %128, %129 : vector<16x128xf32>
    %c1_73 = arith.constant 1 : index
    %c0_74 = arith.constant 0 : index
    %c0_75 = arith.constant 0 : index
    %131 = vector.load %arg12[%c1_73, %c0_74, %c0_75] : memref<2x128x512xbf16, #tpu.memory_space<vmem>>, vector<1x128x512xbf16>
    %132 = vector.shape_cast %131 : vector<1x128x512xbf16> to vector<128x512xbf16>
    %133 = arith.truncf %130 : vector<16x128xf32> to vector<16x128xbf16>
    %cst_76 = arith.constant dense<0.000000e+00> : vector<16x512xf32>
    %134 = tpu.matmul %133, %132, %cst_76 {dimension_numbers = #tpu.dot_dimension_numbers<[1], [0], [0], [1], [0, 0, 1, 1], [], []>} : vector<16x128xbf16>, vector<128x512xbf16>, vector<16x512xf32> -> vector<16x512xf32>
    %c1_77 = arith.constant 1 : index
    %c0_78 = arith.constant 0 : index
    %c0_79 = arith.constant 0 : index
    %135 = vector.load %arg13[%c1_77, %c0_78, %c0_79] : memref<2x1x512xf32, #tpu.memory_space<vmem>>, vector<1x1x512xf32>
    %136 = vector.shape_cast %135 : vector<1x1x512xf32> to vector<1x512xf32>
    %137 = vector.broadcast %136 : vector<1x512xf32> to vector<16x512xf32>
    %138 = arith.addf %134, %137 : vector<16x512xf32>
    %cst_80 = arith.constant 0.000000e+00 : f32
    %139 = vector.broadcast %cst_80 : f32 to vector<16x512xf32>
    %140 = arith.maximumf %138, %139 : vector<16x512xf32>
    %141 = arith.truncf %140 : vector<16x512xf32> to vector<16x512xbf16>
    %c1_81 = arith.constant 1 : index
    %c0_82 = arith.constant 0 : index
    %c0_83 = arith.constant 0 : index
    %142 = vector.load %arg14[%c1_81, %c0_82, %c0_83] : memref<2x512x128xbf16, #tpu.memory_space<vmem>>, vector<1x512x128xbf16>
    %143 = vector.shape_cast %142 : vector<1x512x128xbf16> to vector<512x128xbf16>
    %cst_84 = arith.constant dense<0.000000e+00> : vector<16x128xf32>
    %144 = tpu.matmul %141, %143, %cst_84 {dimension_numbers = #tpu.dot_dimension_numbers<[1], [0], [0], [1], [0, 0, 1, 1], [], []>} : vector<16x512xbf16>, vector<512x128xbf16>, vector<16x128xf32> -> vector<16x128xf32>
    %c1_85 = arith.constant 1 : index
    %c0_86 = arith.constant 0 : index
    %c0_87 = arith.constant 0 : index
    %145 = vector.load %arg15[%c1_85, %c0_86, %c0_87] : memref<2x1x128xf32, #tpu.memory_space<vmem>>, vector<1x1x128xf32>
    %146 = vector.shape_cast %145 : vector<1x1x128xf32> to vector<1x128xf32>
    %147 = vector.broadcast %146 : vector<1x128xf32> to vector<16x128xf32>
    %148 = arith.addf %144, %147 : vector<16x128xf32>
    %149 = arith.addf %130, %148 : vector<16x128xf32>
    %c1_88 = arith.constant 1 : index
    %c0_89 = arith.constant 0 : index
    %c0_90 = arith.constant 0 : index
    %150 = vector.load %arg10[%c1_88, %c0_89, %c0_90] : memref<2x1x128xf32, #tpu.memory_space<vmem>>, vector<1x1x128xf32>
    %151 = vector.shape_cast %150 : vector<1x1x128xf32> to vector<1x128xf32>
    %c1_91 = arith.constant 1 : index
    %c0_92 = arith.constant 0 : index
    %c0_93 = arith.constant 0 : index
    %152 = vector.load %arg11[%c1_91, %c0_92, %c0_93] : memref<2x1x128xf32, #tpu.memory_space<vmem>>, vector<1x1x128xf32>
    %153 = vector.shape_cast %152 : vector<1x1x128xf32> to vector<1x128xf32>
    %cst_94 = arith.constant dense<0.000000e+00> : vector<16xf32>
    %154 = vector.multi_reduction <add>, %149, %cst_94 [1] : vector<16x128xf32> to vector<16xf32>
    %155 = vector.shape_cast %154 : vector<16xf32> to vector<16x1xf32>
    %cst_95 = arith.constant 1.280000e+02 : f32
    %156 = vector.broadcast %cst_95 : f32 to vector<16x1xf32>
    %157 = arith.divf %155, %156 : vector<16x1xf32>
    %158 = vector.broadcast %157 : vector<16x1xf32> to vector<16x128xf32>
    %159 = arith.subf %149, %158 : vector<16x128xf32>
    %160 = arith.mulf %159, %159 : vector<16x128xf32>
    %cst_96 = arith.constant dense<0.000000e+00> : vector<16xf32>
    %161 = vector.multi_reduction <add>, %160, %cst_96 [1] : vector<16x128xf32> to vector<16xf32>
    %162 = vector.shape_cast %161 : vector<16xf32> to vector<16x1xf32>
    %cst_97 = arith.constant 1.280000e+02 : f32
    %163 = vector.broadcast %cst_97 : f32 to vector<16x1xf32>
    %164 = arith.divf %162, %163 : vector<16x1xf32>
    %165 = vector.broadcast %157 : vector<16x1xf32> to vector<16x128xf32>
    %166 = arith.subf %149, %165 : vector<16x128xf32>
    %cst_98 = arith.constant 9.99999974E-6 : f32
    %167 = vector.broadcast %cst_98 : f32 to vector<16x1xf32>
    %168 = arith.addf %164, %167 : vector<16x1xf32>
    %169 = math.rsqrt %168 : vector<16x1xf32>
    %170 = vector.broadcast %169 : vector<16x1xf32> to vector<16x128xf32>
    %171 = arith.mulf %166, %170 : vector<16x128xf32>
    %172 = vector.broadcast %151 : vector<1x128xf32> to vector<16x128xf32>
    %173 = arith.mulf %171, %172 : vector<16x128xf32>
    %174 = vector.broadcast %153 : vector<1x128xf32> to vector<16x128xf32>
    %175 = arith.addf %173, %174 : vector<16x128xf32>
    %c0_99 = arith.constant 0 : index
    %c0_100 = arith.constant 0 : index
    %176 = vector.load %arg16[%c0_99, %c0_100] : memref<128x128xbf16, #tpu.memory_space<vmem>>, vector<128x128xbf16>
    %177 = arith.truncf %175 : vector<16x128xf32> to vector<16x128xbf16>
    %cst_101 = arith.constant dense<0.000000e+00> : vector<16x128xf32>
    %178 = tpu.matmul %177, %176, %cst_101 {dimension_numbers = #tpu.dot_dimension_numbers<[1], [0], [0], [1], [0, 0, 1, 1], [], []>} : vector<16x128xbf16>, vector<128x128xbf16>, vector<16x128xf32> -> vector<16x128xf32>
    %c0_102 = arith.constant 0 : index
    %c0_103 = arith.constant 0 : index
    %179 = vector.load %arg17[%c0_102, %c0_103] : memref<1x128xf32, #tpu.memory_space<vmem>>, vector<1x128xf32>
    %180 = vector.broadcast %179 : vector<1x128xf32> to vector<16x128xf32>
    %181 = arith.addf %178, %180 : vector<16x128xf32>
    %cst_104 = arith.constant 0.000000e+00 : f32
    %182 = vector.broadcast %cst_104 : f32 to vector<16x128xf32>
    %183 = arith.maximumf %181, %182 : vector<16x128xf32>
    %c0_105 = arith.constant 0 : index
    %c0_106 = arith.constant 0 : index
    %184 = vector.load %arg18[%c0_105, %c0_106] : memref<128x128xbf16, #tpu.memory_space<vmem>>, vector<128x128xbf16>
    %185 = arith.truncf %183 : vector<16x128xf32> to vector<16x128xbf16>
    %cst_107 = arith.constant dense<0.000000e+00> : vector<16x128xf32>
    %186 = tpu.matmul %185, %184, %cst_107 {dimension_numbers = #tpu.dot_dimension_numbers<[1], [0], [0], [1], [0, 0, 1, 1], [], []>} : vector<16x128xbf16>, vector<128x128xbf16>, vector<16x128xf32> -> vector<16x128xf32>
    %c0_108 = arith.constant 0 : index
    %c0_109 = arith.constant 0 : index
    %187 = vector.load %arg19[%c0_108, %c0_109] : memref<1x128xf32, #tpu.memory_space<vmem>>, vector<1x128xf32>
    %188 = vector.broadcast %187 : vector<1x128xf32> to vector<16x128xf32>
    %189 = arith.addf %186, %188 : vector<16x128xf32>
    %cst_110 = arith.constant 0.000000e+00 : f32
    %190 = vector.broadcast %cst_110 : f32 to vector<16x128xf32>
    %191 = arith.maximumf %189, %190 : vector<16x128xf32>
    %c0_111 = arith.constant 0 : index
    %c0_112 = arith.constant 0 : index
    %192 = vector.load %arg20[%c0_111, %c0_112] : memref<128x1024xbf16, #tpu.memory_space<vmem>>, vector<128x1024xbf16>
    %193 = arith.truncf %191 : vector<16x128xf32> to vector<16x128xbf16>
    %cst_113 = arith.constant dense<0.000000e+00> : vector<16x1024xf32>
    %194 = tpu.matmul %193, %192, %cst_113 {dimension_numbers = #tpu.dot_dimension_numbers<[1], [0], [0], [1], [0, 0, 1, 1], [], []>} : vector<16x128xbf16>, vector<128x1024xbf16>, vector<16x1024xf32> -> vector<16x1024xf32>
    %c0_114 = arith.constant 0 : index
    %c0_115 = arith.constant 0 : index
    %195 = vector.load %arg21[%c0_114, %c0_115] : memref<1x1024xf32, #tpu.memory_space<vmem>>, vector<1x1024xf32>
    %196 = vector.broadcast %195 : vector<1x1024xf32> to vector<16x1024xf32>
    %197 = arith.addf %194, %196 : vector<16x1024xf32>
    %198 = math.tanh %197 : vector<16x1024xf32>
    %c0_116 = arith.constant 0 : index
    %c0_117 = arith.constant 0 : index
    %199 = vector.load %arg22[%c0_116, %c0_117] : memref<16x1024xf32, #tpu.memory_space<vmem>>, vector<16x1024xf32>
    tpu.vector_store %arg22[%c0_116, %c0_117], %198 {strides = array<i32>} : memref<16x1024xf32, #tpu.memory_space<vmem>>, vector<16x1024xf32>,
    return
  }
  func.func @transform_0(%arg0: i32) -> (i32, i32) {
    %c0_i32 = arith.constant 0 : i32
    %c0_i32_0 = arith.constant 0 : i32
    return %arg0, %c0_i32 : i32, i32
  }
  func.func @transform_1(%arg0: i32) -> (i32, i32) {
    %c0_i32 = arith.constant 0 : i32
    %c0_i32_0 = arith.constant 0 : i32
    %c0_i32_1 = arith.constant 0 : i32
    return %c0_i32, %c0_i32_0 : i32, i32
  }
  func.func @transform_2(%arg0: i32) -> (i32, i32) {
    %c0_i32 = arith.constant 0 : i32
    %c0_i32_0 = arith.constant 0 : i32
    %c0_i32_1 = arith.constant 0 : i32
    return %c0_i32, %c0_i32_0 : i32, i32
  }
  func.func @transform_3(%arg0: i32) -> (i32, i32) {
    %c0_i32 = arith.constant 0 : i32
    %c0_i32_0 = arith.constant 0 : i32
    %c0_i32_1 = arith.constant 0 : i32
    return %c0_i32, %c0_i32_0 : i32, i32
  }
  func.func @transform_4(%arg0: i32) -> (i32, i32) {
    %c0_i32 = arith.constant 0 : i32
    %c0_i32_0 = arith.constant 0 : i32
    %c0_i32_1 = arith.constant 0 : i32
    return %c0_i32, %c0_i32_0 : i32, i32
  }
  func.func @transform_5(%arg0: i32) -> (i32, i32, i32) {
    %c0_i32 = arith.constant 0 : i32
    %c0_i32_0 = arith.constant 0 : i32
    %c0_i32_1 = arith.constant 0 : i32
    %c0_i32_2 = arith.constant 0 : i32
    return %c0_i32, %c0_i32_0, %c0_i32_1 : i32, i32, i32
  }
  func.func @transform_6(%arg0: i32) -> (i32, i32, i32) {
    %c0_i32 = arith.constant 0 : i32
    %c0_i32_0 = arith.constant 0 : i32
    %c0_i32_1 = arith.constant 0 : i32
    %c0_i32_2 = arith.constant 0 : i32
    return %c0_i32, %c0_i32_0, %c0_i32_1 : i32, i32, i32
  }
  func.func @transform_7(%arg0: i32) -> (i32, i32, i32) {
    %c0_i32 = arith.constant 0 : i32
    %c0_i32_0 = arith.constant 0 : i32
    %c0_i32_1 = arith.constant 0 : i32
    %c0_i32_2 = arith.constant 0 : i32
    return %c0_i32, %c0_i32_0, %c0_i32_1 : i32, i32, i32
  }
  func.func @transform_8(%arg0: i32) -> (i32, i32, i32) {
    %c0_i32 = arith.constant 0 : i32
    %c0_i32_0 = arith.constant 0 : i32
    %c0_i32_1 = arith.constant 0 : i32
    %c0_i32_2 = arith.constant 0 : i32
    return %c0_i32, %c0_i32_0, %c0_i32_1 : i32, i32, i32
  }
  func.func @transform_9(%arg0: i32) -> (i32, i32, i32) {
    %c0_i32 = arith.constant 0 : i32
    %c0_i32_0 = arith.constant 0 : i32
    %c0_i32_1 = arith.constant 0 : i32
    %c0_i32_2 = arith.constant 0 : i32
    return %c0_i32, %c0_i32_0, %c0_i32_1 : i32, i32, i32
  }
  func.func @transform_10(%arg0: i32) -> (i32, i32, i32) {
    %c0_i32 = arith.constant 0 : i32
    %c0_i32_0 = arith.constant 0 : i32
    %c0_i32_1 = arith.constant 0 : i32
    %c0_i32_2 = arith.constant 0 : i32
    return %c0_i32, %c0_i32_0, %c0_i32_1 : i32, i32, i32
  }
  func.func @transform_11(%arg0: i32) -> (i32, i32, i32) {
    %c0_i32 = arith.constant 0 : i32
    %c0_i32_0 = arith.constant 0 : i32
    %c0_i32_1 = arith.constant 0 : i32
    %c0_i32_2 = arith.constant 0 : i32
    return %c0_i32, %c0_i32_0, %c0_i32_1 : i32, i32, i32
  }
  func.func @transform_12(%arg0: i32) -> (i32, i32, i32) {
    %c0_i32 = arith.constant 0 : i32
    %c0_i32_0 = arith.constant 0 : i32
    %c0_i32_1 = arith.constant 0 : i32
    %c0_i32_2 = arith.constant 0 : i32
    return %c0_i32, %c0_i32_0, %c0_i32_1 : i32, i32, i32
  }
  func.func @transform_13(%arg0: i32) -> (i32, i32, i32) {
    %c0_i32 = arith.constant 0 : i32
    %c0_i32_0 = arith.constant 0 : i32
    %c0_i32_1 = arith.constant 0 : i32
    %c0_i32_2 = arith.constant 0 : i32
    return %c0_i32, %c0_i32_0, %c0_i32_1 : i32, i32, i32
  }
  func.func @transform_14(%arg0: i32) -> (i32, i32, i32) {
    %c0_i32 = arith.constant 0 : i32
    %c0_i32_0 = arith.constant 0 : i32
    %c0_i32_1 = arith.constant 0 : i32
    %c0_i32_2 = arith.constant 0 : i32
    return %c0_i32, %c0_i32_0, %c0_i32_1 : i32, i32, i32
  }
  func.func @transform_15(%arg0: i32) -> (i32, i32) {
    %c0_i32 = arith.constant 0 : i32
    %c0_i32_0 = arith.constant 0 : i32
    %c0_i32_1 = arith.constant 0 : i32
    return %c0_i32, %c0_i32_0 : i32, i32
  }
  func.func @transform_16(%arg0: i32) -> (i32, i32) {
    %c0_i32 = arith.constant 0 : i32
    %c0_i32_0 = arith.constant 0 : i32
    %c0_i32_1 = arith.constant 0 : i32
    return %c0_i32, %c0_i32_0 : i32, i32
  }
  func.func @transform_17(%arg0: i32) -> (i32, i32) {
    %c0_i32 = arith.constant 0 : i32
    %c0_i32_0 = arith.constant 0 : i32
    %c0_i32_1 = arith.constant 0 : i32
    return %c0_i32, %c0_i32_0 : i32, i32
  }
  func.func @transform_18(%arg0: i32) -> (i32, i32) {
    %c0_i32 = arith.constant 0 : i32
    %c0_i32_0 = arith.constant 0 : i32
    %c0_i32_1 = arith.constant 0 : i32
    return %c0_i32, %c0_i32_0 : i32, i32
  }
  func.func @transform_19(%arg0: i32) -> (i32, i32) {
    %c0_i32 = arith.constant 0 : i32
    %c0_i32_0 = arith.constant 0 : i32
    %c0_i32_1 = arith.constant 0 : i32
    return %c0_i32, %c0_i32_0 : i32, i32
  }
  func.func @transform_20(%arg0: i32) -> (i32, i32) {
    %c0_i32 = arith.constant 0 : i32
    %c0_i32_0 = arith.constant 0 : i32
    %c0_i32_1 = arith.constant 0 : i32
    return %c0_i32, %c0_i32_0 : i32, i32
  }
  func.func @transform_21(%arg0: i32) -> (i32, i32) {
    %c0_i32 = arith.constant 0 : i32
    %c0_i32_0 = arith.constant 0 : i32
    return %arg0, %c0_i32 : i32, i32
  }
}

</mosaic_0001>

<llo_original>
// kernel: tpu_custom_call.1
$region0: #{tpu_custom_call.1}
  #allocation0 [shape = 'u32[]', space=smem, size = 0x4, offset = 0x4, fixed_abs, tag = 'smem constant byte address 0x4 - core index']
  #allocation1 [shape = 'u32[144,128]{1,0:T(1,128)}', space=vmem, size = 0x12000, scoped, tag = 'internal scratch']
  %s0 = inlined_call_operand.hbm [shape: bf16[16,1024], index: 0, kind: input, shape index: {}]
  %s1 = inlined_call_operand.hbm [shape: bf16[1024,128], index: 1, kind: input, shape index: {}]
  %s2 = inlined_call_operand.hbm [shape: f32[1,128], index: 2, kind: input, shape index: {}]
  %s3 = inlined_call_operand.hbm [shape: bf16[128,128], index: 3, kind: input, shape index: {}]
  %s4 = inlined_call_operand.hbm [shape: f32[1,128], index: 4, kind: input, shape index: {}]
  %s5 = inlined_call_operand.hbm [shape: bf16[2,128,128], index: 5, kind: input, shape index: {}]
  %s6 = inlined_call_operand.hbm [shape: f32[2,1,128], index: 6, kind: input, shape index: {}]
  %s7 = inlined_call_operand.hbm [shape: f32[2,1,128], index: 7, kind: input, shape index: {}]
  %s8 = inlined_call_operand.hbm [shape: f32[2,1,128], index: 8, kind: input, shape index: {}]
  %s9 = inlined_call_operand.hbm [shape: f32[2,1,128], index: 9, kind: input, shape index: {}]
  %s10 = inlined_call_operand.hbm [shape: f32[2,1,128], index: 10, kind: input, shape index: {}]
  %s11 = inlined_call_operand.hbm [shape: bf16[2,128,512], index: 11, kind: input, shape index: {}]
  %s12 = inlined_call_operand.hbm [shape: f32[2,1,512], index: 12, kind: input, shape index: {}]
  %s13 = inlined_call_operand.hbm [shape: bf16[2,512,128], index: 13, kind: input, shape index: {}]
  %s14 = inlined_call_operand.hbm [shape: f32[2,1,128], index: 14, kind: input, shape index: {}]
  %s15 = inlined_call_operand.hbm [shape: bf16[128,128], index: 15, kind: input, shape index: {}]
  %s16 = inlined_call_operand.hbm [shape: f32[1,128], index: 16, kind: input, shape index: {}]
  %s17 = inlined_call_operand.vmem [shape: bf16[128,128], index: 17, kind: input, shape index: {}]
  %s18 = inlined_call_operand.vmem [shape: f32[1,128], index: 18, kind: input, shape index: {}]
  %s19 = inlined_call_operand.hbm [shape: bf16[128,1024], index: 19, kind: input, shape index: {}]
  %s20 = inlined_call_operand.vmem [shape: f32[1,1024], index: 20, kind: input, shape index: {}]
  %s21 = inlined_call_operand.hbm [shape: f32[16,1024], index: 21, kind: output, shape index: {}]
  %s22 = sld [smem:[#allocation0]]
  $region166: #{tpu_custom_call.1} parent=0
    _
  %s24 = ssub.s32 1, %s22
  %s25 = scalar_select 0, %s24, %s22
  $region1: #{tpu_custom_call.1} parent=0
    #allocation2 [shape = 'u8[32768]{0}', space=vmem, size = 0x8000, scoped, tag = 'input window, operand 0, single buffered']
    #allocation3 [shape = 's32[1]{0}', space=sflag, size = 0x4, scoped, tag = 'scoped memory for tpu_custom_call.1']
    #allocation4 [shape = 's32[1]{0}', space=sflag, size = 0x4, scoped, tag = 'scoped memory for tpu_custom_call.1']
    #allocation5 [shape = 'u8[262144]{0}', space=vmem, size = 0x40000, scoped, tag = 'input window, operand 1, single buffered']
    #allocation6 [shape = 's32[1]{0}', space=sflag, size = 0x4, scoped, tag = 'scoped memory for tpu_custom_call.1']
    #allocation7 [shape = 'u8[512]{0}', space=vmem, size = 0x400, scoped, tag = 'input window, operand 2, single buffered']
    #allocation8 [shape = 'u8[32768]{0}', space=vmem, size = 0x8000, scoped, tag = 'input window, operand 3, single buffered']
    #allocation9 [shape = 's32[1]{0}', space=sflag, size = 0x4, scoped, tag = 'scoped memory for tpu_custom_call.1']
    #allocation10 [shape = 'u8[512]{0}', space=vmem, size = 0x400, scoped, tag = 'input window, operand 4, single buffered']
    #allocation11 [shape = 'u8[65536]{0}', space=vmem, size = 0x10000, scoped, tag = 'input window, operand 5, single buffered']
    #allocation12 [shape = 's32[1]{0}', space=sflag, size = 0x4, scoped, tag = 'scoped memory for tpu_custom_call.1']
    #allocation13 [shape = 'u8[1024]{0}', space=vmem, size = 0x400, scoped, tag = 'input window, operand 6, single buffered']
    #allocation14 [shape = 'u8[1024]{0}', space=vmem, size = 0x400, scoped, tag = 'input window, operand 7, single buffered']
    #allocation15 [shape = 's32[1]{0}', space=sflag, size = 0x4, scoped, tag = 'scoped memory for tpu_custom_call.1']
    #allocation16 [shape = 'u8[1024]{0}', space=vmem, size = 0x400, scoped, tag = 'input window, operand 8, single buffered']
    #allocation17 [shape = 'u8[1024]{0}', space=vmem, size = 0x400, scoped, tag = 'input window, operand 9, single buffered']
    #allocation18 [shape = 's32[1]{0}', space=sflag, size = 0x4, scoped, tag = 'scoped memory for tpu_custom_call.1']
    #allocation19 [shape = 'u8[1024]{0}', space=vmem, size = 0x400, scoped, tag = 'input window, operand 10, single buffered']
    #allocation20 [shape = 'u8[262144]{0}', space=vmem, size = 0x40000, scoped, tag = 'input window, operand 11, single buffered']
    #allocation21 [shape = 's32[1]{0}', space=sflag, size = 0x4, scoped, tag = 'scoped memory for tpu_custom_call.1']
    #allocation22 [shape = 'u8[4096]{0}', space=vmem, size = 0x1000, scoped, tag = 'input window, operand 12, single buffered']
    #allocation23 [shape = 'u8[262144]{0}', space=vmem, size = 0x40000, scoped, tag = 'input window, operand 13, single buffered']
    #allocation24 [shape = 's32[1]{0}', space=sflag, size = 0x4, scoped, tag = 'scoped memory for tpu_custom_call.1']
    #allocation25 [shape = 'u8[1024]{0}', space=vmem, size = 0x400, scoped, tag = 'input window, operand 14, single buffered']
    #allocation26 [shape = 'u8[32768]{0}', space=vmem, size = 0x8000, scoped, tag = 'input window, operand 15, single buffered']
    #allocation27 [shape = 's32[1]{0}', space=sflag, size = 0x4, scoped, tag = 'scoped memory for tpu_custom_call.1']
    #allocation28 [shape = 'u8[512]{0}', space=vmem, size = 0x400, scoped, tag = 'input window, operand 16, single buffered']
    #allocation29 [shape = 'u8[262144]{0}', space=vmem, size = 0x40000, scoped, tag = 'input window, operand 19, single buffered']
    #allocation30 [shape = 's32[1]{0}', space=sflag, size = 0x4, scoped, tag = 'scoped memory for tpu_custom_call.1']
    #allocation31 [shape = 'u8[65536]{0}', space=vmem, size = 0x10000, scoped, tag = 'output window, operand 0, single buffered']
    %26 = vsyncpa [#allocation3], 0
    %27 = vsyncpa [#allocation6], 0
    %28 = vsyncpa [#allocation9], 0
    %29 = vsyncpa [#allocation12], 0
    %30 = vsyncpa [#allocation15], 0
    %31 = vsyncpa [#allocation18], 0
    %32 = vsyncpa [#allocation21], 0
    %33 = vsyncpa [#allocation24], 0
    %34 = vsyncpa [#allocation27], 0
    %35 = vsyncpa [#allocation30], 0
    %36 = vsyncpa [#allocation4], 0
    // Predicated region
    $region2: #{tpu_custom_call.1} parent=1 // pred_check
      _
    $region3: #{tpu_custom_call.1} parent=1 // pred_check_branch
      %38 = sbr.rel (0) target = $region5
    $region4: #{tpu_custom_call.1} parent=1 // pred_region
      %s40 = ssub.s32 1024, 1024
      %41 = vsyncadd [#allocation3], %s40
      %s42 = sshll.u32 [#allocation2], 4
      %s43 = int_to_ptr.vmem [resolvable:$true] %s42
      %48 = dma.hbm_to_vmem [thread:$0]  %s0, 1024, %s43, [#allocation3], 512, 512, 32
    $region5: #{tpu_custom_call.1} parent=1 // pred_fallthru
      _
    // Predicated region
    $region6: #{tpu_custom_call.1} parent=1 // pred_check
      _
    $region7: #{tpu_custom_call.1} parent=1 // pred_check_branch
      %50 = sbr.rel (0) target = $region9
    $region8: #{tpu_custom_call.1} parent=1 // pred_region
      %s52 = ssub.s32 8192, 8192
      %53 = vsyncadd [#allocation6], %s52
      %s54 = sshll.u32 [#allocation5], 4
      %s55 = int_to_ptr.vmem [resolvable:$true] %s54
      %60 = dma.hbm_to_vmem [thread:$0]  %s1, 8192, %s55, [#allocation6], 64, 64, 4
    $region9: #{tpu_custom_call.1} parent=1 // pred_fallthru
      _
    // Predicated region
    $region10: #{tpu_custom_call.1} parent=1 // pred_check
      _
    $region11: #{tpu_custom_call.1} parent=1 // pred_check_branch
      %62 = sbr.rel (0) target = $region13
    $region12: #{tpu_custom_call.1} parent=1 // pred_region
      %s64 = ssub.s32 16, 16
      %65 = vsyncadd [#allocation6], %s64
      %s67 = sshll.u32 [#allocation7], 4
      %s68 = int_to_ptr.vmem [resolvable:$true] %s67
      %70 = dma.hbm_to_vmem [thread:$0]  %s2, 16, %s68, [#allocation6]
    $region13: #{tpu_custom_call.1} parent=1 // pred_fallthru
      _
    // Predicated region
    $region14: #{tpu_custom_call.1} parent=1 // pred_check
      _
    $region15: #{tpu_custom_call.1} parent=1 // pred_check_branch
      %72 = sbr.rel (0) target = $region17
    $region16: #{tpu_custom_call.1} parent=1 // pred_region
      %s74 = ssub.s32 1024, 1024
      %75 = vsyncadd [#allocation9], %s74
      %s76 = sshll.u32 [#allocation8], 4
      %s77 = int_to_ptr.vmem [resolvable:$true] %s76
      %82 = dma.hbm_to_vmem [thread:$0]  %s3, 1024, %s77, [#allocation9], 64, 64, 4
    $region17: #{tpu_custom_call.1} parent=1 // pred_fallthru
      _
    // Predicated region
    $region18: #{tpu_custom_call.1} parent=1 // pred_check
      _
    $region19: #{tpu_custom_call.1} parent=1 // pred_check_branch
      %84 = sbr.rel (0) target = $region21
    $region20: #{tpu_custom_call.1} parent=1 // pred_region
      %s86 = ssub.s32 16, 16
      %87 = vsyncadd [#allocation9], %s86
      %s89 = sshll.u32 [#allocation10], 4
      %s90 = int_to_ptr.vmem [resolvable:$true] %s89
      %92 = dma.hbm_to_vmem [thread:$0]  %s4, 16, %s90, [#allocation9]
    $region21: #{tpu_custom_call.1} parent=1 // pred_fallthru
      _
    // Predicated region
    $region22: #{tpu_custom_call.1} parent=1 // pred_check
      _
    $region23: #{tpu_custom_call.1} parent=1 // pred_check_branch
      %94 = sbr.rel (0) target = $region25
    $region24: #{tpu_custom_call.1} parent=1 // pred_region
      %s96 = ssub.s32 2048, 2048
      %97 = vsyncadd [#allocation12], %s96
      %s98 = sshll.u32 [#allocation11], 4
      %s99 = int_to_ptr.vmem [resolvable:$true] %s98
      %104 = dma.hbm_to_vmem [thread:$0]  %s5, 2048, %s99, [#allocation12], 64, 64, 4
    $region25: #{tpu_custom_call.1} parent=1 // pred_fallthru
      _
    // Predicated region
    $region26: #{tpu_custom_call.1} parent=1 // pred_check
      _
    $region27: #{tpu_custom_call.1} parent=1 // pred_check_branch
      %106 = sbr.rel (0) target = $region29
    $region28: #{tpu_custom_call.1} parent=1 // pred_region
      %s108 = ssub.s32 32, 32
      %109 = vsyncadd [#allocation12], %s108
      %s110 = sshll.u32 [#allocation13], 4
      %s111 = int_to_ptr.vmem [resolvable:$true] %s110
      %116 = dma.hbm_to_vmem [thread:$0]  %s6, 32, %s111, [#allocation12], 16, 16, 1
    $region29: #{tpu_custom_call.1} parent=1 // pred_fallthru
      _
    // Predicated region
    $region30: #{tpu_custom_call.1} parent=1 // pred_check
      _
    $region31: #{tpu_custom_call.1} parent=1 // pred_check_branch
      %118 = sbr.rel (0) target = $region33
    $region32: #{tpu_custom_call.1} parent=1 // pred_region
      %s120 = ssub.s32 32, 32
      %121 = vsyncadd [#allocation15], %s120
      %s122 = sshll.u32 [#allocation14], 4
      %s123 = int_to_ptr.vmem [resolvable:$true] %s122
      %128 = dma.hbm_to_vmem [thread:$0]  %s7, 32, %s123, [#allocation15], 16, 16, 1
    $region33: #{tpu_custom_call.1} parent=1 // pred_fallthru
      _
    // Predicated region
    $region34: #{tpu_custom_call.1} parent=1 // pred_check
      _
    $region35: #{tpu_custom_call.1} parent=1 // pred_check_branch
      %130 = sbr.rel (0) target = $region37
    $region36: #{tpu_custom_call.1} parent=1 // pred_region
      %s132 = ssub.s32 32, 32
      %133 = vsyncadd [#allocation15], %s132
      %s134 = sshll.u32 [#allocation16], 4
      %s135 = int_to_ptr.vmem [resolvable:$true] %s134
      %140 = dma.hbm_to_vmem [thread:$0]  %s8, 32, %s135, [#allocation15], 16, 16, 1
    $region37: #{tpu_custom_call.1} parent=1 // pred_fallthru
      _
    // Predicated region
    $region38: #{tpu_custom_call.1} parent=1 // pred_check
      _
    $region39: #{tpu_custom_call.1} parent=1 // pred_check_branch
      %142 = sbr.rel (0) target = $region41
    $region40: #{tpu_custom_call.1} parent=1 // pred_region
      %s144 = ssub.s32 32, 32
      %145 = vsyncadd [#allocation18], %s144
      %s146 = sshll.u32 [#allocation17], 4
      %s147 = int_to_ptr.vmem [resolvable:$true] %s146
      %152 = dma.hbm_to_vmem [thread:$0]  %s9, 32, %s147, [#allocation18], 16, 16, 1
    $region41: #{tpu_custom_call.1} parent=1 // pred_fallthru
      _
    // Predicated region
    $region42: #{tpu_custom_call.1} parent=1 // pred_check
      _
    $region43: #{tpu_custom_call.1} parent=1 // pred_check_branch
      %154 = sbr.rel (0) target = $region45
    $region44: #{tpu_custom_call.1} parent=1 // pred_region
      %s156 = ssub.s32 32, 32
      %157 = vsyncadd [#allocation18], %s156
      %s158 = sshll.u32 [#allocation19], 4
      %s159 = int_to_ptr.vmem [resolvable:$true] %s158
      %164 = dma.hbm_to_vmem [thread:$0]  %s10, 32, %s159, [#allocation18], 16, 16, 1
    $region45: #{tpu_custom_call.1} parent=1 // pred_fallthru
      _
    // Predicated region
    $region46: #{tpu_custom_call.1} parent=1 // pred_check
      _
    $region47: #{tpu_custom_call.1} parent=1 // pred_check_branch
      %166 = sbr.rel (0) target = $region49
    $region48: #{tpu_custom_call.1} parent=1 // pred_region
      %s168 = ssub.s32 8192, 8192
      %169 = vsyncadd [#allocation21], %s168
      %s170 = sshll.u32 [#allocation20], 4
      %s171 = int_to_ptr.vmem [resolvable:$true] %s170
      %176 = dma.hbm_to_vmem [thread:$0]  %s11, 8192, %s171, [#allocation21], 256, 256, 16
    $region49: #{tpu_custom_call.1} parent=1 // pred_fallthru
      _
    // Predicated region
    $region50: #{tpu_custom_call.1} parent=1 // pred_check
      _
    $region51: #{tpu_custom_call.1} parent=1 // pred_check_branch
      %178 = sbr.rel (0) target = $region53
    $region52: #{tpu_custom_call.1} parent=1 // pred_region
      %s180 = ssub.s32 128, 128
      %181 = vsyncadd [#allocation21], %s180
      %s182 = sshll.u32 [#allocation22], 4
      %s183 = int_to_ptr.vmem [resolvable:$true] %s182
      %188 = dma.hbm_to_vmem [thread:$0]  %s12, 128, %s183, [#allocation21], 64, 64, 4
    $region53: #{tpu_custom_call.1} parent=1 // pred_fallthru
      _
    // Predicated region
    $region54: #{tpu_custom_call.1} parent=1 // pred_check
      _
    $region55: #{tpu_custom_call.1} parent=1 // pred_check_branch
      %190 = sbr.rel (0) target = $region57
    $region56: #{tpu_custom_call.1} parent=1 // pred_region
      %s192 = ssub.s32 8192, 8192
      %193 = vsyncadd [#allocation24], %s192
      %s194 = sshll.u32 [#allocation23], 4
      %s195 = int_to_ptr.vmem [resolvable:$true] %s194
      %200 = dma.hbm_to_vmem [thread:$0]  %s13, 8192, %s195, [#allocation24], 64, 64, 4
    $region57: #{tpu_custom_call.1} parent=1 // pred_fallthru
      _
    // Predicated region
    $region58: #{tpu_custom_call.1} parent=1 // pred_check
      _
    $region59: #{tpu_custom_call.1} parent=1 // pred_check_branch
      %202 = sbr.rel (0) target = $region61
    $region60: #{tpu_custom_call.1} parent=1 // pred_region
      %s204 = ssub.s32 32, 32
      %205 = vsyncadd [#allocation24], %s204
      %s206 = sshll.u32 [#allocation25], 4
      %s207 = int_to_ptr.vmem [resolvable:$true] %s206
      %212 = dma.hbm_to_vmem [thread:$0]  %s14, 32, %s207, [#allocation24], 16, 16, 1
    $region61: #{tpu_custom_call.1} parent=1 // pred_fallthru
      _
    // Predicated region
    $region62: #{tpu_custom_call.1} parent=1 // pred_check
      _
    $region63: #{tpu_custom_call.1} parent=1 // pred_check_branch
      %214 = sbr.rel (0) target = $region65
    $region64: #{tpu_custom_call.1} parent=1 // pred_region
      %s216 = ssub.s32 1024, 1024
      %217 = vsyncadd [#allocation27], %s216
      %s218 = sshll.u32 [#allocation26], 4
      %s219 = int_to_ptr.vmem [resolvable:$true] %s218
      %224 = dma.hbm_to_vmem [thread:$0]  %s15, 1024, %s219, [#allocation27], 64, 64, 4
    $region65: #{tpu_custom_call.1} parent=1 // pred_fallthru
      _
    // Predicated region
    $region66: #{tpu_custom_call.1} parent=1 // pred_check
      _
    $region67: #{tpu_custom_call.1} parent=1 // pred_check_branch
      %226 = sbr.rel (0) target = $region69
    $region68: #{tpu_custom_call.1} parent=1 // pred_region
      %s228 = ssub.s32 16, 16
      %229 = vsyncadd [#allocation27], %s228
      %s231 = sshll.u32 [#allocation28], 4
      %s232 = int_to_ptr.vmem [resolvable:$true] %s231
      %234 = dma.hbm_to_vmem [thread:$0]  %s16, 16, %s232, [#allocation27]
    $region69: #{tpu_custom_call.1} parent=1 // pred_fallthru
      _
    // Predicated region
    $region70: #{tpu_custom_call.1} parent=1 // pred_check
      _
    $region71: #{tpu_custom_call.1} parent=1 // pred_check_branch
      %236 = sbr.rel (0) target = $region73
    $region72: #{tpu_custom_call.1} parent=1 // pred_region
      _
    $region73: #{tpu_custom_call.1} parent=1 // pred_fallthru
      _
    // Predicated region
    $region74: #{tpu_custom_call.1} parent=1 // pred_check
      _
    $region75: #{tpu_custom_call.1} parent=1 // pred_check_branch
      %238 = sbr.rel (0) target = $region77
    $region76: #{tpu_custom_call.1} parent=1 // pred_region
      _
    $region77: #{tpu_custom_call.1} parent=1 // pred_fallthru
      _
    // Predicated region
    $region78: #{tpu_custom_call.1} parent=1 // pred_check
      _
    $region79: #{tpu_custom_call.1} parent=1 // pred_check_branch
      %240 = sbr.rel (0) target = $region81
    $region80: #{tpu_custom_call.1} parent=1 // pred_region
      %s242 = ssub.s32 8192, 8192
      %243 = vsyncadd [#allocation30], %s242
      %s244 = sshll.u32 [#allocation29], 4
      %s245 = int_to_ptr.vmem [resolvable:$true] %s244
      %250 = dma.hbm_to_vmem [thread:$0]  %s19, 8192, %s245, [#allocation30], 512, 512, 32
    $region81: #{tpu_custom_call.1} parent=1 // pred_fallthru
      _
    // Predicated region
    $region82: #{tpu_custom_call.1} parent=1 // pred_check
      _
    $region83: #{tpu_custom_call.1} parent=1 // pred_check_branch
      %252 = sbr.rel (0) target = $region85
    $region84: #{tpu_custom_call.1} parent=1 // pred_region
      _
    $region85: #{tpu_custom_call.1} parent=1 // pred_fallthru
      _
    // Predicated region
    $region86: #{tpu_custom_call.1} parent=1 // pred_check
      _
    $region87: #{tpu_custom_call.1} parent=1 // pred_check_branch
      %254 = sbr.rel (0) target = $region89
    $region88: #{tpu_custom_call.1} parent=1 // pred_region
      %255 = dma.done [#allocation3], 1024
    $region89: #{tpu_custom_call.1} parent=1 // pred_fallthru
      _
    // Predicated region
    $region90: #{tpu_custom_call.1} parent=1 // pred_check
      _
    $region91: #{tpu_custom_call.1} parent=1 // pred_check_branch
      %257 = sbr.rel (0) target = $region93
    $region92: #{tpu_custom_call.1} parent=1 // pred_region
      %258 = dma.done [#allocation6], 8192
    $region93: #{tpu_custom_call.1} parent=1 // pred_fallthru
      _
    // Predicated region
    $region94: #{tpu_custom_call.1} parent=1 // pred_check
      _
    $region95: #{tpu_custom_call.1} parent=1 // pred_check_branch
      %260 = sbr.rel (0) target = $region97
    $region96: #{tpu_custom_call.1} parent=1 // pred_region
      %261 = dma.done [#allocation6], 16
    $region97: #{tpu_custom_call.1} parent=1 // pred_fallthru
      _
    // Predicated region
    $region98: #{tpu_custom_call.1} parent=1 // pred_check
      _
    $region99: #{tpu_custom_call.1} parent=1 // pred_check_branch
      %263 = sbr.rel (0) target = $region101
    $region100: #{tpu_custom_call.1} parent=1 // pred_region
      %264 = dma.done [#allocation9], 1024
    $region101: #{tpu_custom_call.1} parent=1 // pred_fallthru
      _
    // Predicated region
    $region102: #{tpu_custom_call.1} parent=1 // pred_check
      _
    $region103: #{tpu_custom_call.1} parent=1 // pred_check_branch
      %266 = sbr.rel (0) target = $region105
    $region104: #{tpu_custom_call.1} parent=1 // pred_region
      %267 = dma.done [#allocation9], 16
    $region105: #{tpu_custom_call.1} parent=1 // pred_fallthru
      _
    // Predicated region
    $region106: #{tpu_custom_call.1} parent=1 // pred_check
      _
    $region107: #{tpu_custom_call.1} parent=1 // pred_check_branch
      %269 = sbr.rel (0) target = $region109
    $region108: #{tpu_custom_call.1} parent=1 // pred_region
      %270 = dma.done [#allocation12], 2048
    $region109: #{tpu_custom_call.1} parent=1 // pred_fallthru
      _
    // Predicated region
    $region110: #{tpu_custom_call.1} parent=1 // pred_check
      _
    $region111: #{tpu_custom_call.1} parent=1 // pred_check_branch
      %272 = sbr.rel (0) target = $region113
    $region112: #{tpu_custom_call.1} parent=1 // pred_region
      %273 = dma.done [#allocation12], 32
    $region113: #{tpu_custom_call.1} parent=1 // pred_fallthru
      _
    // Predicated region
    $region114: #{tpu_custom_call.1} parent=1 // pred_check
      _
    $region115: #{tpu_custom_call.1} parent=1 // pred_check_branch
      %275 = sbr.rel (0) target = $region117
    $region116: #{tpu_custom_call.1} parent=1 // pred_region
      %276 = dma.done [#allocation15], 32
    $region117: #{tpu_custom_call.1} parent=1 // pred_fallthru
      _
    // Predicated region
    $region118: #{tpu_custom_call.1} parent=1 // pred_check
      _
    $region119: #{tpu_custom_call.1} parent=1 // pred_check_branch
      %278 = sbr.rel (0) target = $region121
    $region120: #{tpu_custom_call.1} parent=1 // pred_region
      %279 = dma.done [#allocation15], 32
    $region121: #{tpu_custom_call.1} parent=1 // pred_fallthru
      _
    // Predicated region
    $region122: #{tpu_custom_call.1} parent=1 // pred_check
      _
    $region123: #{tpu_custom_call.1} parent=1 // pred_check_branch
      %281 = sbr.rel (0) target = $region125
    $region124: #{tpu_custom_call.1} parent=1 // pred_region
      %282 = dma.done [#allocation18], 32
    $region125: #{tpu_custom_call.1} parent=1 // pred_fallthru
      _
    // Predicated region
    $region126: #{tpu_custom_call.1} parent=1 // pred_check
      _
    $region127: #{tpu_custom_call.1} parent=1 // pred_check_branch
      %284 = sbr.rel (0) target = $region129
    $region128: #{tpu_custom_call.1} parent=1 // pred_region
      %285 = dma.done [#allocation18], 32
    $region129: #{tpu_custom_call.1} parent=1 // pred_fallthru
      _
    // Predicated region
    $region130: #{tpu_custom_call.1} parent=1 // pred_check
      _
    $region131: #{tpu_custom_call.1} parent=1 // pred_check_branch
      %287 = sbr.rel (0) target = $region133
    $region132: #{tpu_custom_call.1} parent=1 // pred_region
      %288 = dma.done [#allocation21], 8192
    $region133: #{tpu_custom_call.1} parent=1 // pred_fallthru
      _
    // Predicated region
    $region134: #{tpu_custom_call.1} parent=1 // pred_check
      _
    $region135: #{tpu_custom_call.1} parent=1 // pred_check_branch
      %290 = sbr.rel (0) target = $region137
    $region136: #{tpu_custom_call.1} parent=1 // pred_region
      %291 = dma.done [#allocation21], 128
    $region137: #{tpu_custom_call.1} parent=1 // pred_fallthru
      _
    // Predicated region
    $region138: #{tpu_custom_call.1} parent=1 // pred_check
      _
    $region139: #{tpu_custom_call.1} parent=1 // pred_check_branch
      %293 = sbr.rel (0) target = $region141
    $region140: #{tpu_custom_call.1} parent=1 // pred_region
      %294 = dma.done [#allocation24], 8192
    $region141: #{tpu_custom_call.1} parent=1 // pred_fallthru
      _
    // Predicated region
    $region142: #{tpu_custom_call.1} parent=1 // pred_check
      _
    $region143: #{tpu_custom_call.1} parent=1 // pred_check_branch
      %296 = sbr.rel (0) target = $region145
    $region144: #{tpu_custom_call.1} parent=1 // pred_region
      %297 = dma.done [#allocation24], 32
    $region145: #{tpu_custom_call.1} parent=1 // pred_fallthru
      _
    // Predicated region
    $region146: #{tpu_custom_call.1} parent=1 // pred_check
      _
    $region147: #{tpu_custom_call.1} parent=1 // pred_check_branch
      %299 = sbr.rel (0) target = $region149
    $region148: #{tpu_custom_call.1} parent=1 // pred_region
      %300 = dma.done [#allocation27], 1024
    $region149: #{tpu_custom_call.1} parent=1 // pred_fallthru
      _
    // Predicated region
    $region150: #{tpu_custom_call.1} parent=1 // pred_check
      _
    $region151: #{tpu_custom_call.1} parent=1 // pred_check_branch
      %302 = sbr.rel (0) target = $region153
    $region152: #{tpu_custom_call.1} parent=1 // pred_region
      %303 = dma.done [#allocation27], 16
    $region153: #{tpu_custom_call.1} parent=1 // pred_fallthru
      _
    // Predicated region
    $region154: #{tpu_custom_call.1} parent=1 // pred_check
      _
    $region155: #{tpu_custom_call.1} parent=1 // pred_check_branch
      %305 = sbr.rel (0) target = $region157
    $region156: #{tpu_custom_call.1} parent=1 // pred_region
      %306 = dma.done [#allocation30], 8192
    $region157: #{tpu_custom_call.1} parent=1 // pred_fallthru
      _
    %v308 = vld [vmem:[#allocation2] sm:$0xff]
    %v309 = vld [vmem:[#allocation2 + $0x8] sm:$0xff]
    %v310 = vld [vmem:[#allocation2 + $0x10] sm:$0xff]
    %v311 = vld [vmem:[#allocation2 + $0x18] sm:$0xff]
    %v312 = vld [vmem:[#allocation2 + $0x20] sm:$0xff]
    %v313 = vld [vmem:[#allocation2 + $0x28] sm:$0xff]
    %v314 = vld [vmem:[#allocation2 + $0x30] sm:$0xff]
    %v315 = vld [vmem:[#allocation2 + $0x38] sm:$0xff]
    %v316 = vld [vmem:[#allocation5] sm:$0xf]
    %v317 = vld [vmem:[#allocation5 + $0x4] sm:$0xf]
    %v318 = vld [vmem:[#allocation5 + $0x8] sm:$0xf]
    %v319 = vld [vmem:[#allocation5 + $0xc] sm:$0xf]
    %v320 = vld [vmem:[#allocation5 + $0x10] sm:$0xf]
    %v321 = vld [vmem:[#allocation5 + $0x14] sm:$0xf]
    %v322 = vld [vmem:[#allocation5 + $0x18] sm:$0xf]
    %v323 = vld [vmem:[#allocation5 + $0x1c] sm:$0xf]
    %v324 = vld [vmem:[#allocation5 + $0x20] sm:$0xf]
    %v325 = vld [vmem:[#allocation5 + $0x24] sm:$0xf]
    %v326 = vld [vmem:[#allocation5 + $0x28] sm:$0xf]
    %v327 = vld [vmem:[#allocation5 + $0x2c] sm:$0xf]
    %v328 = vld [vmem:[#allocation5 + $0x30] sm:$0xf]
    %v329 = vld [vmem:[#allocation5 + $0x34] sm:$0xf]
    %v330 = vld [vmem:[#allocation5 + $0x38] sm:$0xf]
    %v331 = vld [vmem:[#allocation5 + $0x3c] sm:$0xf]
    %v332 = vld [vmem:[#allocation5 + $0x40] sm:$0xf]
    %v333 = vld [vmem:[#allocation5 + $0x44] sm:$0xf]
    %v334 = vld [vmem:[#allocation5 + $0x48] sm:$0xf]
    %v335 = vld [vmem:[#allocation5 + $0x4c] sm:$0xf]
    %v336 = vld [vmem:[#allocation5 + $0x50] sm:$0xf]
    %v337 = vld [vmem:[#allocation5 + $0x54] sm:$0xf]
    %v338 = vld [vmem:[#allocation5 + $0x58] sm:$0xf]
    %v339 = vld [vmem:[#allocation5 + $0x5c] sm:$0xf]
    %v340 = vld [vmem:[#allocation5 + $0x60] sm:$0xf]
    %v341 = vld [vmem:[#allocation5 + $0x64] sm:$0xf]
    %v342 = vld [vmem:[#allocation5 + $0x68] sm:$0xf]
    %v343 = vld [vmem:[#allocation5 + $0x6c] sm:$0xf]
    %v344 = vld [vmem:[#allocation5 + $0x70] sm:$0xf]
    %v345 = vld [vmem:[#allocation5 + $0x74] sm:$0xf]
    %v346 = vld [vmem:[#allocation5 + $0x78] sm:$0xf]
    %v347 = vld [vmem:[#allocation5 + $0x7c] sm:$0xf]
    %v348 = vld [vmem:[#allocation5 + $0x80] sm:$0xf]
    %v349 = vld [vmem:[#allocation5 + $0x84] sm:$0xf]
    %v350 = vld [vmem:[#allocation5 + $0x88] sm:$0xf]
    %v351 = vld [vmem:[#allocation5 + $0x8c] sm:$0xf]
    %v352 = vld [vmem:[#allocation5 + $0x90] sm:$0xf]
    %v353 = vld [vmem:[#allocation5 + $0x94] sm:$0xf]
    %v354 = vld [vmem:[#allocation5 + $0x98] sm:$0xf]
    %v355 = vld [vmem:[#allocation5 + $0x9c] sm:$0xf]
    %v356 = vld [vmem:[#allocation5 + $0xa0] sm:$0xf]
    %v357 = vld [vmem:[#allocation5 + $0xa4] sm:$0xf]
    %v358 = vld [vmem:[#allocation5 + $0xa8] sm:$0xf]
    %v359 = vld [vmem:[#allocation5 + $0xac] sm:$0xf]
    %v360 = vld [vmem:[#allocation5 + $0xb0] sm:$0xf]
    %v361 = vld [vmem:[#allocation5 + $0xb4] sm:$0xf]
    %v362 = vld [vmem:[#allocation5 + $0xb8] sm:$0xf]
    %v363 = vld [vmem:[#allocation5 + $0xbc] sm:$0xf]
    %v364 = vld [vmem:[#allocation5 + $0xc0] sm:$0xf]
    %v365 = vld [vmem:[#allocation5 + $0xc4] sm:$0xf]
    %v366 = vld [vmem:[#allocation5 + $0xc8] sm:$0xf]
    %v367 = vld [vmem:[#allocation5 + $0xcc] sm:$0xf]
    %v368 = vld [vmem:[#allocation5 + $0xd0] sm:$0xf]
    %v369 = vld [vmem:[#allocation5 + $0xd4] sm:$0xf]
    %v370 = vld [vmem:[#allocation5 + $0xd8] sm:$0xf]
    %v371 = vld [vmem:[#allocation5 + $0xdc] sm:$0xf]
    %v372 = vld [vmem:[#allocation5 + $0xe0] sm:$0xf]
    %v373 = vld [vmem:[#allocation5 + $0xe4] sm:$0xf]
    %v374 = vld [vmem:[#allocation5 + $0xe8] sm:$0xf]
    %v375 = vld [vmem:[#allocation5 + $0xec] sm:$0xf]
    %v376 = vld [vmem:[#allocation5 + $0xf0] sm:$0xf]
    %v377 = vld [vmem:[#allocation5 + $0xf4] sm:$0xf]
    %v378 = vld [vmem:[#allocation5 + $0xf8] sm:$0xf]
    %v379 = vld [vmem:[#allocation5 + $0xfc] sm:$0xf]
    %v380 = vld [vmem:[#allocation5 + $0x100] sm:$0xf]
    %v381 = vld [vmem:[#allocation5 + $0x104] sm:$0xf]
    %v382 = vld [vmem:[#allocation5 + $0x108] sm:$0xf]
    %v383 = vld [vmem:[#allocation5 + $0x10c] sm:$0xf]
    %v384 = vld [vmem:[#allocation5 + $0x110] sm:$0xf]
    %v385 = vld [vmem:[#allocation5 + $0x114] sm:$0xf]
    %v386 = vld [vmem:[#allocation5 + $0x118] sm:$0xf]
    %v387 = vld [vmem:[#allocation5 + $0x11c] sm:$0xf]
    %v388 = vld [vmem:[#allocation5 + $0x120] sm:$0xf]
    %v389 = vld [vmem:[#allocation5 + $0x124] sm:$0xf]
    %v390 = vld [vmem:[#allocation5 + $0x128] sm:$0xf]
    %v391 = vld [vmem:[#allocation5 + $0x12c] sm:$0xf]
    %v392 = vld [vmem:[#allocation5 + $0x130] sm:$0xf]
    %v393 = vld [vmem:[#allocation5 + $0x134] sm:$0xf]
    %v394 = vld [vmem:[#allocation5 + $0x138] sm:$0xf]
    %v395 = vld [vmem:[#allocation5 + $0x13c] sm:$0xf]
    %v396 = vld [vmem:[#allocation5 + $0x140] sm:$0xf]
    %v397 = vld [vmem:[#allocation5 + $0x144] sm:$0xf]
    %v398 = vld [vmem:[#allocation5 + $0x148] sm:$0xf]
    %v399 = vld [vmem:[#allocation5 + $0x14c] sm:$0xf]
    %v400 = vld [vmem:[#allocation5 + $0x150] sm:$0xf]
    %v401 = vld [vmem:[#allocation5 + $0x154] sm:$0xf]
    %v402 = vld [vmem:[#allocation5 + $0x158] sm:$0xf]
    %v403 = vld [vmem:[#allocation5 + $0x15c] sm:$0xf]
    %v404 = vld [vmem:[#allocation5 + $0x160] sm:$0xf]
    %v405 = vld [vmem:[#allocation5 + $0x164] sm:$0xf]
    %v406 = vld [vmem:[#allocation5 + $0x168] sm:$0xf]
    %v407 = vld [vmem:[#allocation5 + $0x16c] sm:$0xf]
    %v408 = vld [vmem:[#allocation5 + $0x170] sm:$0xf]
    %v409 = vld [vmem:[#allocation5 + $0x174] sm:$0xf]
    %v410 = vld [vmem:[#allocation5 + $0x178] sm:$0xf]
    %v411 = vld [vmem:[#allocation5 + $0x17c] sm:$0xf]
    %v412 = vld [vmem:[#allocation5 + $0x180] sm:$0xf]
    %v413 = vld [vmem:[#allocation5 + $0x184] sm:$0xf]
    %v414 = vld [vmem:[#allocation5 + $0x188] sm:$0xf]
    %v415 = vld [vmem:[#allocation5 + $0x18c] sm:$0xf]
    %v416 = vld [vmem:[#allocation5 + $0x190] sm:$0xf]
    %v417 = vld [vmem:[#allocation5 + $0x194] sm:$0xf]
    %v418 = vld [vmem:[#allocation5 + $0x198] sm:$0xf]
    %v419 = vld [vmem:[#allocation5 + $0x19c] sm:$0xf]
    %v420 = vld [vmem:[#allocation5 + $0x1a0] sm:$0xf]
    %v421 = vld [vmem:[#allocation5 + $0x1a4] sm:$0xf]
    %v422 = vld [vmem:[#allocation5 + $0x1a8] sm:$0xf]
    %v423 = vld [vmem:[#allocation5 + $0x1ac] sm:$0xf]
    %v424 = vld [vmem:[#allocation5 + $0x1b0] sm:$0xf]
    %v425 = vld [vmem:[#allocation5 + $0x1b4] sm:$0xf]
    %v426 = vld [vmem:[#allocation5 + $0x1b8] sm:$0xf]
    %v427 = vld [vmem:[#allocation5 + $0x1bc] sm:$0xf]
    %v428 = vld [vmem:[#allocation5 + $0x1c0] sm:$0xf]
    %v429 = vld [vmem:[#allocation5 + $0x1c4] sm:$0xf]
    %v430 = vld [vmem:[#allocation5 + $0x1c8] sm:$0xf]
    %v431 = vld [vmem:[#allocation5 + $0x1cc] sm:$0xf]
    %v432 = vld [vmem:[#allocation5 + $0x1d0] sm:$0xf]
    %v433 = vld [vmem:[#allocation5 + $0x1d4] sm:$0xf]
    %v434 = vld [vmem:[#allocation5 + $0x1d8] sm:$0xf]
    %v435 = vld [vmem:[#allocation5 + $0x1dc] sm:$0xf]
    %v436 = vld [vmem:[#allocation5 + $0x1e0] sm:$0xf]
    %v437 = vld [vmem:[#allocation5 + $0x1e4] sm:$0xf]
    %v438 = vld [vmem:[#allocation5 + $0x1e8] sm:$0xf]
    %v439 = vld [vmem:[#allocation5 + $0x1ec] sm:$0xf]
    %v440 = vld [vmem:[#allocation5 + $0x1f0] sm:$0xf]
    %v441 = vld [vmem:[#allocation5 + $0x1f4] sm:$0xf]
    %v442 = vld [vmem:[#allocation5 + $0x1f8] sm:$0xf]
    %v443 = vld [vmem:[#allocation5 + $0x1fc] sm:$0xf]
    %v444 = vld [vmem:[#allocation7] sm:$0x1]
    %v446 = vlaneseq
    %v447 = vshrl.u32 %v446, 7
    %v448 = vsub.s32 0, %v447
    %v449 = vrot.slane %v444, %v448
    %v459 = vunpack.c.l.b16 %v308
    %v460 = vunpack.c.h.b16 %v308
    %v461 = vunpack.c.l.b16 %v309
    %v462 = vunpack.c.h.b16 %v309
    %v463 = vunpack.c.l.b16 %v310
    %v464 = vunpack.c.h.b16 %v310
    %v465 = vunpack.c.l.b16 %v311
    %v466 = vunpack.c.h.b16 %v311
    %v467 = vunpack.c.l.b16 %v312
    %v468 = vunpack.c.h.b16 %v312
    %v469 = vunpack.c.l.b16 %v313
    %v470 = vunpack.c.h.b16 %v313
    %v471 = vunpack.c.l.b16 %v314
    %v472 = vunpack.c.h.b16 %v314
    %v473 = vunpack.c.l.b16 %v315
    %v474 = vunpack.c.h.b16 %v315
    %v475 = vpack.c.b16 %v467, %v459
    %v476 = vpack.c.b16 %v468, %v460
    %v477 = vpack.c.b16 %v469, %v461
    %v478 = vpack.c.b16 %v470, %v462
    %v479 = vpack.c.b16 %v471, %v463
    %v480 = vpack.c.b16 %v472, %v464
    %v481 = vpack.c.b16 %v473, %v465
    %v482 = vpack.c.b16 %v474, %v466
    %v619 = vunpack.c.l.b16 %v316
    %v620 = vunpack.c.l.b16 %v317
    %v621 = vunpack.c.l.b16 %v318
    %v622 = vunpack.c.l.b16 %v319
    %v623 = vunpack.c.l.b16 %v320
    %v624 = vunpack.c.l.b16 %v321
    %v625 = vunpack.c.l.b16 %v322
    %v626 = vunpack.c.l.b16 %v323
    %v627 = vunpack.c.l.b16 %v324
    %v628 = vunpack.c.l.b16 %v325
    %v629 = vunpack.c.l.b16 %v326
    %v630 = vunpack.c.l.b16 %v327
    %v631 = vunpack.c.l.b16 %v328
    %v632 = vunpack.c.l.b16 %v329
    %v633 = vunpack.c.l.b16 %v330
    %v634 = vunpack.c.l.b16 %v331
    %v635 = vunpack.c.l.b16 %v332
    %v636 = vunpack.c.l.b16 %v333
    %v637 = vunpack.c.l.b16 %v334
    %v638 = vunpack.c.l.b16 %v335
    %v639 = vunpack.c.l.b16 %v336
    %v640 = vunpack.c.l.b16 %v337
    %v641 = vunpack.c.l.b16 %v338
    %v642 = vunpack.c.l.b16 %v339
    %v643 = vunpack.c.l.b16 %v340
    %v644 = vunpack.c.l.b16 %v341
    %v645 = vunpack.c.l.b16 %v342
    %v646 = vunpack.c.l.b16 %v343
    %v647 = vunpack.c.l.b16 %v344
    %v648 = vunpack.c.l.b16 %v345
    %v649 = vunpack.c.l.b16 %v346
    %v650 = vunpack.c.l.b16 %v347
    %v651 = vunpack.c.l.b16 %v348
    %v652 = vunpack.c.l.b16 %v349
    %v653 = vunpack.c.l.b16 %v350
    %v654 = vunpack.c.l.b16 %v351
    %v655 = vunpack.c.l.b16 %v352
    %v656 = vunpack.c.l.b16 %v353
    %v657 = vunpack.c.l.b16 %v354
    %v658 = vunpack.c.l.b16 %v355
    %v659 = vunpack.c.l.b16 %v356
    %v660 = vunpack.c.l.b16 %v357
    %v661 = vunpack.c.l.b16 %v358
    %v662 = vunpack.c.l.b16 %v359
    %v663 = vunpack.c.l.b16 %v360
    %v664 = vunpack.c.l.b16 %v361
    %v665 = vunpack.c.l.b16 %v362
    %v666 = vunpack.c.l.b16 %v363
    %v667 = vunpack.c.l.b16 %v364
    %v668 = vunpack.c.l.b16 %v365
    %v669 = vunpack.c.l.b16 %v366
    %v670 = vunpack.c.l.b16 %v367
    %v671 = vunpack.c.l.b16 %v368
    %v672 = vunpack.c.l.b16 %v369
    %v673 = vunpack.c.l.b16 %v370
    %v674 = vunpack.c.l.b16 %v371
    %v675 = vunpack.c.l.b16 %v372
    %v676 = vunpack.c.l.b16 %v373
    %v677 = vunpack.c.l.b16 %v374
    %v678 = vunpack.c.l.b16 %v375
    %v679 = vunpack.c.l.b16 %v376
    %v680 = vunpack.c.l.b16 %v377
    %v681 = vunpack.c.l.b16 %v378
    %v682 = vunpack.c.l.b16 %v379
    %v683 = vunpack.c.l.b16 %v380
    %v684 = vunpack.c.l.b16 %v381
    %v685 = vunpack.c.l.b16 %v382
    %v686 = vunpack.c.l.b16 %v383
    %v687 = vunpack.c.l.b16 %v384
    %v688 = vunpack.c.l.b16 %v385
    %v689 = vunpack.c.l.b16 %v386
    %v690 = vunpack.c.l.b16 %v387
    %v691 = vunpack.c.l.b16 %v388
    %v692 = vunpack.c.l.b16 %v389
    %v693 = vunpack.c.l.b16 %v390
    %v694 = vunpack.c.l.b16 %v391
    %v695 = vunpack.c.l.b16 %v392
    %v696 = vunpack.c.l.b16 %v393
    %v697 = vunpack.c.l.b16 %v394
    %v698 = vunpack.c.l.b16 %v395
    %v699 = vunpack.c.l.b16 %v396
    %v700 = vunpack.c.l.b16 %v397
    %v701 = vunpack.c.l.b16 %v398
    %v702 = vunpack.c.l.b16 %v399
    %v703 = vunpack.c.l.b16 %v400
    %v704 = vunpack.c.l.b16 %v401
    %v705 = vunpack.c.l.b16 %v402
    %v706 = vunpack.c.l.b16 %v403
    %v707 = vunpack.c.l.b16 %v404
    %v708 = vunpack.c.l.b16 %v405
    %v709 = vunpack.c.l.b16 %v406
    %v710 = vunpack.c.l.b16 %v407
    %v711 = vunpack.c.l.b16 %v408
    %v712 = vunpack.c.l.b16 %v409
    %v713 = vunpack.c.l.b16 %v410
    %v714 = vunpack.c.l.b16 %v411
    %v715 = vunpack.c.l.b16 %v412
    %v716 = vunpack.c.l.b16 %v413
    %v717 = vunpack.c.l.b16 %v414
    %v718 = vunpack.c.l.b16 %v415
    %v719 = vunpack.c.l.b16 %v416
    %v720 = vunpack.c.l.b16 %v417
    %v721 = vunpack.c.l.b16 %v418
    %v722 = vunpack.c.l.b16 %v419
    %v723 = vunpack.c.l.b16 %v420
    %v724 = vunpack.c.l.b16 %v421
    %v725 = vunpack.c.l.b16 %v422
    %v726 = vunpack.c.l.b16 %v423
    %v727 = vunpack.c.l.b16 %v424
    %v728 = vunpack.c.l.b16 %v425
    %v729 = vunpack.c.l.b16 %v426
    %v730 = vunpack.c.l.b16 %v427
    %v731 = vunpack.c.l.b16 %v428
    %v732 = vunpack.c.l.b16 %v429
    %v733 = vunpack.c.l.b16 %v430
    %v734 = vunpack.c.l.b16 %v431
    %v735 = vunpack.c.l.b16 %v432
    %v736 = vunpack.c.l.b16 %v433
    %v737 = vunpack.c.l.b16 %v434
    %v738 = vunpack.c.l.b16 %v435
    %v739 = vunpack.c.l.b16 %v436
    %v740 = vunpack.c.l.b16 %v437
    %v741 = vunpack.c.l.b16 %v438
    %v742 = vunpack.c.l.b16 %v439
    %v743 = vunpack.c.l.b16 %v440
    %v744 = vunpack.c.l.b16 %v441
    %v745 = vunpack.c.l.b16 %v442
    %v746 = vunpack.c.l.b16 %v443
    %v747 = vpack.c.b16 %v620, %v619
    %v748 = vpack.c.b16 %v622, %v621
    %v749 = vpack.c.b16 %v624, %v623
    %v750 = vpack.c.b16 %v626, %v625
    %v751 = vpack.c.b16 %v628, %v627
    %v752 = vpack.c.b16 %v630, %v629
    %v753 = vpack.c.b16 %v632, %v631
    %v754 = vpack.c.b16 %v634, %v633
    %v755 = vpack.c.b16 %v636, %v635
    %v756 = vpack.c.b16 %v638, %v637
    %v757 = vpack.c.b16 %v640, %v639
    %v758 = vpack.c.b16 %v642, %v641
    %v759 = vpack.c.b16 %v644, %v643
    %v760 = vpack.c.b16 %v646, %v645
    %v761 = vpack.c.b16 %v648, %v647
    %v762 = vpack.c.b16 %v650, %v649
    %v763 = vpack.c.b16 %v652, %v651
    %v764 = vpack.c.b16 %v654, %v653
    %v765 = vpack.c.b16 %v656, %v655
    %v766 = vpack.c.b16 %v658, %v657
    %v767 = vpack.c.b16 %v660, %v659
    %v768 = vpack.c.b16 %v662, %v661
    %v769 = vpack.c.b16 %v664, %v663
    %v770 = vpack.c.b16 %v666, %v665
    %v771 = vpack.c.b16 %v668, %v667
    %v772 = vpack.c.b16 %v670, %v669
    %v773 = vpack.c.b16 %v672, %v671
    %v774 = vpack.c.b16 %v674, %v673
    %v775 = vpack.c.b16 %v676, %v675
    %v776 = vpack.c.b16 %v678, %v677
    %v777 = vpack.c.b16 %v680, %v679
    %v778 = vpack.c.b16 %v682, %v681
    %v779 = vpack.c.b16 %v684, %v683
    %v780 = vpack.c.b16 %v686, %v685
    %v781 = vpack.c.b16 %v688, %v687
    %v782 = vpack.c.b16 %v690, %v689
    %v783 = vpack.c.b16 %v692, %v691
    %v784 = vpack.c.b16 %v694, %v693
    %v785 = vpack.c.b16 %v696, %v695
    %v786 = vpack.c.b16 %v698, %v697
    %v787 = vpack.c.b16 %v700, %v699
    %v788 = vpack.c.b16 %v702, %v701
    %v789 = vpack.c.b16 %v704, %v703
    %v790 = vpack.c.b16 %v706, %v705
    %v791 = vpack.c.b16 %v708, %v707
    %v792 = vpack.c.b16 %v710, %v709
    %v793 = vpack.c.b16 %v712, %v711
    %v794 = vpack.c.b16 %v714, %v713
    %v795 = vpack.c.b16 %v716, %v715
    %v796 = vpack.c.b16 %v718, %v717
    %v797 = vpack.c.b16 %v720, %v719
    %v798 = vpack.c.b16 %v722, %v721
    %v799 = vpack.c.b16 %v724, %v723
    %v800 = vpack.c.b16 %v726, %v725
    %v801 = vpack.c.b16 %v728, %v727
    %v802 = vpack.c.b16 %v730, %v729
    %v803 = vpack.c.b16 %v732, %v731
    %v804 = vpack.c.b16 %v734, %v733
    %v805 = vpack.c.b16 %v736, %v735
    %v806 = vpack.c.b16 %v738, %v737
    %v807 = vpack.c.b16 %v740, %v739
    %v808 = vpack.c.b16 %v742, %v741
    %v809 = vpack.c.b16 %v744, %v743
    %v810 = vpack.c.b16 %v746, %v745
    %875 = vmatprep.subr.bf16.mxu0 0
    %876 = vmatpush1.bf16.msra.mxu0 %v747
    %877 = vmatprep.subr.bf16.mxu0 0
    %878 = vmatpush1.bf16.msra.mxu0 %v748
    %879 = vmatprep.subr.bf16.mxu0 0
    %880 = vmatpush1.bf16.msra.mxu0 %v749
    %881 = vmatprep.subr.bf16.mxu0 0
    %882 = vmatpush1.bf16.msra.mxu0 %v750
    %883 = vmatprep.subr.bf16.mxu0 0
    %884 = vmatpush1.bf16.msra.mxu0 %v751
    %885 = vmatprep.subr.bf16.mxu0 0
    %886 = vmatpush1.bf16.msra.mxu0 %v752
    %887 = vmatprep.subr.bf16.mxu0 0
    %888 = vmatpush1.bf16.msra.mxu0 %v753
    %889 = vmatprep.subr.bf16.mxu0 0
    %890 = vmatpush1.bf16.msra.mxu0 %v754
    %891 = vmatprep.subr.bf16.mxu0 0
    %892 = vmatpush1.bf16.msra.mxu0 %v755
    %893 = vmatprep.subr.bf16.mxu0 0
    %894 = vmatpush1.bf16.msra.mxu0 %v756
    %895 = vmatprep.subr.bf16.mxu0 0
    %896 = vmatpush1.bf16.msra.mxu0 %v757
    %897 = vmatprep.subr.bf16.mxu0 0
    %898 = vmatpush1.bf16.msra.mxu0 %v758
    %899 = vmatprep.subr.bf16.mxu0 0
    %900 = vmatpush1.bf16.msra.mxu0 %v759
    %901 = vmatprep.subr.bf16.mxu0 0
    %902 = vmatpush1.bf16.msra.mxu0 %v760
    %903 = vmatprep.subr.bf16.mxu0 0
    %904 = vmatpush1.bf16.msra.mxu0 %v761
    %905 = vmatprep.subr.bf16.mxu0 0
    %906 = vmatpush1.bf16.msra.mxu0 %v762
    %907 = vmatprep.mubr.bf16.mxu0 %v476
    %908 = vmatmul.mubr.bf16.gmra.mrb[0].mxu0 %v475
    %v909 = vpop.f32.mrb[0].mxu0
    %v910 = vadd.f32 %v449, %v909
    %v911 = vpop.f32.mrb[0].mxu0
    %v912 = vpop.f32.mrb[0].mxu0
    %v913 = vadd.f32 %v449, %v912
    %v914 = vpop.f32.mrb[0].mxu0
    %915 = vdwg.mxu0
    %916 = vmatprep.subr.bf16.mxu0 0
    %917 = vmatpush1.bf16.msra.mxu0 %v763
    %918 = vmatprep.subr.bf16.mxu0 0
    %919 = vmatpush1.bf16.msra.mxu0 %v764
    %920 = vmatprep.subr.bf16.mxu0 0
    %921 = vmatpush1.bf16.msra.mxu0 %v765
    %922 = vmatprep.subr.bf16.mxu0 0
    %923 = vmatpush1.bf16.msra.mxu0 %v766
    %924 = vmatprep.subr.bf16.mxu0 0
    %925 = vmatpush1.bf16.msra.mxu0 %v767
    %926 = vmatprep.subr.bf16.mxu0 0
    %927 = vmatpush1.bf16.msra.mxu0 %v768
    %928 = vmatprep.subr.bf16.mxu0 0
    %929 = vmatpush1.bf16.msra.mxu0 %v769
    %930 = vmatprep.subr.bf16.mxu0 0
    %931 = vmatpush1.bf16.msra.mxu0 %v770
    %932 = vmatprep.subr.bf16.mxu0 0
    %933 = vmatpush1.bf16.msra.mxu0 %v771
    %934 = vmatprep.subr.bf16.mxu0 0
    %935 = vmatpush1.bf16.msra.mxu0 %v772
    %936 = vmatprep.subr.bf16.mxu0 0
    %937 = vmatpush1.bf16.msra.mxu0 %v773
    %938 = vmatprep.subr.bf16.mxu0 0
    %939 = vmatpush1.bf16.msra.mxu0 %v774
    %940 = vmatprep.subr.bf16.mxu0 0
    %941 = vmatpush1.bf16.msra.mxu0 %v775
    %942 = vmatprep.subr.bf16.mxu0 0
    %943 = vmatpush1.bf16.msra.mxu0 %v776
    %944 = vmatprep.subr.bf16.mxu0 0
    %945 = vmatpush1.bf16.msra.mxu0 %v777
    %946 = vmatprep.subr.bf16.mxu0 0
    %947 = vmatpush1.bf16.msra.mxu0 %v778
    %948 = vmatprep.mubr.bf16.mxu0 %v478
    %949 = vmatmul.mubr.bf16.gmra.mrb[0].mxu0 %v477
    %v950 = vpop.f32.mrb[0].mxu0
    %v951 = vadd.f32 %v910, %v950
    %v952 = vpop.f32.mrb[0].mxu0
    %v953 = vpop.f32.mrb[0].mxu0
    %v954 = vadd.f32 %v913, %v953
    %v955 = vpop.f32.mrb[0].mxu0
    %956 = vdwg.mxu0
    %957 = vmatprep.subr.bf16.mxu0 0
    %958 = vmatpush1.bf16.msra.mxu0 %v779
    %959 = vmatprep.subr.bf16.mxu0 0
    %960 = vmatpush1.bf16.msra.mxu0 %v780
    %961 = vmatprep.subr.bf16.mxu0 0
    %962 = vmatpush1.bf16.msra.mxu0 %v781
    %963 = vmatprep.subr.bf16.mxu0 0
    %964 = vmatpush1.bf16.msra.mxu0 %v782
    %965 = vmatprep.subr.bf16.mxu0 0
    %966 = vmatpush1.bf16.msra.mxu0 %v783
    %967 = vmatprep.subr.bf16.mxu0 0
    %968 = vmatpush1.bf16.msra.mxu0 %v784
    %969 = vmatprep.subr.bf16.mxu0 0
    %970 = vmatpush1.bf16.msra.mxu0 %v785
    %971 = vmatprep.subr.bf16.mxu0 0
    %972 = vmatpush1.bf16.msra.mxu0 %v786
    %973 = vmatprep.subr.bf16.mxu0 0
    %974 = vmatpush1.bf16.msra.mxu0 %v787
    %975 = vmatprep.subr.bf16.mxu0 0
    %976 = vmatpush1.bf16.msra.mxu0 %v788
    %977 = vmatprep.subr.bf16.mxu0 0
    %978 = vmatpush1.bf16.msra.mxu0 %v789
    %979 = vmatprep.subr.bf16.mxu0 0
    %980 = vmatpush1.bf16.msra.mxu0 %v790
    %981 = vmatprep.subr.bf16.mxu0 0
    %982 = vmatpush1.bf16.msra.mxu0 %v791
    %983 = vmatprep.subr.bf16.mxu0 0
    %984 = vmatpush1.bf16.msra.mxu0 %v792
    %985 = vmatprep.subr.bf16.mxu0 0
    %986 = vmatpush1.bf16.msra.mxu0 %v793
    %987 = vmatprep.subr.bf16.mxu0 0
    %988 = vmatpush1.bf16.msra.mxu0 %v794
    %989 = vmatprep.mubr.bf16.mxu0 %v480
    %990 = vmatmul.mubr.bf16.gmra.mrb[0].mxu0 %v479
    %v991 = vpop.f32.mrb[0].mxu0
    %v992 = vadd.f32 %v951, %v991
    %v993 = vpop.f32.mrb[0].mxu0
    %v994 = vpop.f32.mrb[0].mxu0
    %v995 = vadd.f32 %v954, %v994
    %v996 = vpop.f32.mrb[0].mxu0
    %997 = vdwg.mxu0
    %998 = vmatprep.subr.bf16.mxu0 0
    %999 = vmatpush1.bf16.msra.mxu0 %v795
    %1000 = vmatprep.subr.bf16.mxu0 0
    %1001 = vmatpush1.bf16.msra.mxu0 %v796
    %1002 = vmatprep.subr.bf16.mxu0 0
    %1003 = vmatpush1.bf16.msra.mxu0 %v797
    %1004 = vmatprep.subr.bf16.mxu0 0
    %1005 = vmatpush1.bf16.msra.mxu0 %v798
    %1006 = vmatprep.subr.bf16.mxu0 0
    %1007 = vmatpush1.bf16.msra.mxu0 %v799
    %1008 = vmatprep.subr.bf16.mxu0 0
    %1009 = vmatpush1.bf16.msra.mxu0 %v800
    %1010 = vmatprep.subr.bf16.mxu0 0
    %1011 = vmatpush1.bf16.msra.mxu0 %v801
    %1012 = vmatprep.subr.bf16.mxu0 0
    %1013 = vmatpush1.bf16.msra.mxu0 %v802
    %1014 = vmatprep.subr.bf16.mxu0 0
    %1015 = vmatpush1.bf16.msra.mxu0 %v803
    %1016 = vmatprep.subr.bf16.mxu0 0
    %1017 = vmatpush1.bf16.msra.mxu0 %v804
    %1018 = vmatprep.subr.bf16.mxu0 0
    %1019 = vmatpush1.bf16.msra.mxu0 %v805
    %1020 = vmatprep.subr.bf16.mxu0 0
    %1021 = vmatpush1.bf16.msra.mxu0 %v806
    %1022 = vmatprep.subr.bf16.mxu0 0
    %1023 = vmatpush1.bf16.msra.mxu0 %v807
    %1024 = vmatprep.subr.bf16.mxu0 0
    %1025 = vmatpush1.bf16.msra.mxu0 %v808
    %1026 = vmatprep.subr.bf16.mxu0 0
    %1027 = vmatpush1.bf16.msra.mxu0 %v809
    %1028 = vmatprep.subr.bf16.mxu0 0
    %1029 = vmatpush1.bf16.msra.mxu0 %v810
    %1030 = vmatprep.mubr.bf16.mxu0 %v482
    %1031 = vmatmul.mubr.bf16.gmra.mrb[0].mxu0 %v481
    %v1032 = vpop.f32.mrb[0].mxu0
    %v1033 = vadd.f32 %v992, %v1032
    %v1034 = vpop.f32.mrb[0].mxu0
    %v1035 = vpop.f32.mrb[0].mxu0
    %v1036 = vadd.f32 %v995, %v1035
    %v1037 = vpop.f32.mrb[0].mxu0
    %1038 = vdwg.mxu0
    %v1039 = vmax.f32 %v1033, 0.0
    %v1040 = vmax.f32 %v1036, 0.0
    %v1041 = vld [vmem:[#allocation8] sm:$0xf]
    %v1042 = vld [vmem:[#allocation8 + $0x4] sm:$0xf]
    %v1043 = vld [vmem:[#allocation8 + $0x8] sm:$0xf]
    %v1044 = vld [vmem:[#allocation8 + $0xc] sm:$0xf]
    %v1045 = vld [vmem:[#allocation8 + $0x10] sm:$0xf]
    %v1046 = vld [vmem:[#allocation8 + $0x14] sm:$0xf]
    %v1047 = vld [vmem:[#allocation8 + $0x18] sm:$0xf]
    %v1048 = vld [vmem:[#allocation8 + $0x1c] sm:$0xf]
    %v1049 = vld [vmem:[#allocation8 + $0x20] sm:$0xf]
    %v1050 = vld [vmem:[#allocation8 + $0x24] sm:$0xf]
    %v1051 = vld [vmem:[#allocation8 + $0x28] sm:$0xf]
    %v1052 = vld [vmem:[#allocation8 + $0x2c] sm:$0xf]
    %v1053 = vld [vmem:[#allocation8 + $0x30] sm:$0xf]
    %v1054 = vld [vmem:[#allocation8 + $0x34] sm:$0xf]
    %v1055 = vld [vmem:[#allocation8 + $0x38] sm:$0xf]
    %v1056 = vld [vmem:[#allocation8 + $0x3c] sm:$0xf]
    %v1057 = vpack.c.bf16 %v1040, %v1039
    %v1058 = vld [vmem:[#allocation10] sm:$0x1]
    %v1060 = vlaneseq
    %v1061 = vshrl.u32 %v1060, 7
    %v1062 = vsub.s32 0, %v1061
    %v1063 = vrot.slane %v1058, %v1062
    %v1081 = vunpack.c.l.b16 %v1041
    %v1082 = vunpack.c.l.b16 %v1042
    %v1083 = vunpack.c.l.b16 %v1043
    %v1084 = vunpack.c.l.b16 %v1044
    %v1085 = vunpack.c.l.b16 %v1045
    %v1086 = vunpack.c.l.b16 %v1046
    %v1087 = vunpack.c.l.b16 %v1047
    %v1088 = vunpack.c.l.b16 %v1048
    %v1089 = vunpack.c.l.b16 %v1049
    %v1090 = vunpack.c.l.b16 %v1050
    %v1091 = vunpack.c.l.b16 %v1051
    %v1092 = vunpack.c.l.b16 %v1052
    %v1093 = vunpack.c.l.b16 %v1053
    %v1094 = vunpack.c.l.b16 %v1054
    %v1095 = vunpack.c.l.b16 %v1055
    %v1096 = vunpack.c.l.b16 %v1056
    %v1097 = vpack.c.b16 %v1082, %v1081
    %v1098 = vpack.c.b16 %v1084, %v1083
    %v1099 = vpack.c.b16 %v1086, %v1085
    %v1100 = vpack.c.b16 %v1088, %v1087
    %v1101 = vpack.c.b16 %v1090, %v1089
    %v1102 = vpack.c.b16 %v1092, %v1091
    %v1103 = vpack.c.b16 %v1094, %v1093
    %v1104 = vpack.c.b16 %v1096, %v1095
    %1113 = vmatprep.subr.bf16.mxu0 0
    %1114 = vmatpush1.bf16.msra.mxu0 %v1097
    %1115 = vmatprep.subr.bf16.mxu0 0
    %1116 = vmatpush1.bf16.msra.mxu0 %v1098
    %1117 = vmatprep.subr.bf16.mxu0 0
    %1118 = vmatpush1.bf16.msra.mxu0 %v1099
    %1119 = vmatprep.subr.bf16.mxu0 0
    %1120 = vmatpush1.bf16.msra.mxu0 %v1100
    %1121 = vmatprep.subr.bf16.mxu0 0
    %1122 = vmatpush1.bf16.msra.mxu0 %v1101
    %1123 = vmatprep.subr.bf16.mxu0 0
    %1124 = vmatpush1.bf16.msra.mxu0 %v1102
    %1125 = vmatprep.subr.bf16.mxu0 0
    %1126 = vmatpush1.bf16.msra.mxu0 %v1103
    %1127 = vmatprep.subr.bf16.mxu0 0
    %1128 = vmatpush1.bf16.msra.mxu0 %v1104
    %1129 = vmatprep.subr.bf16.mxu0 0
    %1130 = vmatpush1.bf16.msra.mxu0 0
    %1131 = vmatprep.subr.bf16.mxu0 0
    %1132 = vmatpush1.bf16.msra.mxu0 0
    %1133 = vmatprep.subr.bf16.mxu0 0
    %1134 = vmatpush1.bf16.msra.mxu0 0
    %1135 = vmatprep.subr.bf16.mxu0 0
    %1136 = vmatpush1.bf16.msra.mxu0 0
    %1137 = vmatprep.subr.bf16.mxu0 0
    %1138 = vmatpush1.bf16.msra.mxu0 0
    %1139 = vmatprep.subr.bf16.mxu0 0
    %1140 = vmatpush1.bf16.msra.mxu0 0
    %1141 = vmatprep.subr.bf16.mxu0 0
    %1142 = vmatpush1.bf16.msra.mxu0 0
    %1143 = vmatprep.subr.bf16.mxu0 0
    %1144 = vmatpush1.bf16.msra.mxu0 0
    %1145 = vmatprep.mubr.bf16.mxu0 0
    %1146 = vmatmul.mubr.bf16.gmra.mrb[0].mxu0 %v1057
    %v1147 = vpop.f32.mrb[0].mxu0
    %v1148 = vadd.f32 %v1063, %v1147
    %v1149 = vpop.f32.mrb[0].mxu0
    %v1150 = vpop.f32.mrb[0].mxu0
    %v1151 = vadd.f32 %v1063, %v1150
    %v1152 = vpop.f32.mrb[0].mxu0
    %1153 = vdwg.mxu0
    %v1154 = vmax.f32 %v1148, 0.0
    %v1155 = vmax.f32 %v1151, 0.0
    %v1156 = vld [vmem:[#allocation11] sm:$0xf]
    %v1157 = vld [vmem:[#allocation11 + $0x4] sm:$0xf]
    %v1158 = vld [vmem:[#allocation11 + $0x8] sm:$0xf]
    %v1159 = vld [vmem:[#allocation11 + $0xc] sm:$0xf]
    %v1160 = vld [vmem:[#allocation11 + $0x10] sm:$0xf]
    %v1161 = vld [vmem:[#allocation11 + $0x14] sm:$0xf]
    %v1162 = vld [vmem:[#allocation11 + $0x18] sm:$0xf]
    %v1163 = vld [vmem:[#allocation11 + $0x1c] sm:$0xf]
    %v1164 = vld [vmem:[#allocation11 + $0x20] sm:$0xf]
    %v1165 = vld [vmem:[#allocation11 + $0x24] sm:$0xf]
    %v1166 = vld [vmem:[#allocation11 + $0x28] sm:$0xf]
    %v1167 = vld [vmem:[#allocation11 + $0x2c] sm:$0xf]
    %v1168 = vld [vmem:[#allocation11 + $0x30] sm:$0xf]
    %v1169 = vld [vmem:[#allocation11 + $0x34] sm:$0xf]
    %v1170 = vld [vmem:[#allocation11 + $0x38] sm:$0xf]
    %v1171 = vld [vmem:[#allocation11 + $0x3c] sm:$0xf]
    %v1172 = vpack.c.bf16 %v1155, %v1154
    %v1173 = vld [vmem:[#allocation13] sm:$0x1]
    %v1175 = vlaneseq
    %v1176 = vshrl.u32 %v1175, 7
    %v1177 = vsub.s32 0, %v1176
    %v1178 = vrot.slane %v1173, %v1177
    %v1196 = vunpack.c.l.b16 %v1156
    %v1197 = vunpack.c.l.b16 %v1157
    %v1198 = vunpack.c.l.b16 %v1158
    %v1199 = vunpack.c.l.b16 %v1159
    %v1200 = vunpack.c.l.b16 %v1160
    %v1201 = vunpack.c.l.b16 %v1161
    %v1202 = vunpack.c.l.b16 %v1162
    %v1203 = vunpack.c.l.b16 %v1163
    %v1204 = vunpack.c.l.b16 %v1164
    %v1205 = vunpack.c.l.b16 %v1165
    %v1206 = vunpack.c.l.b16 %v1166
    %v1207 = vunpack.c.l.b16 %v1167
    %v1208 = vunpack.c.l.b16 %v1168
    %v1209 = vunpack.c.l.b16 %v1169
    %v1210 = vunpack.c.l.b16 %v1170
    %v1211 = vunpack.c.l.b16 %v1171
    %v1212 = vpack.c.b16 %v1197, %v1196
    %v1213 = vpack.c.b16 %v1199, %v1198
    %v1214 = vpack.c.b16 %v1201, %v1200
    %v1215 = vpack.c.b16 %v1203, %v1202
    %v1216 = vpack.c.b16 %v1205, %v1204
    %v1217 = vpack.c.b16 %v1207, %v1206
    %v1218 = vpack.c.b16 %v1209, %v1208
    %v1219 = vpack.c.b16 %v1211, %v1210
    %1228 = vmatprep.subr.bf16.mxu0 0
    %1229 = vmatpush1.bf16.msra.mxu0 %v1212
    %1230 = vmatprep.subr.bf16.mxu0 0
    %1231 = vmatpush1.bf16.msra.mxu0 %v1213
    %1232 = vmatprep.subr.bf16.mxu0 0
    %1233 = vmatpush1.bf16.msra.mxu0 %v1214
    %1234 = vmatprep.subr.bf16.mxu0 0
    %1235 = vmatpush1.bf16.msra.mxu0 %v1215
    %1236 = vmatprep.subr.bf16.mxu0 0
    %1237 = vmatpush1.bf16.msra.mxu0 %v1216
    %1238 = vmatprep.subr.bf16.mxu0 0
    %1239 = vmatpush1.bf16.msra.mxu0 %v1217
    %1240 = vmatprep.subr.bf16.mxu0 0
    %1241 = vmatpush1.bf16.msra.mxu0 %v1218
    %1242 = vmatprep.subr.bf16.mxu0 0
    %1243 = vmatpush1.bf16.msra.mxu0 %v1219
    %1244 = vmatprep.subr.bf16.mxu0 0
    %1245 = vmatpush1.bf16.msra.mxu0 0
    %1246 = vmatprep.subr.bf16.mxu0 0
    %1247 = vmatpush1.bf16.msra.mxu0 0
    %1248 = vmatprep.subr.bf16.mxu0 0
    %1249 = vmatpush1.bf16.msra.mxu0 0
    %1250 = vmatprep.subr.bf16.mxu0 0
    %1251 = vmatpush1.bf16.msra.mxu0 0
    %1252 = vmatprep.subr.bf16.mxu0 0
    %1253 = vmatpush1.bf16.msra.mxu0 0
    %1254 = vmatprep.subr.bf16.mxu0 0
    %1255 = vmatpush1.bf16.msra.mxu0 0
    %1256 = vmatprep.subr.bf16.mxu0 0
    %1257 = vmatpush1.bf16.msra.mxu0 0
    %1258 = vmatprep.subr.bf16.mxu0 0
    %1259 = vmatpush1.bf16.msra.mxu0 0
    %1260 = vmatprep.mubr.bf16.mxu0 0
    %1261 = vmatmul.mubr.bf16.gmra.mrb[0].mxu0 %v1172
    %v1262 = vpop.f32.mrb[0].mxu0
    %v1263 = vadd.f32 %v1178, %v1262
    %v1264 = vpop.f32.mrb[0].mxu0
    %v1265 = vpop.f32.mrb[0].mxu0
    %v1266 = vadd.f32 %v1178, %v1265
    %v1267 = vpop.f32.mrb[0].mxu0
    %1268 = vdwg.mxu0
    %v1269 = vadd.f32 %v1154, %v1263
    %v1270 = vadd.f32 %v1155, %v1266
    %v1271 = vld [vmem:[#allocation14] sm:$0x1]
    %v1272 = vld [vmem:[#allocation16] sm:$0x1]
    %1273 = vadd.xlane.f32.xlu0 %v1269
    %v1274 = vpop.xlane.xlu0 %1273
    %1275 = vadd.xlane.f32.xlu0 %v1270
    %v1276 = vpop.xlane.xlu0 %1275
    %v1277 = vrcp.pop 128.0
    %v1278 = vmul.f32 %v1274, %v1277
    %v1279 = vmul.f32 %v1276, %v1277
    %v1280 = vsub.f32 %v1269, %v1278
    %v1281 = vsub.f32 %v1270, %v1279
    %v1282 = vmul.f32 %v1280, %v1280
    %v1283 = vmul.f32 %v1281, %v1281
    %1284 = vadd.xlane.f32.xlu0 %v1282
    %v1285 = vpop.xlane.xlu0 %1284
    %1286 = vadd.xlane.f32.xlu0 %v1283
    %v1287 = vpop.xlane.xlu0 %1286
    %v1288 = vmul.f32 %v1285, %v1277
    %v1289 = vmul.f32 %v1287, %v1277
    %v1290 = vadd.f32 %v1288, 1e-05
    %v1291 = vadd.f32 %v1289, 1e-05
    %v1292 = vrsqrt.pop %v1290
    %v1293 = vrsqrt.pop %v1291
    %v1294 = vmul.f32 %v1280, %v1292
    %v1295 = vmul.f32 %v1281, %v1293
    %v1297 = vlaneseq
    %v1298 = vshrl.u32 %v1297, 7
    %v1299 = vsub.s32 0, %v1298
    %v1300 = vrot.slane %v1271, %v1299
    %v1302 = vmul.f32 %v1294, %v1300
    %v1303 = vmul.f32 %v1295, %v1300
    %v1305 = vlaneseq
    %v1306 = vshrl.u32 %v1305, 7
    %v1307 = vsub.s32 0, %v1306
    %v1308 = vrot.slane %v1272, %v1307
    %v1310 = vadd.f32 %v1302, %v1308
    %v1311 = vadd.f32 %v1303, %v1308
    %v1312 = vld [vmem:[#allocation20] sm:$0xff]
    %v1313 = vld [vmem:[#allocation20 + $0x8] sm:$0xff]
    %v1314 = vld [vmem:[#allocation20 + $0x10] sm:$0xff]
    %v1315 = vld [vmem:[#allocation20 + $0x18] sm:$0xff]
    %v1316 = vld [vmem:[#allocation20 + $0x20] sm:$0xff]
    %v1317 = vld [vmem:[#allocation20 + $0x28] sm:$0xff]
    %v1318 = vld [vmem:[#allocation20 + $0x30] sm:$0xff]
    %v1319 = vld [vmem:[#allocation20 + $0x38] sm:$0xff]
    %v1320 = vld [vmem:[#allocation20 + $0x40] sm:$0xff]
    %v1321 = vld [vmem:[#allocation20 + $0x48] sm:$0xff]
    %v1322 = vld [vmem:[#allocation20 + $0x50] sm:$0xff]
    %v1323 = vld [vmem:[#allocation20 + $0x58] sm:$0xff]
    %v1324 = vld [vmem:[#allocation20 + $0x60] sm:$0xff]
    %v1325 = vld [vmem:[#allocation20 + $0x68] sm:$0xff]
    %v1326 = vld [vmem:[#allocation20 + $0x70] sm:$0xff]
    %v1327 = vld [vmem:[#allocation20 + $0x78] sm:$0xff]
    %v1328 = vld [vmem:[#allocation20 + $0x80] sm:$0xff]
    %v1329 = vld [vmem:[#allocation20 + $0x88] sm:$0xff]
    %v1330 = vld [vmem:[#allocation20 + $0x90] sm:$0xff]
    %v1331 = vld [vmem:[#allocation20 + $0x98] sm:$0xff]
    %v1332 = vld [vmem:[#allocation20 + $0xa0] sm:$0xff]
    %v1333 = vld [vmem:[#allocation20 + $0xa8] sm:$0xff]
    %v1334 = vld [vmem:[#allocation20 + $0xb0] sm:$0xff]
    %v1335 = vld [vmem:[#allocation20 + $0xb8] sm:$0xff]
    %v1336 = vld [vmem:[#allocation20 + $0xc0] sm:$0xff]
    %v1337 = vld [vmem:[#allocation20 + $0xc8] sm:$0xff]
    %v1338 = vld [vmem:[#allocation20 + $0xd0] sm:$0xff]
    %v1339 = vld [vmem:[#allocation20 + $0xd8] sm:$0xff]
    %v1340 = vld [vmem:[#allocation20 + $0xe0] sm:$0xff]
    %v1341 = vld [vmem:[#allocation20 + $0xe8] sm:$0xff]
    %v1342 = vld [vmem:[#allocation20 + $0xf0] sm:$0xff]
    %v1343 = vld [vmem:[#allocation20 + $0xf8] sm:$0xff]
    %v1344 = vpack.c.bf16 %v1311, %v1310
    %v1345 = vld [vmem:[#allocation22] sm:$0xf]
    %v1347 = vlaneseq
    %v1348 = vshrl.u32 %v1347, 7
    %v1349 = vsub.s32 0, %v1348
    %v1350 = vrot.slane %v1345, %v1349
    %v1351 = vlaneseq
    %v1352 = vshrl.u32 %v1351, 7
    %v1353 = vsub.s32 1, %v1352
    %v1354 = vrot.slane %v1345, %v1353
    %v1355 = vlaneseq
    %v1356 = vshrl.u32 %v1355, 7
    %v1357 = vsub.s32 2, %v1356
    %v1358 = vrot.slane %v1345, %v1357
    %v1359 = vlaneseq
    %v1360 = vshrl.u32 %v1359, 7
    %v1361 = vsub.s32 3, %v1360
    %v1362 = vrot.slane %v1345, %v1361
    %v1399 = vunpack.c.l.b16 %v1312
    %v1400 = vunpack.c.h.b16 %v1312
    %v1401 = vunpack.c.l.b16 %v1313
    %v1402 = vunpack.c.h.b16 %v1313
    %v1403 = vunpack.c.l.b16 %v1314
    %v1404 = vunpack.c.h.b16 %v1314
    %v1405 = vunpack.c.l.b16 %v1315
    %v1406 = vunpack.c.h.b16 %v1315
    %v1407 = vunpack.c.l.b16 %v1316
    %v1408 = vunpack.c.h.b16 %v1316
    %v1409 = vunpack.c.l.b16 %v1317
    %v1410 = vunpack.c.h.b16 %v1317
    %v1411 = vunpack.c.l.b16 %v1318
    %v1412 = vunpack.c.h.b16 %v1318
    %v1413 = vunpack.c.l.b16 %v1319
    %v1414 = vunpack.c.h.b16 %v1319
    %v1415 = vunpack.c.l.b16 %v1320
    %v1416 = vunpack.c.h.b16 %v1320
    %v1417 = vunpack.c.l.b16 %v1321
    %v1418 = vunpack.c.h.b16 %v1321
    %v1419 = vunpack.c.l.b16 %v1322
    %v1420 = vunpack.c.h.b16 %v1322
    %v1421 = vunpack.c.l.b16 %v1323
    %v1422 = vunpack.c.h.b16 %v1323
    %v1423 = vunpack.c.l.b16 %v1324
    %v1424 = vunpack.c.h.b16 %v1324
    %v1425 = vunpack.c.l.b16 %v1325
    %v1426 = vunpack.c.h.b16 %v1325
    %v1427 = vunpack.c.l.b16 %v1326
    %v1428 = vunpack.c.h.b16 %v1326
    %v1429 = vunpack.c.l.b16 %v1327
    %v1430 = vunpack.c.h.b16 %v1327
    %v1431 = vunpack.c.l.b16 %v1328
    %v1432 = vunpack.c.h.b16 %v1328
    %v1433 = vunpack.c.l.b16 %v1329
    %v1434 = vunpack.c.h.b16 %v1329
    %v1435 = vunpack.c.l.b16 %v1330
    %v1436 = vunpack.c.h.b16 %v1330
    %v1437 = vunpack.c.l.b16 %v1331
    %v1438 = vunpack.c.h.b16 %v1331
    %v1439 = vunpack.c.l.b16 %v1332
    %v1440 = vunpack.c.h.b16 %v1332
    %v1441 = vunpack.c.l.b16 %v1333
    %v1442 = vunpack.c.h.b16 %v1333
    %v1443 = vunpack.c.l.b16 %v1334
    %v1444 = vunpack.c.h.b16 %v1334
    %v1445 = vunpack.c.l.b16 %v1335
    %v1446 = vunpack.c.h.b16 %v1335
    %v1447 = vunpack.c.l.b16 %v1336
    %v1448 = vunpack.c.h.b16 %v1336
    %v1449 = vunpack.c.l.b16 %v1337
    %v1450 = vunpack.c.h.b16 %v1337
    %v1451 = vunpack.c.l.b16 %v1338
    %v1452 = vunpack.c.h.b16 %v1338
    %v1453 = vunpack.c.l.b16 %v1339
    %v1454 = vunpack.c.h.b16 %v1339
    %v1455 = vunpack.c.l.b16 %v1340
    %v1456 = vunpack.c.h.b16 %v1340
    %v1457 = vunpack.c.l.b16 %v1341
    %v1458 = vunpack.c.h.b16 %v1341
    %v1459 = vunpack.c.l.b16 %v1342
    %v1460 = vunpack.c.h.b16 %v1342
    %v1461 = vunpack.c.l.b16 %v1343
    %v1462 = vunpack.c.h.b16 %v1343
    %v1463 = vpack.c.b16 %v1403, %v1399
    %v1464 = vpack.c.b16 %v1404, %v1400
    %v1465 = vpack.c.b16 %v1405, %v1401
    %v1466 = vpack.c.b16 %v1406, %v1402
    %v1467 = vpack.c.b16 %v1411, %v1407
    %v1468 = vpack.c.b16 %v1412, %v1408
    %v1469 = vpack.c.b16 %v1413, %v1409
    %v1470 = vpack.c.b16 %v1414, %v1410
    %v1471 = vpack.c.b16 %v1419, %v1415
    %v1472 = vpack.c.b16 %v1420, %v1416
    %v1473 = vpack.c.b16 %v1421, %v1417
    %v1474 = vpack.c.b16 %v1422, %v1418
    %v1475 = vpack.c.b16 %v1427, %v1423
    %v1476 = vpack.c.b16 %v1428, %v1424
    %v1477 = vpack.c.b16 %v1429, %v1425
    %v1478 = vpack.c.b16 %v1430, %v1426
    %v1479 = vpack.c.b16 %v1435, %v1431
    %v1480 = vpack.c.b16 %v1436, %v1432
    %v1481 = vpack.c.b16 %v1437, %v1433
    %v1482 = vpack.c.b16 %v1438, %v1434
    %v1483 = vpack.c.b16 %v1443, %v1439
    %v1484 = vpack.c.b16 %v1444, %v1440
    %v1485 = vpack.c.b16 %v1445, %v1441
    %v1486 = vpack.c.b16 %v1446, %v1442
    %v1487 = vpack.c.b16 %v1451, %v1447
    %v1488 = vpack.c.b16 %v1452, %v1448
    %v1489 = vpack.c.b16 %v1453, %v1449
    %v1490 = vpack.c.b16 %v1454, %v1450
    %v1491 = vpack.c.b16 %v1459, %v1455
    %v1492 = vpack.c.b16 %v1460, %v1456
    %v1493 = vpack.c.b16 %v1461, %v1457
    %v1494 = vpack.c.b16 %v1462, %v1458
    %1527 = vmatprep.subr.bf16.mxu0 %v1464
    %1528 = vmatpush1.bf16.msra.mxu0 %v1463
    %1529 = vmatprep.subr.bf16.mxu0 %v1468
    %1530 = vmatpush1.bf16.msra.mxu0 %v1467
    %1531 = vmatprep.subr.bf16.mxu0 %v1472
    %1532 = vmatpush1.bf16.msra.mxu0 %v1471
    %1533 = vmatprep.subr.bf16.mxu0 %v1476
    %1534 = vmatpush1.bf16.msra.mxu0 %v1475
    %1535 = vmatprep.subr.bf16.mxu0 %v1480
    %1536 = vmatpush1.bf16.msra.mxu0 %v1479
    %1537 = vmatprep.subr.bf16.mxu0 %v1484
    %1538 = vmatpush1.bf16.msra.mxu0 %v1483
    %1539 = vmatprep.subr.bf16.mxu0 %v1488
    %1540 = vmatpush1.bf16.msra.mxu0 %v1487
    %1541 = vmatprep.subr.bf16.mxu0 %v1492
    %1542 = vmatpush1.bf16.msra.mxu0 %v1491
    %1543 = vmatprep.subr.bf16.mxu0 0
    %1544 = vmatpush1.bf16.msra.mxu0 0
    %1545 = vmatprep.subr.bf16.mxu0 0
    %1546 = vmatpush1.bf16.msra.mxu0 0
    %1547 = vmatprep.subr.bf16.mxu0 0
    %1548 = vmatpush1.bf16.msra.mxu0 0
    %1549 = vmatprep.subr.bf16.mxu0 0
    %1550 = vmatpush1.bf16.msra.mxu0 0
    %1551 = vmatprep.subr.bf16.mxu0 0
    %1552 = vmatpush1.bf16.msra.mxu0 0
    %1553 = vmatprep.subr.bf16.mxu0 0
    %1554 = vmatpush1.bf16.msra.mxu0 0
    %1555 = vmatprep.subr.bf16.mxu0 0
    %1556 = vmatpush1.bf16.msra.mxu0 0
    %1557 = vmatprep.subr.bf16.mxu0 0
    %1558 = vmatpush1.bf16.msra.mxu0 0
    %1559 = vmatprep.mubr.bf16.mxu0 0
    %1560 = vmatmul.mubr.bf16.gmra.mrb[0].mxu0 %v1344
    %v1561 = vpop.f32.mrb[0].mxu0
    %v1562 = vadd.f32 %v1350, %v1561
    %v1563 = vpop.f32.mrb[0].mxu0
    %v1564 = vadd.f32 %v1354, %v1563
    %v1565 = vpop.f32.mrb[0].mxu0
    %v1566 = vadd.f32 %v1350, %v1565
    %v1567 = vpop.f32.mrb[0].mxu0
    %v1568 = vadd.f32 %v1354, %v1567
    %1569 = vdwg.mxu0
    %1570 = vmatprep.subr.bf16.mxu0 %v1466
    %1571 = vmatpush1.bf16.msra.mxu0 %v1465
    %1572 = vmatprep.subr.bf16.mxu0 %v1470
    %1573 = vmatpush1.bf16.msra.mxu0 %v1469
    %1574 = vmatprep.subr.bf16.mxu0 %v1474
    %1575 = vmatpush1.bf16.msra.mxu0 %v1473
    %1576 = vmatprep.subr.bf16.mxu0 %v1478
    %1577 = vmatpush1.bf16.msra.mxu0 %v1477
    %1578 = vmatprep.subr.bf16.mxu0 %v1482
    %1579 = vmatpush1.bf16.msra.mxu0 %v1481
    %1580 = vmatprep.subr.bf16.mxu0 %v1486
    %1581 = vmatpush1.bf16.msra.mxu0 %v1485
    %1582 = vmatprep.subr.bf16.mxu0 %v1490
    %1583 = vmatpush1.bf16.msra.mxu0 %v1489
    %1584 = vmatprep.subr.bf16.mxu0 %v1494
    %1585 = vmatpush1.bf16.msra.mxu0 %v1493
    %1586 = vmatprep.subr.bf16.mxu0 0
    %1587 = vmatpush1.bf16.msra.mxu0 0
    %1588 = vmatprep.subr.bf16.mxu0 0
    %1589 = vmatpush1.bf16.msra.mxu0 0
    %1590 = vmatprep.subr.bf16.mxu0 0
    %1591 = vmatpush1.bf16.msra.mxu0 0
    %1592 = vmatprep.subr.bf16.mxu0 0
    %1593 = vmatpush1.bf16.msra.mxu0 0
    %1594 = vmatprep.subr.bf16.mxu0 0
    %1595 = vmatpush1.bf16.msra.mxu0 0
    %1596 = vmatprep.subr.bf16.mxu0 0
    %1597 = vmatpush1.bf16.msra.mxu0 0
    %1598 = vmatprep.subr.bf16.mxu0 0
    %1599 = vmatpush1.bf16.msra.mxu0 0
    %1600 = vmatprep.subr.bf16.mxu0 0
    %1601 = vmatpush1.bf16.msra.mxu0 0
    %1602 = vmatprep.mubr.bf16.mxu0 0
    %1603 = vmatmul.mubr.bf16.gmra.mrb[0].mxu0 %v1344
    %v1604 = vpop.f32.mrb[0].mxu0
    %v1605 = vadd.f32 %v1358, %v1604
    %v1606 = vpop.f32.mrb[0].mxu0
    %v1607 = vadd.f32 %v1362, %v1606
    %v1608 = vpop.f32.mrb[0].mxu0
    %v1609 = vadd.f32 %v1358, %v1608
    %v1610 = vpop.f32.mrb[0].mxu0
    %v1611 = vadd.f32 %v1362, %v1610
    %1612 = vdwg.mxu0
    %v1613 = vmax.f32 %v1562, 0.0
    %v1614 = vmax.f32 %v1564, 0.0
    %v1615 = vmax.f32 %v1605, 0.0
    %v1616 = vmax.f32 %v1607, 0.0
    %v1617 = vmax.f32 %v1566, 0.0
    %v1618 = vmax.f32 %v1568, 0.0
    %v1619 = vmax.f32 %v1609, 0.0
    %v1620 = vmax.f32 %v1611, 0.0
    %v1621 = vpack.c.bf16 %v1617, %v1613
    %v1622 = vpack.c.bf16 %v1618, %v1614
    %v1623 = vpack.c.bf16 %v1619, %v1615
    %v1624 = vpack.c.bf16 %v1620, %v1616
    %v1625 = vld [vmem:[#allocation23] sm:$0xf]
    %v1626 = vld [vmem:[#allocation23 + $0x4] sm:$0xf]
    %v1627 = vld [vmem:[#allocation23 + $0x8] sm:$0xf]
    %v1628 = vld [vmem:[#allocation23 + $0xc] sm:$0xf]
    %v1629 = vld [vmem:[#allocation23 + $0x10] sm:$0xf]
    %v1630 = vld [vmem:[#allocation23 + $0x14] sm:$0xf]
    %v1631 = vld [vmem:[#allocation23 + $0x18] sm:$0xf]
    %v1632 = vld [vmem:[#allocation23 + $0x1c] sm:$0xf]
    %v1633 = vld [vmem:[#allocation23 + $0x20] sm:$0xf]
    %v1634 = vld [vmem:[#allocation23 + $0x24] sm:$0xf]
    %v1635 = vld [vmem:[#allocation23 + $0x28] sm:$0xf]
    %v1636 = vld [vmem:[#allocation23 + $0x2c] sm:$0xf]
    %v1637 = vld [vmem:[#allocation23 + $0x30] sm:$0xf]
    %v1638 = vld [vmem:[#allocation23 + $0x34] sm:$0xf]
    %v1639 = vld [vmem:[#allocation23 + $0x38] sm:$0xf]
    %v1640 = vld [vmem:[#allocation23 + $0x3c] sm:$0xf]
    %v1641 = vld [vmem:[#allocation23 + $0x40] sm:$0xf]
    %v1642 = vld [vmem:[#allocation23 + $0x44] sm:$0xf]
    %v1643 = vld [vmem:[#allocation23 + $0x48] sm:$0xf]
    %v1644 = vld [vmem:[#allocation23 + $0x4c] sm:$0xf]
    %v1645 = vld [vmem:[#allocation23 + $0x50] sm:$0xf]
    %v1646 = vld [vmem:[#allocation23 + $0x54] sm:$0xf]
    %v1647 = vld [vmem:[#allocation23 + $0x58] sm:$0xf]
    %v1648 = vld [vmem:[#allocation23 + $0x5c] sm:$0xf]
    %v1649 = vld [vmem:[#allocation23 + $0x60] sm:$0xf]
    %v1650 = vld [vmem:[#allocation23 + $0x64] sm:$0xf]
    %v1651 = vld [vmem:[#allocation23 + $0x68] sm:$0xf]
    %v1652 = vld [vmem:[#allocation23 + $0x6c] sm:$0xf]
    %v1653 = vld [vmem:[#allocation23 + $0x70] sm:$0xf]
    %v1654 = vld [vmem:[#allocation23 + $0x74] sm:$0xf]
    %v1655 = vld [vmem:[#allocation23 + $0x78] sm:$0xf]
    %v1656 = vld [vmem:[#allocation23 + $0x7c] sm:$0xf]
    %v1657 = vld [vmem:[#allocation23 + $0x80] sm:$0xf]
    %v1658 = vld [vmem:[#allocation23 + $0x84] sm:$0xf]
    %v1659 = vld [vmem:[#allocation23 + $0x88] sm:$0xf]
    %v1660 = vld [vmem:[#allocation23 + $0x8c] sm:$0xf]
    %v1661 = vld [vmem:[#allocation23 + $0x90] sm:$0xf]
    %v1662 = vld [vmem:[#allocation23 + $0x94] sm:$0xf]
    %v1663 = vld [vmem:[#allocation23 + $0x98] sm:$0xf]
    %v1664 = vld [vmem:[#allocation23 + $0x9c] sm:$0xf]
    %v1665 = vld [vmem:[#allocation23 + $0xa0] sm:$0xf]
    %v1666 = vld [vmem:[#allocation23 + $0xa4] sm:$0xf]
    %v1667 = vld [vmem:[#allocation23 + $0xa8] sm:$0xf]
    %v1668 = vld [vmem:[#allocation23 + $0xac] sm:$0xf]
    %v1669 = vld [vmem:[#allocation23 + $0xb0] sm:$0xf]
    %v1670 = vld [vmem:[#allocation23 + $0xb4] sm:$0xf]
    %v1671 = vld [vmem:[#allocation23 + $0xb8] sm:$0xf]
    %v1672 = vld [vmem:[#allocation23 + $0xbc] sm:$0xf]
    %v1673 = vld [vmem:[#allocation23 + $0xc0] sm:$0xf]
    %v1674 = vld [vmem:[#allocation23 + $0xc4] sm:$0xf]
    %v1675 = vld [vmem:[#allocation23 + $0xc8] sm:$0xf]
    %v1676 = vld [vmem:[#allocation23 + $0xcc] sm:$0xf]
    %v1677 = vld [vmem:[#allocation23 + $0xd0] sm:$0xf]
    %v1678 = vld [vmem:[#allocation23 + $0xd4] sm:$0xf]
    %v1679 = vld [vmem:[#allocation23 + $0xd8] sm:$0xf]
    %v1680 = vld [vmem:[#allocation23 + $0xdc] sm:$0xf]
    %v1681 = vld [vmem:[#allocation23 + $0xe0] sm:$0xf]
    %v1682 = vld [vmem:[#allocation23 + $0xe4] sm:$0xf]
    %v1683 = vld [vmem:[#allocation23 + $0xe8] sm:$0xf]
    %v1684 = vld [vmem:[#allocation23 + $0xec] sm:$0xf]
    %v1685 = vld [vmem:[#allocation23 + $0xf0] sm:$0xf]
    %v1686 = vld [vmem:[#allocation23 + $0xf4] sm:$0xf]
    %v1687 = vld [vmem:[#allocation23 + $0xf8] sm:$0xf]
    %v1688 = vld [vmem:[#allocation23 + $0xfc] sm:$0xf]
    %v1689 = vld [vmem:[#allocation25] sm:$0x1]
    %v1691 = vlaneseq
    %v1692 = vshrl.u32 %v1691, 7
    %v1693 = vsub.s32 0, %v1692
    %v1694 = vrot.slane %v1689, %v1693
    %v1760 = vunpack.c.l.b16 %v1625
    %v1761 = vunpack.c.l.b16 %v1626
    %v1762 = vunpack.c.l.b16 %v1627
    %v1763 = vunpack.c.l.b16 %v1628
    %v1764 = vunpack.c.l.b16 %v1629
    %v1765 = vunpack.c.l.b16 %v1630
    %v1766 = vunpack.c.l.b16 %v1631
    %v1767 = vunpack.c.l.b16 %v1632
    %v1768 = vunpack.c.l.b16 %v1633
    %v1769 = vunpack.c.l.b16 %v1634
    %v1770 = vunpack.c.l.b16 %v1635
    %v1771 = vunpack.c.l.b16 %v1636
    %v1772 = vunpack.c.l.b16 %v1637
    %v1773 = vunpack.c.l.b16 %v1638
    %v1774 = vunpack.c.l.b16 %v1639
    %v1775 = vunpack.c.l.b16 %v1640
    %v1776 = vunpack.c.l.b16 %v1641
    %v1777 = vunpack.c.l.b16 %v1642
    %v1778 = vunpack.c.l.b16 %v1643
    %v1779 = vunpack.c.l.b16 %v1644
    %v1780 = vunpack.c.l.b16 %v1645
    %v1781 = vunpack.c.l.b16 %v1646
    %v1782 = vunpack.c.l.b16 %v1647
    %v1783 = vunpack.c.l.b16 %v1648
    %v1784 = vunpack.c.l.b16 %v1649
    %v1785 = vunpack.c.l.b16 %v1650
    %v1786 = vunpack.c.l.b16 %v1651
    %v1787 = vunpack.c.l.b16 %v1652
    %v1788 = vunpack.c.l.b16 %v1653
    %v1789 = vunpack.c.l.b16 %v1654
    %v1790 = vunpack.c.l.b16 %v1655
    %v1791 = vunpack.c.l.b16 %v1656
    %v1792 = vunpack.c.l.b16 %v1657
    %v1793 = vunpack.c.l.b16 %v1658
    %v1794 = vunpack.c.l.b16 %v1659
    %v1795 = vunpack.c.l.b16 %v1660
    %v1796 = vunpack.c.l.b16 %v1661
    %v1797 = vunpack.c.l.b16 %v1662
    %v1798 = vunpack.c.l.b16 %v1663
    %v1799 = vunpack.c.l.b16 %v1664
    %v1800 = vunpack.c.l.b16 %v1665
    %v1801 = vunpack.c.l.b16 %v1666
    %v1802 = vunpack.c.l.b16 %v1667
    %v1803 = vunpack.c.l.b16 %v1668
    %v1804 = vunpack.c.l.b16 %v1669
    %v1805 = vunpack.c.l.b16 %v1670
    %v1806 = vunpack.c.l.b16 %v1671
    %v1807 = vunpack.c.l.b16 %v1672
    %v1808 = vunpack.c.l.b16 %v1673
    %v1809 = vunpack.c.l.b16 %v1674
    %v1810 = vunpack.c.l.b16 %v1675
    %v1811 = vunpack.c.l.b16 %v1676
    %v1812 = vunpack.c.l.b16 %v1677
    %v1813 = vunpack.c.l.b16 %v1678
    %v1814 = vunpack.c.l.b16 %v1679
    %v1815 = vunpack.c.l.b16 %v1680
    %v1816 = vunpack.c.l.b16 %v1681
    %v1817 = vunpack.c.l.b16 %v1682
    %v1818 = vunpack.c.l.b16 %v1683
    %v1819 = vunpack.c.l.b16 %v1684
    %v1820 = vunpack.c.l.b16 %v1685
    %v1821 = vunpack.c.l.b16 %v1686
    %v1822 = vunpack.c.l.b16 %v1687
    %v1823 = vunpack.c.l.b16 %v1688
    %v1824 = vpack.c.b16 %v1761, %v1760
    %v1825 = vpack.c.b16 %v1763, %v1762
    %v1826 = vpack.c.b16 %v1765, %v1764
    %v1827 = vpack.c.b16 %v1767, %v1766
    %v1828 = vpack.c.b16 %v1769, %v1768
    %v1829 = vpack.c.b16 %v1771, %v1770
    %v1830 = vpack.c.b16 %v1773, %v1772
    %v1831 = vpack.c.b16 %v1775, %v1774
    %v1832 = vpack.c.b16 %v1777, %v1776
    %v1833 = vpack.c.b16 %v1779, %v1778
    %v1834 = vpack.c.b16 %v1781, %v1780
    %v1835 = vpack.c.b16 %v1783, %v1782
    %v1836 = vpack.c.b16 %v1785, %v1784
    %v1837 = vpack.c.b16 %v1787, %v1786
    %v1838 = vpack.c.b16 %v1789, %v1788
    %v1839 = vpack.c.b16 %v1791, %v1790
    %v1840 = vpack.c.b16 %v1793, %v1792
    %v1841 = vpack.c.b16 %v1795, %v1794
    %v1842 = vpack.c.b16 %v1797, %v1796
    %v1843 = vpack.c.b16 %v1799, %v1798
    %v1844 = vpack.c.b16 %v1801, %v1800
    %v1845 = vpack.c.b16 %v1803, %v1802
    %v1846 = vpack.c.b16 %v1805, %v1804
    %v1847 = vpack.c.b16 %v1807, %v1806
    %v1848 = vpack.c.b16 %v1809, %v1808
    %v1849 = vpack.c.b16 %v1811, %v1810
    %v1850 = vpack.c.b16 %v1813, %v1812
    %v1851 = vpack.c.b16 %v1815, %v1814
    %v1852 = vpack.c.b16 %v1817, %v1816
    %v1853 = vpack.c.b16 %v1819, %v1818
    %v1854 = vpack.c.b16 %v1821, %v1820
    %v1855 = vpack.c.b16 %v1823, %v1822
    %1888 = vmatprep.subr.bf16.mxu0 0
    %1889 = vmatpush1.bf16.msra.mxu0 %v1824
    %1890 = vmatprep.subr.bf16.mxu0 0
    %1891 = vmatpush1.bf16.msra.mxu0 %v1825
    %1892 = vmatprep.subr.bf16.mxu0 0
    %1893 = vmatpush1.bf16.msra.mxu0 %v1826
    %1894 = vmatprep.subr.bf16.mxu0 0
    %1895 = vmatpush1.bf16.msra.mxu0 %v1827
    %1896 = vmatprep.subr.bf16.mxu0 0
    %1897 = vmatpush1.bf16.msra.mxu0 %v1828
    %1898 = vmatprep.subr.bf16.mxu0 0
    %1899 = vmatpush1.bf16.msra.mxu0 %v1829
    %1900 = vmatprep.subr.bf16.mxu0 0
    %1901 = vmatpush1.bf16.msra.mxu0 %v1830
    %1902 = vmatprep.subr.bf16.mxu0 0
    %1903 = vmatpush1.bf16.msra.mxu0 %v1831
    %1904 = vmatprep.subr.bf16.mxu0 0
    %1905 = vmatpush1.bf16.msra.mxu0 %v1832
    %1906 = vmatprep.subr.bf16.mxu0 0
    %1907 = vmatpush1.bf16.msra.mxu0 %v1833
    %1908 = vmatprep.subr.bf16.mxu0 0
    %1909 = vmatpush1.bf16.msra.mxu0 %v1834
    %1910 = vmatprep.subr.bf16.mxu0 0
    %1911 = vmatpush1.bf16.msra.mxu0 %v1835
    %1912 = vmatprep.subr.bf16.mxu0 0
    %1913 = vmatpush1.bf16.msra.mxu0 %v1836
    %1914 = vmatprep.subr.bf16.mxu0 0
    %1915 = vmatpush1.bf16.msra.mxu0 %v1837
    %1916 = vmatprep.subr.bf16.mxu0 0
    %1917 = vmatpush1.bf16.msra.mxu0 %v1838
    %1918 = vmatprep.subr.bf16.mxu0 0
    %1919 = vmatpush1.bf16.msra.mxu0 %v1839
    %1920 = vmatprep.mubr.bf16.mxu0 %v1622
    %1921 = vmatmul.mubr.bf16.gmra.mrb[0].mxu0 %v1621
    %v1922 = vpop.f32.mrb[0].mxu0
    %v1923 = vadd.f32 %v1694, %v1922
    %v1924 = vpop.f32.mrb[0].mxu0
    %v1925 = vpop.f32.mrb[0].mxu0
    %v1926 = vadd.f32 %v1694, %v1925
    %v1927 = vpop.f32.mrb[0].mxu0
    %1928 = vdwg.mxu0
    %1929 = vmatprep.subr.bf16.mxu0 0
    %1930 = vmatpush1.bf16.msra.mxu0 %v1840
    %1931 = vmatprep.subr.bf16.mxu0 0
    %1932 = vmatpush1.bf16.msra.mxu0 %v1841
    %1933 = vmatprep.subr.bf16.mxu0 0
    %1934 = vmatpush1.bf16.msra.mxu0 %v1842
    %1935 = vmatprep.subr.bf16.mxu0 0
    %1936 = vmatpush1.bf16.msra.mxu0 %v1843
    %1937 = vmatprep.subr.bf16.mxu0 0
    %1938 = vmatpush1.bf16.msra.mxu0 %v1844
    %1939 = vmatprep.subr.bf16.mxu0 0
    %1940 = vmatpush1.bf16.msra.mxu0 %v1845
    %1941 = vmatprep.subr.bf16.mxu0 0
    %1942 = vmatpush1.bf16.msra.mxu0 %v1846
    %1943 = vmatprep.subr.bf16.mxu0 0
    %1944 = vmatpush1.bf16.msra.mxu0 %v1847
    %1945 = vmatprep.subr.bf16.mxu0 0
    %1946 = vmatpush1.bf16.msra.mxu0 %v1848
    %1947 = vmatprep.subr.bf16.mxu0 0
    %1948 = vmatpush1.bf16.msra.mxu0 %v1849
    %1949 = vmatprep.subr.bf16.mxu0 0
    %1950 = vmatpush1.bf16.msra.mxu0 %v1850
    %1951 = vmatprep.subr.bf16.mxu0 0
    %1952 = vmatpush1.bf16.msra.mxu0 %v1851
    %1953 = vmatprep.subr.bf16.mxu0 0
    %1954 = vmatpush1.bf16.msra.mxu0 %v1852
    %1955 = vmatprep.subr.bf16.mxu0 0
    %1956 = vmatpush1.bf16.msra.mxu0 %v1853
    %1957 = vmatprep.subr.bf16.mxu0 0
    %1958 = vmatpush1.bf16.msra.mxu0 %v1854
    %1959 = vmatprep.subr.bf16.mxu0 0
    %1960 = vmatpush1.bf16.msra.mxu0 %v1855
    %1961 = vmatprep.mubr.bf16.mxu0 %v1624
    %1962 = vmatmul.mubr.bf16.gmra.mrb[0].mxu0 %v1623
    %v1963 = vpop.f32.mrb[0].mxu0
    %v1964 = vadd.f32 %v1923, %v1963
    %v1965 = vpop.f32.mrb[0].mxu0
    %v1966 = vpop.f32.mrb[0].mxu0
    %v1967 = vadd.f32 %v1926, %v1966
    %v1968 = vpop.f32.mrb[0].mxu0
    %1969 = vdwg.mxu0
    %v1970 = vadd.f32 %v1310, %v1964
    %v1971 = vadd.f32 %v1311, %v1967
    %v1972 = vld [vmem:[#allocation17] sm:$0x1]
    %v1973 = vld [vmem:[#allocation19] sm:$0x1]
    %1974 = vadd.xlane.f32.xlu0 %v1970
    %v1975 = vpop.xlane.xlu0 %1974
    %1976 = vadd.xlane.f32.xlu0 %v1971
    %v1977 = vpop.xlane.xlu0 %1976
    %v1978 = vmul.f32 %v1975, %v1277
    %v1979 = vmul.f32 %v1977, %v1277
    %v1980 = vsub.f32 %v1970, %v1978
    %v1981 = vsub.f32 %v1971, %v1979
    %v1982 = vmul.f32 %v1980, %v1980
    %v1983 = vmul.f32 %v1981, %v1981
    %1984 = vadd.xlane.f32.xlu0 %v1982
    %v1985 = vpop.xlane.xlu0 %1984
    %1986 = vadd.xlane.f32.xlu0 %v1983
    %v1987 = vpop.xlane.xlu0 %1986
    %v1988 = vmul.f32 %v1985, %v1277
    %v1989 = vmul.f32 %v1987, %v1277
    %v1990 = vadd.f32 %v1988, 1e-05
    %v1991 = vadd.f32 %v1989, 1e-05
    %v1992 = vrsqrt.pop %v1990
    %v1993 = vrsqrt.pop %v1991
    %v1994 = vmul.f32 %v1980, %v1992
    %v1995 = vmul.f32 %v1981, %v1993
    %v1997 = vlaneseq
    %v1998 = vshrl.u32 %v1997, 7
    %v1999 = vsub.s32 0, %v1998
    %v2000 = vrot.slane %v1972, %v1999
    %v2002 = vmul.f32 %v1994, %v2000
    %v2003 = vmul.f32 %v1995, %v2000
    %v2005 = vlaneseq
    %v2006 = vshrl.u32 %v2005, 7
    %v2007 = vsub.s32 0, %v2006
    %v2008 = vrot.slane %v1973, %v2007
    %v2010 = vadd.f32 %v2002, %v2008
    %v2011 = vadd.f32 %v2003, %v2008
    %s2012 = scalar_lea.vmem [#allocation11], 64
    %v2013 = vld [vmem:[%s2012] sm:$0xf]
    %v2014 = vld [vmem:[%s2012 + $0x4] sm:$0xf]
    %v2015 = vld [vmem:[%s2012 + $0x8] sm:$0xf]
    %v2016 = vld [vmem:[%s2012 + $0xc] sm:$0xf]
    %v2017 = vld [vmem:[%s2012 + $0x10] sm:$0xf]
    %v2018 = vld [vmem:[%s2012 + $0x14] sm:$0xf]
    %v2019 = vld [vmem:[%s2012 + $0x18] sm:$0xf]
    %v2020 = vld [vmem:[%s2012 + $0x1c] sm:$0xf]
    %v2021 = vld [vmem:[%s2012 + $0x20] sm:$0xf]
    %v2022 = vld [vmem:[%s2012 + $0x24] sm:$0xf]
    %v2023 = vld [vmem:[%s2012 + $0x28] sm:$0xf]
    %v2024 = vld [vmem:[%s2012 + $0x2c] sm:$0xf]
    %v2025 = vld [vmem:[%s2012 + $0x30] sm:$0xf]
    %v2026 = vld [vmem:[%s2012 + $0x34] sm:$0xf]
    %v2027 = vld [vmem:[%s2012 + $0x38] sm:$0xf]
    %v2028 = vld [vmem:[%s2012 + $0x3c] sm:$0xf]
    %v2029 = vpack.c.bf16 %v2011, %v2010
    %s2030 = scalar_lea.vmem [#allocation13], 1
    %v2031 = vld [vmem:[%s2030] sm:$0x1]
    %v2033 = vlaneseq
    %v2034 = vshrl.u32 %v2033, 7
    %v2035 = vsub.s32 0, %v2034
    %v2036 = vrot.slane %v2031, %v2035
    %v2054 = vunpack.c.l.b16 %v2013
    %v2055 = vunpack.c.l.b16 %v2014
    %v2056 = vunpack.c.l.b16 %v2015
    %v2057 = vunpack.c.l.b16 %v2016
    %v2058 = vunpack.c.l.b16 %v2017
    %v2059 = vunpack.c.l.b16 %v2018
    %v2060 = vunpack.c.l.b16 %v2019
    %v2061 = vunpack.c.l.b16 %v2020
    %v2062 = vunpack.c.l.b16 %v2021
    %v2063 = vunpack.c.l.b16 %v2022
    %v2064 = vunpack.c.l.b16 %v2023
    %v2065 = vunpack.c.l.b16 %v2024
    %v2066 = vunpack.c.l.b16 %v2025
    %v2067 = vunpack.c.l.b16 %v2026
    %v2068 = vunpack.c.l.b16 %v2027
    %v2069 = vunpack.c.l.b16 %v2028
    %v2070 = vpack.c.b16 %v2055, %v2054
    %v2071 = vpack.c.b16 %v2057, %v2056
    %v2072 = vpack.c.b16 %v2059, %v2058
    %v2073 = vpack.c.b16 %v2061, %v2060
    %v2074 = vpack.c.b16 %v2063, %v2062
    %v2075 = vpack.c.b16 %v2065, %v2064
    %v2076 = vpack.c.b16 %v2067, %v2066
    %v2077 = vpack.c.b16 %v2069, %v2068
    %2086 = vmatprep.subr.bf16.mxu0 0
    %2087 = vmatpush1.bf16.msra.mxu0 %v2070
    %2088 = vmatprep.subr.bf16.mxu0 0
    %2089 = vmatpush1.bf16.msra.mxu0 %v2071
    %2090 = vmatprep.subr.bf16.mxu0 0
    %2091 = vmatpush1.bf16.msra.mxu0 %v2072
    %2092 = vmatprep.subr.bf16.mxu0 0
    %2093 = vmatpush1.bf16.msra.mxu0 %v2073
    %2094 = vmatprep.subr.bf16.mxu0 0
    %2095 = vmatpush1.bf16.msra.mxu0 %v2074
    %2096 = vmatprep.subr.bf16.mxu0 0
    %2097 = vmatpush1.bf16.msra.mxu0 %v2075
    %2098 = vmatprep.subr.bf16.mxu0 0
    %2099 = vmatpush1.bf16.msra.mxu0 %v2076
    %2100 = vmatprep.subr.bf16.mxu0 0
    %2101 = vmatpush1.bf16.msra.mxu0 %v2077
    %2102 = vmatprep.subr.bf16.mxu0 0
    %2103 = vmatpush1.bf16.msra.mxu0 0
    %2104 = vmatprep.subr.bf16.mxu0 0
    %2105 = vmatpush1.bf16.msra.mxu0 0
    %2106 = vmatprep.subr.bf16.mxu0 0
    %2107 = vmatpush1.bf16.msra.mxu0 0
    %2108 = vmatprep.subr.bf16.mxu0 0
    %2109 = vmatpush1.bf16.msra.mxu0 0
    %2110 = vmatprep.subr.bf16.mxu0 0
    %2111 = vmatpush1.bf16.msra.mxu0 0
    %2112 = vmatprep.subr.bf16.mxu0 0
    %2113 = vmatpush1.bf16.msra.mxu0 0
    %2114 = vmatprep.subr.bf16.mxu0 0
    %2115 = vmatpush1.bf16.msra.mxu0 0
    %2116 = vmatprep.subr.bf16.mxu0 0
    %2117 = vmatpush1.bf16.msra.mxu0 0
    %2118 = vmatprep.mubr.bf16.mxu0 0
    %2119 = vmatmul.mubr.bf16.gmra.mrb[0].mxu0 %v2029
    %v2120 = vpop.f32.mrb[0].mxu0
    %v2121 = vadd.f32 %v2036, %v2120
    %v2122 = vpop.f32.mrb[0].mxu0
    %v2123 = vpop.f32.mrb[0].mxu0
    %v2124 = vadd.f32 %v2036, %v2123
    %v2125 = vpop.f32.mrb[0].mxu0
    %2126 = vdwg.mxu0
    %v2127 = vadd.f32 %v2010, %v2121
    %v2128 = vadd.f32 %v2011, %v2124
    %s2129 = scalar_lea.vmem [#allocation14], 1
    %v2130 = vld [vmem:[%s2129] sm:$0x1]
    %s2131 = scalar_lea.vmem [#allocation16], 1
    %v2132 = vld [vmem:[%s2131] sm:$0x1]
    %2133 = vadd.xlane.f32.xlu0 %v2127
    %v2134 = vpop.xlane.xlu0 %2133
    %2135 = vadd.xlane.f32.xlu0 %v2128
    %v2136 = vpop.xlane.xlu0 %2135
    %v2137 = vmul.f32 %v2134, %v1277
    %v2138 = vmul.f32 %v2136, %v1277
    %v2139 = vsub.f32 %v2127, %v2137
    %v2140 = vsub.f32 %v2128, %v2138
    %v2141 = vmul.f32 %v2139, %v2139
    %v2142 = vmul.f32 %v2140, %v2140
    %2143 = vadd.xlane.f32.xlu0 %v2141
    %v2144 = vpop.xlane.xlu0 %2143
    %2145 = vadd.xlane.f32.xlu0 %v2142
    %v2146 = vpop.xlane.xlu0 %2145
    %v2147 = vmul.f32 %v2144, %v1277
    %v2148 = vmul.f32 %v2146, %v1277
    %v2149 = vadd.f32 %v2147, 1e-05
    %v2150 = vadd.f32 %v2148, 1e-05
    %v2151 = vrsqrt.pop %v2149
    %v2152 = vrsqrt.pop %v2150
    %v2153 = vmul.f32 %v2139, %v2151
    %v2154 = vmul.f32 %v2140, %v2152
    %v2156 = vlaneseq
    %v2157 = vshrl.u32 %v2156, 7
    %v2158 = vsub.s32 0, %v2157
    %v2159 = vrot.slane %v2130, %v2158
    %v2161 = vmul.f32 %v2153, %v2159
    %v2162 = vmul.f32 %v2154, %v2159
    %v2164 = vlaneseq
    %v2165 = vshrl.u32 %v2164, 7
    %v2166 = vsub.s32 0, %v2165
    %v2167 = vrot.slane %v2132, %v2166
    %v2169 = vadd.f32 %v2161, %v2167
    %v2170 = vadd.f32 %v2162, %v2167
    %s2171 = scalar_lea.vmem [#allocation20], 256
    %v2172 = vld [vmem:[%s2171] sm:$0xff]
    %v2173 = vld [vmem:[%s2171 + $0x8] sm:$0xff]
    %v2174 = vld [vmem:[%s2171 + $0x10] sm:$0xff]
    %v2175 = vld [vmem:[%s2171 + $0x18] sm:$0xff]
    %v2176 = vld [vmem:[%s2171 + $0x20] sm:$0xff]
    %v2177 = vld [vmem:[%s2171 + $0x28] sm:$0xff]
    %v2178 = vld [vmem:[%s2171 + $0x30] sm:$0xff]
    %v2179 = vld [vmem:[%s2171 + $0x38] sm:$0xff]
    %v2180 = vld [vmem:[%s2171 + $0x40] sm:$0xff]
    %v2181 = vld [vmem:[%s2171 + $0x48] sm:$0xff]
    %v2182 = vld [vmem:[%s2171 + $0x50] sm:$0xff]
    %v2183 = vld [vmem:[%s2171 + $0x58] sm:$0xff]
    %v2184 = vld [vmem:[%s2171 + $0x60] sm:$0xff]
    %v2185 = vld [vmem:[%s2171 + $0x68] sm:$0xff]
    %v2186 = vld [vmem:[%s2171 + $0x70] sm:$0xff]
    %v2187 = vld [vmem:[%s2171 + $0x78] sm:$0xff]
    %v2188 = vld [vmem:[%s2171 + $0x80] sm:$0xff]
    %v2189 = vld [vmem:[%s2171 + $0x88] sm:$0xff]
    %v2190 = vld [vmem:[%s2171 + $0x90] sm:$0xff]
    %v2191 = vld [vmem:[%s2171 + $0x98] sm:$0xff]
    %v2192 = vld [vmem:[%s2171 + $0xa0] sm:$0xff]
    %v2193 = vld [vmem:[%s2171 + $0xa8] sm:$0xff]
    %v2194 = vld [vmem:[%s2171 + $0xb0] sm:$0xff]
    %v2195 = vld [vmem:[%s2171 + $0xb8] sm:$0xff]
    %v2196 = vld [vmem:[%s2171 + $0xc0] sm:$0xff]
    %v2197 = vld [vmem:[%s2171 + $0xc8] sm:$0xff]
    %v2198 = vld [vmem:[%s2171 + $0xd0] sm:$0xff]
    %v2199 = vld [vmem:[%s2171 + $0xd8] sm:$0xff]
    %v2200 = vld [vmem:[%s2171 + $0xe0] sm:$0xff]
    %v2201 = vld [vmem:[%s2171 + $0xe8] sm:$0xff]
    %v2202 = vld [vmem:[%s2171 + $0xf0] sm:$0xff]
    %v2203 = vld [vmem:[%s2171 + $0xf8] sm:$0xff]
    %v2204 = vpack.c.bf16 %v2170, %v2169
    %s2205 = scalar_lea.vmem [#allocation22], 4
    %v2206 = vld [vmem:[%s2205] sm:$0xf]
    %v2208 = vlaneseq
    %v2209 = vshrl.u32 %v2208, 7
    %v2210 = vsub.s32 0, %v2209
    %v2211 = vrot.slane %v2206, %v2210
    %v2212 = vlaneseq
    %v2213 = vshrl.u32 %v2212, 7
    %v2214 = vsub.s32 1, %v2213
    %v2215 = vrot.slane %v2206, %v2214
    %v2216 = vlaneseq
    %v2217 = vshrl.u32 %v2216, 7
    %v2218 = vsub.s32 2, %v2217
    %v2219 = vrot.slane %v2206, %v2218
    %v2220 = vlaneseq
    %v2221 = vshrl.u32 %v2220, 7
    %v2222 = vsub.s32 3, %v2221
    %v2223 = vrot.slane %v2206, %v2222
    %v2260 = vunpack.c.l.b16 %v2172
    %v2261 = vunpack.c.h.b16 %v2172
    %v2262 = vunpack.c.l.b16 %v2173
    %v2263 = vunpack.c.h.b16 %v2173
    %v2264 = vunpack.c.l.b16 %v2174
    %v2265 = vunpack.c.h.b16 %v2174
    %v2266 = vunpack.c.l.b16 %v2175
    %v2267 = vunpack.c.h.b16 %v2175
    %v2268 = vunpack.c.l.b16 %v2176
    %v2269 = vunpack.c.h.b16 %v2176
    %v2270 = vunpack.c.l.b16 %v2177
    %v2271 = vunpack.c.h.b16 %v2177
    %v2272 = vunpack.c.l.b16 %v2178
    %v2273 = vunpack.c.h.b16 %v2178
    %v2274 = vunpack.c.l.b16 %v2179
    %v2275 = vunpack.c.h.b16 %v2179
    %v2276 = vunpack.c.l.b16 %v2180
    %v2277 = vunpack.c.h.b16 %v2180
    %v2278 = vunpack.c.l.b16 %v2181
    %v2279 = vunpack.c.h.b16 %v2181
    %v2280 = vunpack.c.l.b16 %v2182
    %v2281 = vunpack.c.h.b16 %v2182
    %v2282 = vunpack.c.l.b16 %v2183
    %v2283 = vunpack.c.h.b16 %v2183
    %v2284 = vunpack.c.l.b16 %v2184
    %v2285 = vunpack.c.h.b16 %v2184
    %v2286 = vunpack.c.l.b16 %v2185
    %v2287 = vunpack.c.h.b16 %v2185
    %v2288 = vunpack.c.l.b16 %v2186
    %v2289 = vunpack.c.h.b16 %v2186
    %v2290 = vunpack.c.l.b16 %v2187
    %v2291 = vunpack.c.h.b16 %v2187
    %v2292 = vunpack.c.l.b16 %v2188
    %v2293 = vunpack.c.h.b16 %v2188
    %v2294 = vunpack.c.l.b16 %v2189
    %v2295 = vunpack.c.h.b16 %v2189
    %v2296 = vunpack.c.l.b16 %v2190
    %v2297 = vunpack.c.h.b16 %v2190
    %v2298 = vunpack.c.l.b16 %v2191
    %v2299 = vunpack.c.h.b16 %v2191
    %v2300 = vunpack.c.l.b16 %v2192
    %v2301 = vunpack.c.h.b16 %v2192
    %v2302 = vunpack.c.l.b16 %v2193
    %v2303 = vunpack.c.h.b16 %v2193
    %v2304 = vunpack.c.l.b16 %v2194
    %v2305 = vunpack.c.h.b16 %v2194
    %v2306 = vunpack.c.l.b16 %v2195
    %v2307 = vunpack.c.h.b16 %v2195
    %v2308 = vunpack.c.l.b16 %v2196
    %v2309 = vunpack.c.h.b16 %v2196
    %v2310 = vunpack.c.l.b16 %v2197
    %v2311 = vunpack.c.h.b16 %v2197
    %v2312 = vunpack.c.l.b16 %v2198
    %v2313 = vunpack.c.h.b16 %v2198
    %v2314 = vunpack.c.l.b16 %v2199
    %v2315 = vunpack.c.h.b16 %v2199
    %v2316 = vunpack.c.l.b16 %v2200
    %v2317 = vunpack.c.h.b16 %v2200
    %v2318 = vunpack.c.l.b16 %v2201
    %v2319 = vunpack.c.h.b16 %v2201
    %v2320 = vunpack.c.l.b16 %v2202
    %v2321 = vunpack.c.h.b16 %v2202
    %v2322 = vunpack.c.l.b16 %v2203
    %v2323 = vunpack.c.h.b16 %v2203
    %v2324 = vpack.c.b16 %v2264, %v2260
    %v2325 = vpack.c.b16 %v2265, %v2261
    %v2326 = vpack.c.b16 %v2266, %v2262
    %v2327 = vpack.c.b16 %v2267, %v2263
    %v2328 = vpack.c.b16 %v2272, %v2268
    %v2329 = vpack.c.b16 %v2273, %v2269
    %v2330 = vpack.c.b16 %v2274, %v2270
    %v2331 = vpack.c.b16 %v2275, %v2271
    %v2332 = vpack.c.b16 %v2280, %v2276
    %v2333 = vpack.c.b16 %v2281, %v2277
    %v2334 = vpack.c.b16 %v2282, %v2278
    %v2335 = vpack.c.b16 %v2283, %v2279
    %v2336 = vpack.c.b16 %v2288, %v2284
    %v2337 = vpack.c.b16 %v2289, %v2285
    %v2338 = vpack.c.b16 %v2290, %v2286
    %v2339 = vpack.c.b16 %v2291, %v2287
    %v2340 = vpack.c.b16 %v2296, %v2292
    %v2341 = vpack.c.b16 %v2297, %v2293
    %v2342 = vpack.c.b16 %v2298, %v2294
    %v2343 = vpack.c.b16 %v2299, %v2295
    %v2344 = vpack.c.b16 %v2304, %v2300
    %v2345 = vpack.c.b16 %v2305, %v2301
    %v2346 = vpack.c.b16 %v2306, %v2302
    %v2347 = vpack.c.b16 %v2307, %v2303
    %v2348 = vpack.c.b16 %v2312, %v2308
    %v2349 = vpack.c.b16 %v2313, %v2309
    %v2350 = vpack.c.b16 %v2314, %v2310
    %v2351 = vpack.c.b16 %v2315, %v2311
    %v2352 = vpack.c.b16 %v2320, %v2316
    %v2353 = vpack.c.b16 %v2321, %v2317
    %v2354 = vpack.c.b16 %v2322, %v2318
    %v2355 = vpack.c.b16 %v2323, %v2319
    %2388 = vmatprep.subr.bf16.mxu0 %v2325
    %2389 = vmatpush1.bf16.msra.mxu0 %v2324
    %2390 = vmatprep.subr.bf16.mxu0 %v2329
    %2391 = vmatpush1.bf16.msra.mxu0 %v2328
    %2392 = vmatprep.subr.bf16.mxu0 %v2333
    %2393 = vmatpush1.bf16.msra.mxu0 %v2332
    %2394 = vmatprep.subr.bf16.mxu0 %v2337
    %2395 = vmatpush1.bf16.msra.mxu0 %v2336
    %2396 = vmatprep.subr.bf16.mxu0 %v2341
    %2397 = vmatpush1.bf16.msra.mxu0 %v2340
    %2398 = vmatprep.subr.bf16.mxu0 %v2345
    %2399 = vmatpush1.bf16.msra.mxu0 %v2344
    %2400 = vmatprep.subr.bf16.mxu0 %v2349
    %2401 = vmatpush1.bf16.msra.mxu0 %v2348
    %2402 = vmatprep.subr.bf16.mxu0 %v2353
    %2403 = vmatpush1.bf16.msra.mxu0 %v2352
    %2404 = vmatprep.subr.bf16.mxu0 0
    %2405 = vmatpush1.bf16.msra.mxu0 0
    %2406 = vmatprep.subr.bf16.mxu0 0
    %2407 = vmatpush1.bf16.msra.mxu0 0
    %2408 = vmatprep.subr.bf16.mxu0 0
    %2409 = vmatpush1.bf16.msra.mxu0 0
    %2410 = vmatprep.subr.bf16.mxu0 0
    %2411 = vmatpush1.bf16.msra.mxu0 0
    %2412 = vmatprep.subr.bf16.mxu0 0
    %2413 = vmatpush1.bf16.msra.mxu0 0
    %2414 = vmatprep.subr.bf16.mxu0 0
    %2415 = vmatpush1.bf16.msra.mxu0 0
    %2416 = vmatprep.subr.bf16.mxu0 0
    %2417 = vmatpush1.bf16.msra.mxu0 0
    %2418 = vmatprep.subr.bf16.mxu0 0
    %2419 = vmatpush1.bf16.msra.mxu0 0
    %2420 = vmatprep.mubr.bf16.mxu0 0
    %2421 = vmatmul.mubr.bf16.gmra.mrb[0].mxu0 %v2204
    %v2422 = vpop.f32.mrb[0].mxu0
    %v2423 = vadd.f32 %v2211, %v2422
    %v2424 = vpop.f32.mrb[0].mxu0
    %v2425 = vadd.f32 %v2215, %v2424
    %v2426 = vpop.f32.mrb[0].mxu0
    %v2427 = vadd.f32 %v2211, %v2426
    %v2428 = vpop.f32.mrb[0].mxu0
    %v2429 = vadd.f32 %v2215, %v2428
    %2430 = vdwg.mxu0
    %2431 = vmatprep.subr.bf16.mxu0 %v2327
    %2432 = vmatpush1.bf16.msra.mxu0 %v2326
    %2433 = vmatprep.subr.bf16.mxu0 %v2331
    %2434 = vmatpush1.bf16.msra.mxu0 %v2330
    %2435 = vmatprep.subr.bf16.mxu0 %v2335
    %2436 = vmatpush1.bf16.msra.mxu0 %v2334
    %2437 = vmatprep.subr.bf16.mxu0 %v2339
    %2438 = vmatpush1.bf16.msra.mxu0 %v2338
    %2439 = vmatprep.subr.bf16.mxu0 %v2343
    %2440 = vmatpush1.bf16.msra.mxu0 %v2342
    %2441 = vmatprep.subr.bf16.mxu0 %v2347
    %2442 = vmatpush1.bf16.msra.mxu0 %v2346
    %2443 = vmatprep.subr.bf16.mxu0 %v2351
    %2444 = vmatpush1.bf16.msra.mxu0 %v2350
    %2445 = vmatprep.subr.bf16.mxu0 %v2355
    %2446 = vmatpush1.bf16.msra.mxu0 %v2354
    %2447 = vmatprep.subr.bf16.mxu0 0
    %2448 = vmatpush1.bf16.msra.mxu0 0
    %2449 = vmatprep.subr.bf16.mxu0 0
    %2450 = vmatpush1.bf16.msra.mxu0 0
    %2451 = vmatprep.subr.bf16.mxu0 0
    %2452 = vmatpush1.bf16.msra.mxu0 0
    %2453 = vmatprep.subr.bf16.mxu0 0
    %2454 = vmatpush1.bf16.msra.mxu0 0
    %2455 = vmatprep.subr.bf16.mxu0 0
    %2456 = vmatpush1.bf16.msra.mxu0 0
    %2457 = vmatprep.subr.bf16.mxu0 0
    %2458 = vmatpush1.bf16.msra.mxu0 0
    %2459 = vmatprep.subr.bf16.mxu0 0
    %2460 = vmatpush1.bf16.msra.mxu0 0
    %2461 = vmatprep.subr.bf16.mxu0 0
    %2462 = vmatpush1.bf16.msra.mxu0 0
    %2463 = vmatprep.mubr.bf16.mxu0 0
    %2464 = vmatmul.mubr.bf16.gmra.mrb[0].mxu0 %v2204
    %v2465 = vpop.f32.mrb[0].mxu0
    %v2466 = vadd.f32 %v2219, %v2465
    %v2467 = vpop.f32.mrb[0].mxu0
    %v2468 = vadd.f32 %v2223, %v2467
    %v2469 = vpop.f32.mrb[0].mxu0
    %v2470 = vadd.f32 %v2219, %v2469
    %v2471 = vpop.f32.mrb[0].mxu0
    %v2472 = vadd.f32 %v2223, %v2471
    %2473 = vdwg.mxu0
    %v2474 = vmax.f32 %v2423, 0.0
    %v2475 = vmax.f32 %v2425, 0.0
    %v2476 = vmax.f32 %v2466, 0.0
    %v2477 = vmax.f32 %v2468, 0.0
    %v2478 = vmax.f32 %v2427, 0.0
    %v2479 = vmax.f32 %v2429, 0.0
    %v2480 = vmax.f32 %v2470, 0.0
    %v2481 = vmax.f32 %v2472, 0.0
    %v2482 = vpack.c.bf16 %v2478, %v2474
    %v2483 = vpack.c.bf16 %v2479, %v2475
    %v2484 = vpack.c.bf16 %v2480, %v2476
    %v2485 = vpack.c.bf16 %v2481, %v2477
    %s2486 = scalar_lea.vmem [#allocation23], 256
    %v2487 = vld [vmem:[%s2486] sm:$0xf]
    %v2488 = vld [vmem:[%s2486 + $0x4] sm:$0xf]
    %v2489 = vld [vmem:[%s2486 + $0x8] sm:$0xf]
    %v2490 = vld [vmem:[%s2486 + $0xc] sm:$0xf]
    %v2491 = vld [vmem:[%s2486 + $0x10] sm:$0xf]
    %v2492 = vld [vmem:[%s2486 + $0x14] sm:$0xf]
    %v2493 = vld [vmem:[%s2486 + $0x18] sm:$0xf]
    %v2494 = vld [vmem:[%s2486 + $0x1c] sm:$0xf]
    %v2495 = vld [vmem:[%s2486 + $0x20] sm:$0xf]
    %v2496 = vld [vmem:[%s2486 + $0x24] sm:$0xf]
    %v2497 = vld [vmem:[%s2486 + $0x28] sm:$0xf]
    %v2498 = vld [vmem:[%s2486 + $0x2c] sm:$0xf]
    %v2499 = vld [vmem:[%s2486 + $0x30] sm:$0xf]
    %v2500 = vld [vmem:[%s2486 + $0x34] sm:$0xf]
    %v2501 = vld [vmem:[%s2486 + $0x38] sm:$0xf]
    %v2502 = vld [vmem:[%s2486 + $0x3c] sm:$0xf]
    %v2503 = vld [vmem:[%s2486 + $0x40] sm:$0xf]
    %v2504 = vld [vmem:[%s2486 + $0x44] sm:$0xf]
    %v2505 = vld [vmem:[%s2486 + $0x48] sm:$0xf]
    %v2506 = vld [vmem:[%s2486 + $0x4c] sm:$0xf]
    %v2507 = vld [vmem:[%s2486 + $0x50] sm:$0xf]
    %v2508 = vld [vmem:[%s2486 + $0x54] sm:$0xf]
    %v2509 = vld [vmem:[%s2486 + $0x58] sm:$0xf]
    %v2510 = vld [vmem:[%s2486 + $0x5c] sm:$0xf]
    %v2511 = vld [vmem:[%s2486 + $0x60] sm:$0xf]
    %v2512 = vld [vmem:[%s2486 + $0x64] sm:$0xf]
    %v2513 = vld [vmem:[%s2486 + $0x68] sm:$0xf]
    %v2514 = vld [vmem:[%s2486 + $0x6c] sm:$0xf]
    %v2515 = vld [vmem:[%s2486 + $0x70] sm:$0xf]
    %v2516 = vld [vmem:[%s2486 + $0x74] sm:$0xf]
    %v2517 = vld [vmem:[%s2486 + $0x78] sm:$0xf]
    %v2518 = vld [vmem:[%s2486 + $0x7c] sm:$0xf]
    %v2519 = vld [vmem:[%s2486 + $0x80] sm:$0xf]
    %v2520 = vld [vmem:[%s2486 + $0x84] sm:$0xf]
    %v2521 = vld [vmem:[%s2486 + $0x88] sm:$0xf]
    %v2522 = vld [vmem:[%s2486 + $0x8c] sm:$0xf]
    %v2523 = vld [vmem:[%s2486 + $0x90] sm:$0xf]
    %v2524 = vld [vmem:[%s2486 + $0x94] sm:$0xf]
    %v2525 = vld [vmem:[%s2486 + $0x98] sm:$0xf]
    %v2526 = vld [vmem:[%s2486 + $0x9c] sm:$0xf]
    %v2527 = vld [vmem:[%s2486 + $0xa0] sm:$0xf]
    %v2528 = vld [vmem:[%s2486 + $0xa4] sm:$0xf]
    %v2529 = vld [vmem:[%s2486 + $0xa8] sm:$0xf]
    %v2530 = vld [vmem:[%s2486 + $0xac] sm:$0xf]
    %v2531 = vld [vmem:[%s2486 + $0xb0] sm:$0xf]
    %v2532 = vld [vmem:[%s2486 + $0xb4] sm:$0xf]
    %v2533 = vld [vmem:[%s2486 + $0xb8] sm:$0xf]
    %v2534 = vld [vmem:[%s2486 + $0xbc] sm:$0xf]
    %v2535 = vld [vmem:[%s2486 + $0xc0] sm:$0xf]
    %v2536 = vld [vmem:[%s2486 + $0xc4] sm:$0xf]
    %v2537 = vld [vmem:[%s2486 + $0xc8] sm:$0xf]
    %v2538 = vld [vmem:[%s2486 + $0xcc] sm:$0xf]
    %v2539 = vld [vmem:[%s2486 + $0xd0] sm:$0xf]
    %v2540 = vld [vmem:[%s2486 + $0xd4] sm:$0xf]
    %v2541 = vld [vmem:[%s2486 + $0xd8] sm:$0xf]
    %v2542 = vld [vmem:[%s2486 + $0xdc] sm:$0xf]
    %v2543 = vld [vmem:[%s2486 + $0xe0] sm:$0xf]
    %v2544 = vld [vmem:[%s2486 + $0xe4] sm:$0xf]
    %v2545 = vld [vmem:[%s2486 + $0xe8] sm:$0xf]
    %v2546 = vld [vmem:[%s2486 + $0xec] sm:$0xf]
    %v2547 = vld [vmem:[%s2486 + $0xf0] sm:$0xf]
    %v2548 = vld [vmem:[%s2486 + $0xf4] sm:$0xf]
    %v2549 = vld [vmem:[%s2486 + $0xf8] sm:$0xf]
    %v2550 = vld [vmem:[%s2486 + $0xfc] sm:$0xf]
    %s2551 = scalar_lea.vmem [#allocation25], 1
    %v2552 = vld [vmem:[%s2551] sm:$0x1]
    %v2554 = vlaneseq
    %v2555 = vshrl.u32 %v2554, 7
    %v2556 = vsub.s32 0, %v2555
    %v2557 = vrot.slane %v2552, %v2556
    %v2623 = vunpack.c.l.b16 %v2487
    %v2624 = vunpack.c.l.b16 %v2488
    %v2625 = vunpack.c.l.b16 %v2489
    %v2626 = vunpack.c.l.b16 %v2490
    %v2627 = vunpack.c.l.b16 %v2491
    %v2628 = vunpack.c.l.b16 %v2492
    %v2629 = vunpack.c.l.b16 %v2493
    %v2630 = vunpack.c.l.b16 %v2494
    %v2631 = vunpack.c.l.b16 %v2495
    %v2632 = vunpack.c.l.b16 %v2496
    %v2633 = vunpack.c.l.b16 %v2497
    %v2634 = vunpack.c.l.b16 %v2498
    %v2635 = vunpack.c.l.b16 %v2499
    %v2636 = vunpack.c.l.b16 %v2500
    %v2637 = vunpack.c.l.b16 %v2501
    %v2638 = vunpack.c.l.b16 %v2502
    %v2639 = vunpack.c.l.b16 %v2503
    %v2640 = vunpack.c.l.b16 %v2504
    %v2641 = vunpack.c.l.b16 %v2505
    %v2642 = vunpack.c.l.b16 %v2506
    %v2643 = vunpack.c.l.b16 %v2507
    %v2644 = vunpack.c.l.b16 %v2508
    %v2645 = vunpack.c.l.b16 %v2509
    %v2646 = vunpack.c.l.b16 %v2510
    %v2647 = vunpack.c.l.b16 %v2511
    %v2648 = vunpack.c.l.b16 %v2512
    %v2649 = vunpack.c.l.b16 %v2513
    %v2650 = vunpack.c.l.b16 %v2514
    %v2651 = vunpack.c.l.b16 %v2515
    %v2652 = vunpack.c.l.b16 %v2516
    %v2653 = vunpack.c.l.b16 %v2517
    %v2654 = vunpack.c.l.b16 %v2518
    %v2655 = vunpack.c.l.b16 %v2519
    %v2656 = vunpack.c.l.b16 %v2520
    %v2657 = vunpack.c.l.b16 %v2521
    %v2658 = vunpack.c.l.b16 %v2522
    %v2659 = vunpack.c.l.b16 %v2523
    %v2660 = vunpack.c.l.b16 %v2524
    %v2661 = vunpack.c.l.b16 %v2525
    %v2662 = vunpack.c.l.b16 %v2526
    %v2663 = vunpack.c.l.b16 %v2527
    %v2664 = vunpack.c.l.b16 %v2528
    %v2665 = vunpack.c.l.b16 %v2529
    %v2666 = vunpack.c.l.b16 %v2530
    %v2667 = vunpack.c.l.b16 %v2531
    %v2668 = vunpack.c.l.b16 %v2532
    %v2669 = vunpack.c.l.b16 %v2533
    %v2670 = vunpack.c.l.b16 %v2534
    %v2671 = vunpack.c.l.b16 %v2535
    %v2672 = vunpack.c.l.b16 %v2536
    %v2673 = vunpack.c.l.b16 %v2537
    %v2674 = vunpack.c.l.b16 %v2538
    %v2675 = vunpack.c.l.b16 %v2539
    %v2676 = vunpack.c.l.b16 %v2540
    %v2677 = vunpack.c.l.b16 %v2541
    %v2678 = vunpack.c.l.b16 %v2542
    %v2679 = vunpack.c.l.b16 %v2543
    %v2680 = vunpack.c.l.b16 %v2544
    %v2681 = vunpack.c.l.b16 %v2545
    %v2682 = vunpack.c.l.b16 %v2546
    %v2683 = vunpack.c.l.b16 %v2547
    %v2684 = vunpack.c.l.b16 %v2548
    %v2685 = vunpack.c.l.b16 %v2549
    %v2686 = vunpack.c.l.b16 %v2550
    %v2687 = vpack.c.b16 %v2624, %v2623
    %v2688 = vpack.c.b16 %v2626, %v2625
    %v2689 = vpack.c.b16 %v2628, %v2627
    %v2690 = vpack.c.b16 %v2630, %v2629
    %v2691 = vpack.c.b16 %v2632, %v2631
    %v2692 = vpack.c.b16 %v2634, %v2633
    %v2693 = vpack.c.b16 %v2636, %v2635
    %v2694 = vpack.c.b16 %v2638, %v2637
    %v2695 = vpack.c.b16 %v2640, %v2639
    %v2696 = vpack.c.b16 %v2642, %v2641
    %v2697 = vpack.c.b16 %v2644, %v2643
    %v2698 = vpack.c.b16 %v2646, %v2645
    %v2699 = vpack.c.b16 %v2648, %v2647
    %v2700 = vpack.c.b16 %v2650, %v2649
    %v2701 = vpack.c.b16 %v2652, %v2651
    %v2702 = vpack.c.b16 %v2654, %v2653
    %v2703 = vpack.c.b16 %v2656, %v2655
    %v2704 = vpack.c.b16 %v2658, %v2657
    %v2705 = vpack.c.b16 %v2660, %v2659
    %v2706 = vpack.c.b16 %v2662, %v2661
    %v2707 = vpack.c.b16 %v2664, %v2663
    %v2708 = vpack.c.b16 %v2666, %v2665
    %v2709 = vpack.c.b16 %v2668, %v2667
    %v2710 = vpack.c.b16 %v2670, %v2669
    %v2711 = vpack.c.b16 %v2672, %v2671
    %v2712 = vpack.c.b16 %v2674, %v2673
    %v2713 = vpack.c.b16 %v2676, %v2675
    %v2714 = vpack.c.b16 %v2678, %v2677
    %v2715 = vpack.c.b16 %v2680, %v2679
    %v2716 = vpack.c.b16 %v2682, %v2681
    %v2717 = vpack.c.b16 %v2684, %v2683
    %v2718 = vpack.c.b16 %v2686, %v2685
    %2751 = vmatprep.subr.bf16.mxu0 0
    %2752 = vmatpush1.bf16.msra.mxu0 %v2687
    %2753 = vmatprep.subr.bf16.mxu0 0
    %2754 = vmatpush1.bf16.msra.mxu0 %v2688
    %2755 = vmatprep.subr.bf16.mxu0 0
    %2756 = vmatpush1.bf16.msra.mxu0 %v2689
    %2757 = vmatprep.subr.bf16.mxu0 0
    %2758 = vmatpush1.bf16.msra.mxu0 %v2690
    %2759 = vmatprep.subr.bf16.mxu0 0
    %2760 = vmatpush1.bf16.msra.mxu0 %v2691
    %2761 = vmatprep.subr.bf16.mxu0 0
    %2762 = vmatpush1.bf16.msra.mxu0 %v2692
    %2763 = vmatprep.subr.bf16.mxu0 0
    %2764 = vmatpush1.bf16.msra.mxu0 %v2693
    %2765 = vmatprep.subr.bf16.mxu0 0
    %2766 = vmatpush1.bf16.msra.mxu0 %v2694
    %2767 = vmatprep.subr.bf16.mxu0 0
    %2768 = vmatpush1.bf16.msra.mxu0 %v2695
    %2769 = vmatprep.subr.bf16.mxu0 0
    %2770 = vmatpush1.bf16.msra.mxu0 %v2696
    %2771 = vmatprep.subr.bf16.mxu0 0
    %2772 = vmatpush1.bf16.msra.mxu0 %v2697
    %2773 = vmatprep.subr.bf16.mxu0 0
    %2774 = vmatpush1.bf16.msra.mxu0 %v2698
    %2775 = vmatprep.subr.bf16.mxu0 0
    %2776 = vmatpush1.bf16.msra.mxu0 %v2699
    %2777 = vmatprep.subr.bf16.mxu0 0
    %2778 = vmatpush1.bf16.msra.mxu0 %v2700
    %2779 = vmatprep.subr.bf16.mxu0 0
    %2780 = vmatpush1.bf16.msra.mxu0 %v2701
    %2781 = vmatprep.subr.bf16.mxu0 0
    %2782 = vmatpush1.bf16.msra.mxu0 %v2702
    %2783 = vmatprep.mubr.bf16.mxu0 %v2483
    %2784 = vmatmul.mubr.bf16.gmra.mrb[0].mxu0 %v2482
    %v2785 = vpop.f32.mrb[0].mxu0
    %v2786 = vadd.f32 %v2557, %v2785
    %v2787 = vpop.f32.mrb[0].mxu0
    %v2788 = vpop.f32.mrb[0].mxu0
    %v2789 = vadd.f32 %v2557, %v2788
    %v2790 = vpop.f32.mrb[0].mxu0
    %2791 = vdwg.mxu0
    %2792 = vmatprep.subr.bf16.mxu0 0
    %2793 = vmatpush1.bf16.msra.mxu0 %v2703
    %2794 = vmatprep.subr.bf16.mxu0 0
    %2795 = vmatpush1.bf16.msra.mxu0 %v2704
    %2796 = vmatprep.subr.bf16.mxu0 0
    %2797 = vmatpush1.bf16.msra.mxu0 %v2705
    %2798 = vmatprep.subr.bf16.mxu0 0
    %2799 = vmatpush1.bf16.msra.mxu0 %v2706
    %2800 = vmatprep.subr.bf16.mxu0 0
    %2801 = vmatpush1.bf16.msra.mxu0 %v2707
    %2802 = vmatprep.subr.bf16.mxu0 0
    %2803 = vmatpush1.bf16.msra.mxu0 %v2708
    %2804 = vmatprep.subr.bf16.mxu0 0
    %2805 = vmatpush1.bf16.msra.mxu0 %v2709
    %2806 = vmatprep.subr.bf16.mxu0 0
    %2807 = vmatpush1.bf16.msra.mxu0 %v2710
    %2808 = vmatprep.subr.bf16.mxu0 0
    %2809 = vmatpush1.bf16.msra.mxu0 %v2711
    %2810 = vmatprep.subr.bf16.mxu0 0
    %2811 = vmatpush1.bf16.msra.mxu0 %v2712
    %2812 = vmatprep.subr.bf16.mxu0 0
    %2813 = vmatpush1.bf16.msra.mxu0 %v2713
    %2814 = vmatprep.subr.bf16.mxu0 0
    %2815 = vmatpush1.bf16.msra.mxu0 %v2714
    %2816 = vmatprep.subr.bf16.mxu0 0
    %2817 = vmatpush1.bf16.msra.mxu0 %v2715
    %2818 = vmatprep.subr.bf16.mxu0 0
    %2819 = vmatpush1.bf16.msra.mxu0 %v2716
    %2820 = vmatprep.subr.bf16.mxu0 0
    %2821 = vmatpush1.bf16.msra.mxu0 %v2717
    %2822 = vmatprep.subr.bf16.mxu0 0
    %2823 = vmatpush1.bf16.msra.mxu0 %v2718
    %2824 = vmatprep.mubr.bf16.mxu0 %v2485
    %2825 = vmatmul.mubr.bf16.gmra.mrb[0].mxu0 %v2484
    %v2826 = vpop.f32.mrb[0].mxu0
    %v2827 = vadd.f32 %v2786, %v2826
    %v2828 = vpop.f32.mrb[0].mxu0
    %v2829 = vpop.f32.mrb[0].mxu0
    %v2830 = vadd.f32 %v2789, %v2829
    %v2831 = vpop.f32.mrb[0].mxu0
    %2832 = vdwg.mxu0
    %v2833 = vadd.f32 %v2169, %v2827
    %v2834 = vadd.f32 %v2170, %v2830
    %s2835 = scalar_lea.vmem [#allocation17], 1
    %v2836 = vld [vmem:[%s2835] sm:$0x1]
    %s2837 = scalar_lea.vmem [#allocation19], 1
    %v2838 = vld [vmem:[%s2837] sm:$0x1]
    %2839 = vadd.xlane.f32.xlu0 %v2833
    %v2840 = vpop.xlane.xlu0 %2839
    %2841 = vadd.xlane.f32.xlu0 %v2834
    %v2842 = vpop.xlane.xlu0 %2841
    %v2843 = vmul.f32 %v2840, %v1277
    %v2844 = vmul.f32 %v2842, %v1277
    %v2845 = vsub.f32 %v2833, %v2843
    %v2846 = vsub.f32 %v2834, %v2844
    %v2847 = vmul.f32 %v2845, %v2845
    %v2848 = vmul.f32 %v2846, %v2846
    %2849 = vadd.xlane.f32.xlu0 %v2847
    %v2850 = vpop.xlane.xlu0 %2849
    %2851 = vadd.xlane.f32.xlu0 %v2848
    %v2852 = vpop.xlane.xlu0 %2851
    %v2853 = vmul.f32 %v2850, %v1277
    %v2854 = vmul.f32 %v2852, %v1277
    %v2855 = vadd.f32 %v2853, 1e-05
    %v2856 = vadd.f32 %v2854, 1e-05
    %v2857 = vrsqrt.pop %v2855
    %v2858 = vrsqrt.pop %v2856
    %v2859 = vmul.f32 %v2845, %v2857
    %v2860 = vmul.f32 %v2846, %v2858
    %v2862 = vlaneseq
    %v2863 = vshrl.u32 %v2862, 7
    %v2864 = vsub.s32 0, %v2863
    %v2865 = vrot.slane %v2836, %v2864
    %v2867 = vmul.f32 %v2859, %v2865
    %v2868 = vmul.f32 %v2860, %v2865
    %v2870 = vlaneseq
    %v2871 = vshrl.u32 %v2870, 7
    %v2872 = vsub.s32 0, %v2871
    %v2873 = vrot.slane %v2838, %v2872
    %v2875 = vadd.f32 %v2867, %v2873
    %v2876 = vadd.f32 %v2868, %v2873
    %v2877 = vld [vmem:[#allocation26] sm:$0xf]
    %v2878 = vld [vmem:[#allocation26 + $0x4] sm:$0xf]
    %v2879 = vld [vmem:[#allocation26 + $0x8] sm:$0xf]
    %v2880 = vld [vmem:[#allocation26 + $0xc] sm:$0xf]
    %v2881 = vld [vmem:[#allocation26 + $0x10] sm:$0xf]
    %v2882 = vld [vmem:[#allocation26 + $0x14] sm:$0xf]
    %v2883 = vld [vmem:[#allocation26 + $0x18] sm:$0xf]
    %v2884 = vld [vmem:[#allocation26 + $0x1c] sm:$0xf]
    %v2885 = vld [vmem:[#allocation26 + $0x20] sm:$0xf]
    %v2886 = vld [vmem:[#allocation26 + $0x24] sm:$0xf]
    %v2887 = vld [vmem:[#allocation26 + $0x28] sm:$0xf]
    %v2888 = vld [vmem:[#allocation26 + $0x2c] sm:$0xf]
    %v2889 = vld [vmem:[#allocation26 + $0x30] sm:$0xf]
    %v2890 = vld [vmem:[#allocation26 + $0x34] sm:$0xf]
    %v2891 = vld [vmem:[#allocation26 + $0x38] sm:$0xf]
    %v2892 = vld [vmem:[#allocation26 + $0x3c] sm:$0xf]
    %v2893 = vpack.c.bf16 %v2876, %v2875
    %v2894 = vld [vmem:[#allocation28] sm:$0x1]
    %v2896 = vlaneseq
    %v2897 = vshrl.u32 %v2896, 7
    %v2898 = vsub.s32 0, %v2897
    %v2899 = vrot.slane %v2894, %v2898
    %v2917 = vunpack.c.l.b16 %v2877
    %v2918 = vunpack.c.l.b16 %v2878
    %v2919 = vunpack.c.l.b16 %v2879
    %v2920 = vunpack.c.l.b16 %v2880
    %v2921 = vunpack.c.l.b16 %v2881
    %v2922 = vunpack.c.l.b16 %v2882
    %v2923 = vunpack.c.l.b16 %v2883
    %v2924 = vunpack.c.l.b16 %v2884
    %v2925 = vunpack.c.l.b16 %v2885
    %v2926 = vunpack.c.l.b16 %v2886
    %v2927 = vunpack.c.l.b16 %v2887
    %v2928 = vunpack.c.l.b16 %v2888
    %v2929 = vunpack.c.l.b16 %v2889
    %v2930 = vunpack.c.l.b16 %v2890
    %v2931 = vunpack.c.l.b16 %v2891
    %v2932 = vunpack.c.l.b16 %v2892
    %v2933 = vpack.c.b16 %v2918, %v2917
    %v2934 = vpack.c.b16 %v2920, %v2919
    %v2935 = vpack.c.b16 %v2922, %v2921
    %v2936 = vpack.c.b16 %v2924, %v2923
    %v2937 = vpack.c.b16 %v2926, %v2925
    %v2938 = vpack.c.b16 %v2928, %v2927
    %v2939 = vpack.c.b16 %v2930, %v2929
    %v2940 = vpack.c.b16 %v2932, %v2931
    %2949 = vmatprep.subr.bf16.mxu0 0
    %2950 = vmatpush1.bf16.msra.mxu0 %v2933
    %2951 = vmatprep.subr.bf16.mxu0 0
    %2952 = vmatpush1.bf16.msra.mxu0 %v2934
    %2953 = vmatprep.subr.bf16.mxu0 0
    %2954 = vmatpush1.bf16.msra.mxu0 %v2935
    %2955 = vmatprep.subr.bf16.mxu0 0
    %2956 = vmatpush1.bf16.msra.mxu0 %v2936
    %2957 = vmatprep.subr.bf16.mxu0 0
    %2958 = vmatpush1.bf16.msra.mxu0 %v2937
    %2959 = vmatprep.subr.bf16.mxu0 0
    %2960 = vmatpush1.bf16.msra.mxu0 %v2938
    %2961 = vmatprep.subr.bf16.mxu0 0
    %2962 = vmatpush1.bf16.msra.mxu0 %v2939
    %2963 = vmatprep.subr.bf16.mxu0 0
    %2964 = vmatpush1.bf16.msra.mxu0 %v2940
    %2965 = vmatprep.subr.bf16.mxu0 0
    %2966 = vmatpush1.bf16.msra.mxu0 0
    %2967 = vmatprep.subr.bf16.mxu0 0
    %2968 = vmatpush1.bf16.msra.mxu0 0
    %2969 = vmatprep.subr.bf16.mxu0 0
    %2970 = vmatpush1.bf16.msra.mxu0 0
    %2971 = vmatprep.subr.bf16.mxu0 0
    %2972 = vmatpush1.bf16.msra.mxu0 0
    %2973 = vmatprep.subr.bf16.mxu0 0
    %2974 = vmatpush1.bf16.msra.mxu0 0
    %2975 = vmatprep.subr.bf16.mxu0 0
    %2976 = vmatpush1.bf16.msra.mxu0 0
    %2977 = vmatprep.subr.bf16.mxu0 0
    %2978 = vmatpush1.bf16.msra.mxu0 0
    %2979 = vmatprep.subr.bf16.mxu0 0
    %2980 = vmatpush1.bf16.msra.mxu0 0
    %2981 = vmatprep.mubr.bf16.mxu0 0
    %2982 = vmatmul.mubr.bf16.gmra.mrb[0].mxu0 %v2893
    %v2983 = vpop.f32.mrb[0].mxu0
    %v2984 = vadd.f32 %v2899, %v2983
    %v2985 = vpop.f32.mrb[0].mxu0
    %v2986 = vpop.f32.mrb[0].mxu0
    %v2987 = vadd.f32 %v2899, %v2986
    %v2988 = vpop.f32.mrb[0].mxu0
    %2989 = vdwg.mxu0
    %v2990 = vmax.f32 %v2984, 0.0
    %v2991 = vmax.f32 %v2987, 0.0
    %v2992 = vld [vmem:[%s17] sm:$0xf]
    %v2993 = vld [vmem:[%s17 + $0x4] sm:$0xf]
    %v2994 = vld [vmem:[%s17 + $0x8] sm:$0xf]
    %v2995 = vld [vmem:[%s17 + $0xc] sm:$0xf]
    %v2996 = vld [vmem:[%s17 + $0x10] sm:$0xf]
    %v2997 = vld [vmem:[%s17 + $0x14] sm:$0xf]
    %v2998 = vld [vmem:[%s17 + $0x18] sm:$0xf]
    %v2999 = vld [vmem:[%s17 + $0x1c] sm:$0xf]
    %v3000 = vld [vmem:[%s17 + $0x20] sm:$0xf]
    %v3001 = vld [vmem:[%s17 + $0x24] sm:$0xf]
    %v3002 = vld [vmem:[%s17 + $0x28] sm:$0xf]
    %v3003 = vld [vmem:[%s17 + $0x2c] sm:$0xf]
    %v3004 = vld [vmem:[%s17 + $0x30] sm:$0xf]
    %v3005 = vld [vmem:[%s17 + $0x34] sm:$0xf]
    %v3006 = vld [vmem:[%s17 + $0x38] sm:$0xf]
    %v3007 = vld [vmem:[%s17 + $0x3c] sm:$0xf]
    %v3008 = vpack.c.bf16 %v2991, %v2990
    %v3009 = vld [vmem:[%s18] sm:$0x1]
    %v3011 = vlaneseq
    %v3012 = vshrl.u32 %v3011, 7
    %v3013 = vsub.s32 0, %v3012
    %v3014 = vrot.slane %v3009, %v3013
    %v3032 = vunpack.c.l.b16 %v2992
    %v3033 = vunpack.c.l.b16 %v2993
    %v3034 = vunpack.c.l.b16 %v2994
    %v3035 = vunpack.c.l.b16 %v2995
    %v3036 = vunpack.c.l.b16 %v2996
    %v3037 = vunpack.c.l.b16 %v2997
    %v3038 = vunpack.c.l.b16 %v2998
    %v3039 = vunpack.c.l.b16 %v2999
    %v3040 = vunpack.c.l.b16 %v3000
    %v3041 = vunpack.c.l.b16 %v3001
    %v3042 = vunpack.c.l.b16 %v3002
    %v3043 = vunpack.c.l.b16 %v3003
    %v3044 = vunpack.c.l.b16 %v3004
    %v3045 = vunpack.c.l.b16 %v3005
    %v3046 = vunpack.c.l.b16 %v3006
    %v3047 = vunpack.c.l.b16 %v3007
    %v3048 = vpack.c.b16 %v3033, %v3032
    %v3049 = vpack.c.b16 %v3035, %v3034
    %v3050 = vpack.c.b16 %v3037, %v3036
    %v3051 = vpack.c.b16 %v3039, %v3038
    %v3052 = vpack.c.b16 %v3041, %v3040
    %v3053 = vpack.c.b16 %v3043, %v3042
    %v3054 = vpack.c.b16 %v3045, %v3044
    %v3055 = vpack.c.b16 %v3047, %v3046
    %3064 = vmatprep.subr.bf16.mxu0 0
    %3065 = vmatpush1.bf16.msra.mxu0 %v3048
    %3066 = vmatprep.subr.bf16.mxu0 0
    %3067 = vmatpush1.bf16.msra.mxu0 %v3049
    %3068 = vmatprep.subr.bf16.mxu0 0
    %3069 = vmatpush1.bf16.msra.mxu0 %v3050
    %3070 = vmatprep.subr.bf16.mxu0 0
    %3071 = vmatpush1.bf16.msra.mxu0 %v3051
    %3072 = vmatprep.subr.bf16.mxu0 0
    %3073 = vmatpush1.bf16.msra.mxu0 %v3052
    %3074 = vmatprep.subr.bf16.mxu0 0
    %3075 = vmatpush1.bf16.msra.mxu0 %v3053
    %3076 = vmatprep.subr.bf16.mxu0 0
    %3077 = vmatpush1.bf16.msra.mxu0 %v3054
    %3078 = vmatprep.subr.bf16.mxu0 0
    %3079 = vmatpush1.bf16.msra.mxu0 %v3055
    %3080 = vmatprep.subr.bf16.mxu0 0
    %3081 = vmatpush1.bf16.msra.mxu0 0
    %3082 = vmatprep.subr.bf16.mxu0 0
    %3083 = vmatpush1.bf16.msra.mxu0 0
    %3084 = vmatprep.subr.bf16.mxu0 0
    %3085 = vmatpush1.bf16.msra.mxu0 0
    %3086 = vmatprep.subr.bf16.mxu0 0
    %3087 = vmatpush1.bf16.msra.mxu0 0
    %3088 = vmatprep.subr.bf16.mxu0 0
    %3089 = vmatpush1.bf16.msra.mxu0 0
    %3090 = vmatprep.subr.bf16.mxu0 0
    %3091 = vmatpush1.bf16.msra.mxu0 0
    %3092 = vmatprep.subr.bf16.mxu0 0
    %3093 = vmatpush1.bf16.msra.mxu0 0
    %3094 = vmatprep.subr.bf16.mxu0 0
    %3095 = vmatpush1.bf16.msra.mxu0 0
    %3096 = vmatprep.mubr.bf16.mxu0 0
    %3097 = vmatmul.mubr.bf16.gmra.mrb[0].mxu0 %v3008
    %v3098 = vpop.f32.mrb[0].mxu0
    %v3099 = vadd.f32 %v3014, %v3098
    %v3100 = vpop.f32.mrb[0].mxu0
    %v3101 = vpop.f32.mrb[0].mxu0
    %v3102 = vadd.f32 %v3014, %v3101
    %v3103 = vpop.f32.mrb[0].mxu0
    %3104 = vdwg.mxu0
    %v3105 = vmax.f32 %v3099, 0.0
    %v3106 = vmax.f32 %v3102, 0.0
    %v3107 = vld [vmem:[#allocation29] sm:$0xff]
    %v3108 = vld [vmem:[#allocation29 + $0x8] sm:$0xff]
    %v3109 = vld [vmem:[#allocation29 + $0x10] sm:$0xff]
    %v3110 = vld [vmem:[#allocation29 + $0x18] sm:$0xff]
    %v3111 = vld [vmem:[#allocation29 + $0x20] sm:$0xff]
    %v3112 = vld [vmem:[#allocation29 + $0x28] sm:$0xff]
    %v3113 = vld [vmem:[#allocation29 + $0x30] sm:$0xff]
    %v3114 = vld [vmem:[#allocation29 + $0x38] sm:$0xff]
    %v3115 = vld [vmem:[#allocation29 + $0x40] sm:$0xff]
    %v3116 = vld [vmem:[#allocation29 + $0x48] sm:$0xff]
    %v3117 = vld [vmem:[#allocation29 + $0x50] sm:$0xff]
    %v3118 = vld [vmem:[#allocation29 + $0x58] sm:$0xff]
    %v3119 = vld [vmem:[#allocation29 + $0x60] sm:$0xff]
    %v3120 = vld [vmem:[#allocation29 + $0x68] sm:$0xff]
    %v3121 = vld [vmem:[#allocation29 + $0x70] sm:$0xff]
    %v3122 = vld [vmem:[#allocation29 + $0x78] sm:$0xff]
    %v3123 = vld [vmem:[#allocation29 + $0x80] sm:$0xff]
    %v3124 = vld [vmem:[#allocation29 + $0x88] sm:$0xff]
    %v3125 = vld [vmem:[#allocation29 + $0x90] sm:$0xff]
    %v3126 = vld [vmem:[#allocation29 + $0x98] sm:$0xff]
    %v3127 = vld [vmem:[#allocation29 + $0xa0] sm:$0xff]
    %v3128 = vld [vmem:[#allocation29 + $0xa8] sm:$0xff]
    %v3129 = vld [vmem:[#allocation29 + $0xb0] sm:$0xff]
    %v3130 = vld [vmem:[#allocation29 + $0xb8] sm:$0xff]
    %v3131 = vld [vmem:[#allocation29 + $0xc0] sm:$0xff]
    %v3132 = vld [vmem:[#allocation29 + $0xc8] sm:$0xff]
    %v3133 = vld [vmem:[#allocation29 + $0xd0] sm:$0xff]
    %v3134 = vld [vmem:[#allocation29 + $0xd8] sm:$0xff]
    %v3135 = vld [vmem:[#allocation29 + $0xe0] sm:$0xff]
    %v3136 = vld [vmem:[#allocation29 + $0xe8] sm:$0xff]
    %v3137 = vld [vmem:[#allocation29 + $0xf0] sm:$0xff]
    %v3138 = vld [vmem:[#allocation29 + $0xf8] sm:$0xff]
    %v3139 = vld [vmem:[#allocation29 + $0x100] sm:$0xff]
    %v3140 = vld [vmem:[#allocation29 + $0x108] sm:$0xff]
    %v3141 = vld [vmem:[#allocation29 + $0x110] sm:$0xff]
    %v3142 = vld [vmem:[#allocation29 + $0x118] sm:$0xff]
    %v3143 = vld [vmem:[#allocation29 + $0x120] sm:$0xff]
    %v3144 = vld [vmem:[#allocation29 + $0x128] sm:$0xff]
    %v3145 = vld [vmem:[#allocation29 + $0x130] sm:$0xff]
    %v3146 = vld [vmem:[#allocation29 + $0x138] sm:$0xff]
    %v3147 = vld [vmem:[#allocation29 + $0x140] sm:$0xff]
    %v3148 = vld [vmem:[#allocation29 + $0x148] sm:$0xff]
    %v3149 = vld [vmem:[#allocation29 + $0x150] sm:$0xff]
    %v3150 = vld [vmem:[#allocation29 + $0x158] sm:$0xff]
    %v3151 = vld [vmem:[#allocation29 + $0x160] sm:$0xff]
    %v3152 = vld [vmem:[#allocation29 + $0x168] sm:$0xff]
    %v3153 = vld [vmem:[#allocation29 + $0x170] sm:$0xff]
    %v3154 = vld [vmem:[#allocation29 + $0x178] sm:$0xff]
    %v3155 = vld [vmem:[#allocation29 + $0x180] sm:$0xff]
    %v3156 = vld [vmem:[#allocation29 + $0x188] sm:$0xff]
    %v3157 = vld [vmem:[#allocation29 + $0x190] sm:$0xff]
    %v3158 = vld [vmem:[#allocation29 + $0x198] sm:$0xff]
    %v3159 = vld [vmem:[#allocation29 + $0x1a0] sm:$0xff]
    %v3160 = vld [vmem:[#allocation29 + $0x1a8] sm:$0xff]
    %v3161 = vld [vmem:[#allocation29 + $0x1b0] sm:$0xff]
    %v3162 = vld [vmem:[#allocation29 + $0x1b8] sm:$0xff]
    %v3163 = vld [vmem:[#allocation29 + $0x1c0] sm:$0xff]
    %v3164 = vld [vmem:[#allocation29 + $0x1c8] sm:$0xff]
    %v3165 = vld [vmem:[#allocation29 + $0x1d0] sm:$0xff]
    %v3166 = vld [vmem:[#allocation29 + $0x1d8] sm:$0xff]
    %v3167 = vld [vmem:[#allocation29 + $0x1e0] sm:$0xff]
    %v3168 = vld [vmem:[#allocation29 + $0x1e8] sm:$0xff]
    %v3169 = vld [vmem:[#allocation29 + $0x1f0] sm:$0xff]
    %v3170 = vld [vmem:[#allocation29 + $0x1f8] sm:$0xff]
    %v3171 = vpack.c.bf16 %v3106, %v3105
    %v3172 = vld [vmem:[%s20] sm:$0xff]
    %v3174 = vlaneseq
    %v3175 = vshrl.u32 %v3174, 7
    %v3176 = vsub.s32 0, %v3175
    %v3177 = vrot.slane %v3172, %v3176
    %v3178 = vlaneseq
    %v3179 = vshrl.u32 %v3178, 7
    %v3180 = vsub.s32 1, %v3179
    %v3181 = vrot.slane %v3172, %v3180
    %v3182 = vlaneseq
    %v3183 = vshrl.u32 %v3182, 7
    %v3184 = vsub.s32 2, %v3183
    %v3185 = vrot.slane %v3172, %v3184
    %v3186 = vlaneseq
    %v3187 = vshrl.u32 %v3186, 7
    %v3188 = vsub.s32 3, %v3187
    %v3189 = vrot.slane %v3172, %v3188
    %v3190 = vlaneseq
    %v3191 = vshrl.u32 %v3190, 7
    %v3192 = vsub.s32 4, %v3191
    %v3193 = vrot.slane %v3172, %v3192
    %v3194 = vlaneseq
    %v3195 = vshrl.u32 %v3194, 7
    %v3196 = vsub.s32 5, %v3195
    %v3197 = vrot.slane %v3172, %v3196
    %v3198 = vlaneseq
    %v3199 = vshrl.u32 %v3198, 7
    %v3200 = vsub.s32 6, %v3199
    %v3201 = vrot.slane %v3172, %v3200
    %v3202 = vlaneseq
    %v3203 = vshrl.u32 %v3202, 7
    %v3204 = vsub.s32 7, %v3203
    %v3205 = vrot.slane %v3172, %v3204
    %v3278 = vunpack.c.l.b16 %v3107
    %v3279 = vunpack.c.h.b16 %v3107
    %v3280 = vunpack.c.l.b16 %v3108
    %v3281 = vunpack.c.h.b16 %v3108
    %v3282 = vunpack.c.l.b16 %v3109
    %v3283 = vunpack.c.h.b16 %v3109
    %v3284 = vunpack.c.l.b16 %v3110
    %v3285 = vunpack.c.h.b16 %v3110
    %v3286 = vunpack.c.l.b16 %v3111
    %v3287 = vunpack.c.h.b16 %v3111
    %v3288 = vunpack.c.l.b16 %v3112
    %v3289 = vunpack.c.h.b16 %v3112
    %v3290 = vunpack.c.l.b16 %v3113
    %v3291 = vunpack.c.h.b16 %v3113
    %v3292 = vunpack.c.l.b16 %v3114
    %v3293 = vunpack.c.h.b16 %v3114
    %v3294 = vunpack.c.l.b16 %v3115
    %v3295 = vunpack.c.h.b16 %v3115
    %v3296 = vunpack.c.l.b16 %v3116
    %v3297 = vunpack.c.h.b16 %v3116
    %v3298 = vunpack.c.l.b16 %v3117
    %v3299 = vunpack.c.h.b16 %v3117
    %v3300 = vunpack.c.l.b16 %v3118
    %v3301 = vunpack.c.h.b16 %v3118
    %v3302 = vunpack.c.l.b16 %v3119
    %v3303 = vunpack.c.h.b16 %v3119
    %v3304 = vunpack.c.l.b16 %v3120
    %v3305 = vunpack.c.h.b16 %v3120
    %v3306 = vunpack.c.l.b16 %v3121
    %v3307 = vunpack.c.h.b16 %v3121
    %v3308 = vunpack.c.l.b16 %v3122
    %v3309 = vunpack.c.h.b16 %v3122
    %v3310 = vunpack.c.l.b16 %v3123
    %v3311 = vunpack.c.h.b16 %v3123
    %v3312 = vunpack.c.l.b16 %v3124
    %v3313 = vunpack.c.h.b16 %v3124
    %v3314 = vunpack.c.l.b16 %v3125
    %v3315 = vunpack.c.h.b16 %v3125
    %v3316 = vunpack.c.l.b16 %v3126
    %v3317 = vunpack.c.h.b16 %v3126
    %v3318 = vunpack.c.l.b16 %v3127
    %v3319 = vunpack.c.h.b16 %v3127
    %v3320 = vunpack.c.l.b16 %v3128
    %v3321 = vunpack.c.h.b16 %v3128
    %v3322 = vunpack.c.l.b16 %v3129
    %v3323 = vunpack.c.h.b16 %v3129
    %v3324 = vunpack.c.l.b16 %v3130
    %v3325 = vunpack.c.h.b16 %v3130
    %v3326 = vunpack.c.l.b16 %v3131
    %v3327 = vunpack.c.h.b16 %v3131
    %v3328 = vunpack.c.l.b16 %v3132
    %v3329 = vunpack.c.h.b16 %v3132
    %v3330 = vunpack.c.l.b16 %v3133
    %v3331 = vunpack.c.h.b16 %v3133
    %v3332 = vunpack.c.l.b16 %v3134
    %v3333 = vunpack.c.h.b16 %v3134
    %v3334 = vunpack.c.l.b16 %v3135
    %v3335 = vunpack.c.h.b16 %v3135
    %v3336 = vunpack.c.l.b16 %v3136
    %v3337 = vunpack.c.h.b16 %v3136
    %v3338 = vunpack.c.l.b16 %v3137
    %v3339 = vunpack.c.h.b16 %v3137
    %v3340 = vunpack.c.l.b16 %v3138
    %v3341 = vunpack.c.h.b16 %v3138
    %v3342 = vunpack.c.l.b16 %v3139
    %v3343 = vunpack.c.h.b16 %v3139
    %v3344 = vunpack.c.l.b16 %v3140
    %v3345 = vunpack.c.h.b16 %v3140
    %v3346 = vunpack.c.l.b16 %v3141
    %v3347 = vunpack.c.h.b16 %v3141
    %v3348 = vunpack.c.l.b16 %v3142
    %v3349 = vunpack.c.h.b16 %v3142
    %v3350 = vunpack.c.l.b16 %v3143
    %v3351 = vunpack.c.h.b16 %v3143
    %v3352 = vunpack.c.l.b16 %v3144
    %v3353 = vunpack.c.h.b16 %v3144
    %v3354 = vunpack.c.l.b16 %v3145
    %v3355 = vunpack.c.h.b16 %v3145
    %v3356 = vunpack.c.l.b16 %v3146
    %v3357 = vunpack.c.h.b16 %v3146
    %v3358 = vunpack.c.l.b16 %v3147
    %v3359 = vunpack.c.h.b16 %v3147
    %v3360 = vunpack.c.l.b16 %v3148
    %v3361 = vunpack.c.h.b16 %v3148
    %v3362 = vunpack.c.l.b16 %v3149
    %v3363 = vunpack.c.h.b16 %v3149
    %v3364 = vunpack.c.l.b16 %v3150
    %v3365 = vunpack.c.h.b16 %v3150
    %v3366 = vunpack.c.l.b16 %v3151
    %v3367 = vunpack.c.h.b16 %v3151
    %v3368 = vunpack.c.l.b16 %v3152
    %v3369 = vunpack.c.h.b16 %v3152
    %v3370 = vunpack.c.l.b16 %v3153
    %v3371 = vunpack.c.h.b16 %v3153
    %v3372 = vunpack.c.l.b16 %v3154
    %v3373 = vunpack.c.h.b16 %v3154
    %v3374 = vunpack.c.l.b16 %v3155
    %v3375 = vunpack.c.h.b16 %v3155
    %v3376 = vunpack.c.l.b16 %v3156
    %v3377 = vunpack.c.h.b16 %v3156
    %v3378 = vunpack.c.l.b16 %v3157
    %v3379 = vunpack.c.h.b16 %v3157
    %v3380 = vunpack.c.l.b16 %v3158
    %v3381 = vunpack.c.h.b16 %v3158
    %v3382 = vunpack.c.l.b16 %v3159
    %v3383 = vunpack.c.h.b16 %v3159
    %v3384 = vunpack.c.l.b16 %v3160
    %v3385 = vunpack.c.h.b16 %v3160
    %v3386 = vunpack.c.l.b16 %v3161
    %v3387 = vunpack.c.h.b16 %v3161
    %v3388 = vunpack.c.l.b16 %v3162
    %v3389 = vunpack.c.h.b16 %v3162
    %v3390 = vunpack.c.l.b16 %v3163
    %v3391 = vunpack.c.h.b16 %v3163
    %v3392 = vunpack.c.l.b16 %v3164
    %v3393 = vunpack.c.h.b16 %v3164
    %v3394 = vunpack.c.l.b16 %v3165
    %v3395 = vunpack.c.h.b16 %v3165
    %v3396 = vunpack.c.l.b16 %v3166
    %v3397 = vunpack.c.h.b16 %v3166
    %v3398 = vunpack.c.l.b16 %v3167
    %v3399 = vunpack.c.h.b16 %v3167
    %v3400 = vunpack.c.l.b16 %v3168
    %v3401 = vunpack.c.h.b16 %v3168
    %v3402 = vunpack.c.l.b16 %v3169
    %v3403 = vunpack.c.h.b16 %v3169
    %v3404 = vunpack.c.l.b16 %v3170
    %v3405 = vunpack.c.h.b16 %v3170
    %v3406 = vpack.c.b16 %v3286, %v3278
    %v3407 = vpack.c.b16 %v3287, %v3279
    %v3408 = vpack.c.b16 %v3288, %v3280
    %v3409 = vpack.c.b16 %v3289, %v3281
    %v3410 = vpack.c.b16 %v3290, %v3282
    %v3411 = vpack.c.b16 %v3291, %v3283
    %v3412 = vpack.c.b16 %v3292, %v3284
    %v3413 = vpack.c.b16 %v3293, %v3285
    %v3414 = vpack.c.b16 %v3302, %v3294
    %v3415 = vpack.c.b16 %v3303, %v3295
    %v3416 = vpack.c.b16 %v3304, %v3296
    %v3417 = vpack.c.b16 %v3305, %v3297
    %v3418 = vpack.c.b16 %v3306, %v3298
    %v3419 = vpack.c.b16 %v3307, %v3299
    %v3420 = vpack.c.b16 %v3308, %v3300
    %v3421 = vpack.c.b16 %v3309, %v3301
    %v3422 = vpack.c.b16 %v3318, %v3310
    %v3423 = vpack.c.b16 %v3319, %v3311
    %v3424 = vpack.c.b16 %v3320, %v3312
    %v3425 = vpack.c.b16 %v3321, %v3313
    %v3426 = vpack.c.b16 %v3322, %v3314
    %v3427 = vpack.c.b16 %v3323, %v3315
    %v3428 = vpack.c.b16 %v3324, %v3316
    %v3429 = vpack.c.b16 %v3325, %v3317
    %v3430 = vpack.c.b16 %v3334, %v3326
    %v3431 = vpack.c.b16 %v3335, %v3327
    %v3432 = vpack.c.b16 %v3336, %v3328
    %v3433 = vpack.c.b16 %v3337, %v3329
    %v3434 = vpack.c.b16 %v3338, %v3330
    %v3435 = vpack.c.b16 %v3339, %v3331
    %v3436 = vpack.c.b16 %v3340, %v3332
    %v3437 = vpack.c.b16 %v3341, %v3333
    %v3438 = vpack.c.b16 %v3350, %v3342
    %v3439 = vpack.c.b16 %v3351, %v3343
    %v3440 = vpack.c.b16 %v3352, %v3344
    %v3441 = vpack.c.b16 %v3353, %v3345
    %v3442 = vpack.c.b16 %v3354, %v3346
    %v3443 = vpack.c.b16 %v3355, %v3347
    %v3444 = vpack.c.b16 %v3356, %v3348
    %v3445 = vpack.c.b16 %v3357, %v3349
    %v3446 = vpack.c.b16 %v3366, %v3358
    %v3447 = vpack.c.b16 %v3367, %v3359
    %v3448 = vpack.c.b16 %v3368, %v3360
    %v3449 = vpack.c.b16 %v3369, %v3361
    %v3450 = vpack.c.b16 %v3370, %v3362
    %v3451 = vpack.c.b16 %v3371, %v3363
    %v3452 = vpack.c.b16 %v3372, %v3364
    %v3453 = vpack.c.b16 %v3373, %v3365
    %v3454 = vpack.c.b16 %v3382, %v3374
    %v3455 = vpack.c.b16 %v3383, %v3375
    %v3456 = vpack.c.b16 %v3384, %v3376
    %v3457 = vpack.c.b16 %v3385, %v3377
    %v3458 = vpack.c.b16 %v3386, %v3378
    %v3459 = vpack.c.b16 %v3387, %v3379
    %v3460 = vpack.c.b16 %v3388, %v3380
    %v3461 = vpack.c.b16 %v3389, %v3381
    %v3462 = vpack.c.b16 %v3398, %v3390
    %v3463 = vpack.c.b16 %v3399, %v3391
    %v3464 = vpack.c.b16 %v3400, %v3392
    %v3465 = vpack.c.b16 %v3401, %v3393
    %v3466 = vpack.c.b16 %v3402, %v3394
    %v3467 = vpack.c.b16 %v3403, %v3395
    %v3468 = vpack.c.b16 %v3404, %v3396
    %v3469 = vpack.c.b16 %v3405, %v3397
    %3534 = vmatprep.subr.bf16.mxu0 %v3407
    %3535 = vmatpush1.bf16.msra.mxu0 %v3406
    %3536 = vmatprep.subr.bf16.mxu0 %v3415
    %3537 = vmatpush1.bf16.msra.mxu0 %v3414
    %3538 = vmatprep.subr.bf16.mxu0 %v3423
    %3539 = vmatpush1.bf16.msra.mxu0 %v3422
    %3540 = vmatprep.subr.bf16.mxu0 %v3431
    %3541 = vmatpush1.bf16.msra.mxu0 %v3430
    %3542 = vmatprep.subr.bf16.mxu0 %v3439
    %3543 = vmatpush1.bf16.msra.mxu0 %v3438
    %3544 = vmatprep.subr.bf16.mxu0 %v3447
    %3545 = vmatpush1.bf16.msra.mxu0 %v3446
    %3546 = vmatprep.subr.bf16.mxu0 %v3455
    %3547 = vmatpush1.bf16.msra.mxu0 %v3454
    %3548 = vmatprep.subr.bf16.mxu0 %v3463
    %3549 = vmatpush1.bf16.msra.mxu0 %v3462
    %3550 = vmatprep.subr.bf16.mxu0 0
    %3551 = vmatpush1.bf16.msra.mxu0 0
    %3552 = vmatprep.subr.bf16.mxu0 0
    %3553 = vmatpush1.bf16.msra.mxu0 0
    %3554 = vmatprep.subr.bf16.mxu0 0
    %3555 = vmatpush1.bf16.msra.mxu0 0
    %3556 = vmatprep.subr.bf16.mxu0 0
    %3557 = vmatpush1.bf16.msra.mxu0 0
    %3558 = vmatprep.subr.bf16.mxu0 0
    %3559 = vmatpush1.bf16.msra.mxu0 0
    %3560 = vmatprep.subr.bf16.mxu0 0
    %3561 = vmatpush1.bf16.msra.mxu0 0
    %3562 = vmatprep.subr.bf16.mxu0 0
    %3563 = vmatpush1.bf16.msra.mxu0 0
    %3564 = vmatprep.subr.bf16.mxu0 0
    %3565 = vmatpush1.bf16.msra.mxu0 0
    %3566 = vmatprep.mubr.bf16.mxu0 0
    %3567 = vmatmul.mubr.bf16.gmra.mrb[0].mxu0 %v3171
    %v3568 = vpop.f32.mrb[0].mxu0
    %v3569 = vadd.f32 %v3177, %v3568
    %v3570 = vpop.f32.mrb[0].mxu0
    %v3571 = vadd.f32 %v3181, %v3570
    %v3572 = vpop.f32.mrb[0].mxu0
    %v3573 = vadd.f32 %v3177, %v3572
    %v3574 = vpop.f32.mrb[0].mxu0
    %v3575 = vadd.f32 %v3181, %v3574
    %3576 = vdwg.mxu0
    %3577 = vmatprep.subr.bf16.mxu0 %v3409
    %3578 = vmatpush1.bf16.msra.mxu0 %v3408
    %3579 = vmatprep.subr.bf16.mxu0 %v3417
    %3580 = vmatpush1.bf16.msra.mxu0 %v3416
    %3581 = vmatprep.subr.bf16.mxu0 %v3425
    %3582 = vmatpush1.bf16.msra.mxu0 %v3424
    %3583 = vmatprep.subr.bf16.mxu0 %v3433
    %3584 = vmatpush1.bf16.msra.mxu0 %v3432
    %3585 = vmatprep.subr.bf16.mxu0 %v3441
    %3586 = vmatpush1.bf16.msra.mxu0 %v3440
    %3587 = vmatprep.subr.bf16.mxu0 %v3449
    %3588 = vmatpush1.bf16.msra.mxu0 %v3448
    %3589 = vmatprep.subr.bf16.mxu0 %v3457
    %3590 = vmatpush1.bf16.msra.mxu0 %v3456
    %3591 = vmatprep.subr.bf16.mxu0 %v3465
    %3592 = vmatpush1.bf16.msra.mxu0 %v3464
    %3593 = vmatprep.subr.bf16.mxu0 0
    %3594 = vmatpush1.bf16.msra.mxu0 0
    %3595 = vmatprep.subr.bf16.mxu0 0
    %3596 = vmatpush1.bf16.msra.mxu0 0
    %3597 = vmatprep.subr.bf16.mxu0 0
    %3598 = vmatpush1.bf16.msra.mxu0 0
    %3599 = vmatprep.subr.bf16.mxu0 0
    %3600 = vmatpush1.bf16.msra.mxu0 0
    %3601 = vmatprep.subr.bf16.mxu0 0
    %3602 = vmatpush1.bf16.msra.mxu0 0
    %3603 = vmatprep.subr.bf16.mxu0 0
    %3604 = vmatpush1.bf16.msra.mxu0 0
    %3605 = vmatprep.subr.bf16.mxu0 0
    %3606 = vmatpush1.bf16.msra.mxu0 0
    %3607 = vmatprep.subr.bf16.mxu0 0
    %3608 = vmatpush1.bf16.msra.mxu0 0
    %3609 = vmatprep.mubr.bf16.mxu0 0
    %3610 = vmatmul.mubr.bf16.gmra.mrb[0].mxu0 %v3171
    %v3611 = vpop.f32.mrb[0].mxu0
    %v3612 = vadd.f32 %v3185, %v3611
    %v3613 = vpop.f32.mrb[0].mxu0
    %v3614 = vadd.f32 %v3189, %v3613
    %v3615 = vpop.f32.mrb[0].mxu0
    %v3616 = vadd.f32 %v3185, %v3615
    %v3617 = vpop.f32.mrb[0].mxu0
    %v3618 = vadd.f32 %v3189, %v3617
    %3619 = vdwg.mxu0
    %3620 = vmatprep.subr.bf16.mxu0 %v3411
    %3621 = vmatpush1.bf16.msra.mxu0 %v3410
    %3622 = vmatprep.subr.bf16.mxu0 %v3419
    %3623 = vmatpush1.bf16.msra.mxu0 %v3418
    %3624 = vmatprep.subr.bf16.mxu0 %v3427
    %3625 = vmatpush1.bf16.msra.mxu0 %v3426
    %3626 = vmatprep.subr.bf16.mxu0 %v3435
    %3627 = vmatpush1.bf16.msra.mxu0 %v3434
    %3628 = vmatprep.subr.bf16.mxu0 %v3443
    %3629 = vmatpush1.bf16.msra.mxu0 %v3442
    %3630 = vmatprep.subr.bf16.mxu0 %v3451
    %3631 = vmatpush1.bf16.msra.mxu0 %v3450
    %3632 = vmatprep.subr.bf16.mxu0 %v3459
    %3633 = vmatpush1.bf16.msra.mxu0 %v3458
    %3634 = vmatprep.subr.bf16.mxu0 %v3467
    %3635 = vmatpush1.bf16.msra.mxu0 %v3466
    %3636 = vmatprep.subr.bf16.mxu0 0
    %3637 = vmatpush1.bf16.msra.mxu0 0
    %3638 = vmatprep.subr.bf16.mxu0 0
    %3639 = vmatpush1.bf16.msra.mxu0 0
    %3640 = vmatprep.subr.bf16.mxu0 0
    %3641 = vmatpush1.bf16.msra.mxu0 0
    %3642 = vmatprep.subr.bf16.mxu0 0
    %3643 = vmatpush1.bf16.msra.mxu0 0
    %3644 = vmatprep.subr.bf16.mxu0 0
    %3645 = vmatpush1.bf16.msra.mxu0 0
    %3646 = vmatprep.subr.bf16.mxu0 0
    %3647 = vmatpush1.bf16.msra.mxu0 0
    %3648 = vmatprep.subr.bf16.mxu0 0
    %3649 = vmatpush1.bf16.msra.mxu0 0
    %3650 = vmatprep.subr.bf16.mxu0 0
    %3651 = vmatpush1.bf16.msra.mxu0 0
    %3652 = vmatprep.mubr.bf16.mxu0 0
    %3653 = vmatmul.mubr.bf16.gmra.mrb[0].mxu0 %v3171
    %v3654 = vpop.f32.mrb[0].mxu0
    %v3655 = vadd.f32 %v3193, %v3654
    %v3656 = vpop.f32.mrb[0].mxu0
    %v3657 = vadd.f32 %v3197, %v3656
    %v3658 = vpop.f32.mrb[0].mxu0
    %v3659 = vadd.f32 %v3193, %v3658
    %v3660 = vpop.f32.mrb[0].mxu0
    %v3661 = vadd.f32 %v3197, %v3660
    %3662 = vdwg.mxu0
    %3663 = vmatprep.subr.bf16.mxu0 %v3413
    %3664 = vmatpush1.bf16.msra.mxu0 %v3412
    %3665 = vmatprep.subr.bf16.mxu0 %v3421
    %3666 = vmatpush1.bf16.msra.mxu0 %v3420
    %3667 = vmatprep.subr.bf16.mxu0 %v3429
    %3668 = vmatpush1.bf16.msra.mxu0 %v3428
    %3669 = vmatprep.subr.bf16.mxu0 %v3437
    %3670 = vmatpush1.bf16.msra.mxu0 %v3436
    %3671 = vmatprep.subr.bf16.mxu0 %v3445
    %3672 = vmatpush1.bf16.msra.mxu0 %v3444
    %3673 = vmatprep.subr.bf16.mxu0 %v3453
    %3674 = vmatpush1.bf16.msra.mxu0 %v3452
    %3675 = vmatprep.subr.bf16.mxu0 %v3461
    %3676 = vmatpush1.bf16.msra.mxu0 %v3460
    %3677 = vmatprep.subr.bf16.mxu0 %v3469
    %3678 = vmatpush1.bf16.msra.mxu0 %v3468
    %3679 = vmatprep.subr.bf16.mxu0 0
    %3680 = vmatpush1.bf16.msra.mxu0 0
    %3681 = vmatprep.subr.bf16.mxu0 0
    %3682 = vmatpush1.bf16.msra.mxu0 0
    %3683 = vmatprep.subr.bf16.mxu0 0
    %3684 = vmatpush1.bf16.msra.mxu0 0
    %3685 = vmatprep.subr.bf16.mxu0 0
    %3686 = vmatpush1.bf16.msra.mxu0 0
    %3687 = vmatprep.subr.bf16.mxu0 0
    %3688 = vmatpush1.bf16.msra.mxu0 0
    %3689 = vmatprep.subr.bf16.mxu0 0
    %3690 = vmatpush1.bf16.msra.mxu0 0
    %3691 = vmatprep.subr.bf16.mxu0 0
    %3692 = vmatpush1.bf16.msra.mxu0 0
    %3693 = vmatprep.subr.bf16.mxu0 0
    %3694 = vmatpush1.bf16.msra.mxu0 0
    %3695 = vmatprep.mubr.bf16.mxu0 0
    %3696 = vmatmul.mubr.bf16.gmra.mrb[0].mxu0 %v3171
    %v3697 = vpop.f32.mrb[0].mxu0
    %v3698 = vadd.f32 %v3201, %v3697
    %v3699 = vpop.f32.mrb[0].mxu0
    %v3700 = vadd.f32 %v3205, %v3699
    %v3701 = vpop.f32.mrb[0].mxu0
    %v3702 = vadd.f32 %v3201, %v3701
    %v3703 = vpop.f32.mrb[0].mxu0
    %v3704 = vadd.f32 %v3205, %v3703
    %3705 = vdwg.mxu0
    %v3706 = vtanh.pop %v3569
    %v3707 = vtanh.pop %v3571
    %v3708 = vtanh.pop %v3612
    %v3709 = vtanh.pop %v3614
    %v3710 = vtanh.pop %v3655
    %v3711 = vtanh.pop %v3657
    %v3712 = vtanh.pop %v3698
    %v3713 = vtanh.pop %v3700
    %v3714 = vtanh.pop %v3573
    %v3715 = vtanh.pop %v3575
    %v3716 = vtanh.pop %v3616
    %v3717 = vtanh.pop %v3618
    %v3718 = vtanh.pop %v3659
    %v3719 = vtanh.pop %v3661
    %v3720 = vtanh.pop %v3702
    %v3721 = vtanh.pop %v3704
    %3722 = vst [vmem:[#allocation31] sm:$0xff] %v3706
    %3723 = vst [vmem:[#allocation31 + $0x8] sm:$0xff] %v3707
    %3724 = vst [vmem:[#allocation31 + $0x10] sm:$0xff] %v3708
    %3725 = vst [vmem:[#allocation31 + $0x18] sm:$0xff] %v3709
    %3726 = vst [vmem:[#allocation31 + $0x20] sm:$0xff] %v3710
    %3727 = vst [vmem:[#allocation31 + $0x28] sm:$0xff] %v3711
    %3728 = vst [vmem:[#allocation31 + $0x30] sm:$0xff] %v3712
    %3729 = vst [vmem:[#allocation31 + $0x38] sm:$0xff] %v3713
    %3730 = vst [vmem:[#allocation31 + $0x40] sm:$0xff] %v3714
    %3731 = vst [vmem:[#allocation31 + $0x48] sm:$0xff] %v3715
    %3732 = vst [vmem:[#allocation31 + $0x50] sm:$0xff] %v3716
    %3733 = vst [vmem:[#allocation31 + $0x58] sm:$0xff] %v3717
    %3734 = vst [vmem:[#allocation31 + $0x60] sm:$0xff] %v3718
    %3735 = vst [vmem:[#allocation31 + $0x68] sm:$0xff] %v3719
    %3736 = vst [vmem:[#allocation31 + $0x70] sm:$0xff] %v3720
    %3737 = vst [vmem:[#allocation31 + $0x78] sm:$0xff] %v3721
    // Predicated region
    $region158: #{tpu_custom_call.1} parent=1 // pred_check
      _
    $region159: #{tpu_custom_call.1} parent=1 // pred_check_branch
      %3739 = sbr.rel (0) target = $region161
    $region160: #{tpu_custom_call.1} parent=1 // pred_region
      %s3741 = ssub.s32 2048, 2048
      %3742 = vsyncadd [#allocation4], %s3741
      %s3743 = sshll.u32 [#allocation31], 4
      %s3744 = int_to_ptr.vmem [resolvable:$true] %s3743
      %3749 = dma.vmem_to_hbm [thread:$0]  %s3744, 2048, %s21, [#allocation4], 1024, 1024, 64
    $region161: #{tpu_custom_call.1} parent=1 // pred_fallthru
      _
    // Predicated region
    $region162: #{tpu_custom_call.1} parent=1 // pred_check
      _
    $region163: #{tpu_custom_call.1} parent=1 // pred_check_branch
      %3751 = sbr.rel (0) target = $region165
    $region164: #{tpu_custom_call.1} parent=1 // pred_region
      %3752 = dma.done [#allocation4], 2048
    $region165: #{tpu_custom_call.1} parent=1 // pred_fallthru
      _
    %3753 = vsyncpa [#allocation3], 1
    %3754 = vsyncpa [#allocation6], 1
    %3755 = vsyncpa [#allocation9], 1
    %3756 = vsyncpa [#allocation12], 1
    %3757 = vsyncpa [#allocation15], 1
    %3758 = vsyncpa [#allocation18], 1
    %3759 = vsyncpa [#allocation21], 1
    %3760 = vsyncpa [#allocation24], 1
    %3761 = vsyncpa [#allocation27], 1
    %3762 = vsyncpa [#allocation30], 1
    %3763 = vsyncpa [#allocation4], 1

</llo_original>
